<compile_context>
chip_gen: v7x
topology: tpu7x:2x2x1
jax: 0.10.0
libtpu: 0.0.40
codegen_flags: <defaults>
</compile_context>

<pallas_src>
import functools

import jax
import jax.numpy as jnp
from jax import lax
from jax.experimental import pallas as pl
from jax.experimental.pallas import tpu as pltpu


def _round_up(x, m):
    return (x + m - 1) // m * m


# --------------------------------------------------------------------------------------
# Kernel 1: LSTM recurrence
# --------------------------------------------------------------------------------------
def lstm_recurrence_kernel(x_ref,      # (Tp, E)     bf16 embedded sentence (zero-padded rows)
                           wih_ref,    # (E, 4*Hp)   bf16 input->gates, gate-lane-aligned (i,f,g,o)
                           whh_ref,    # (Hp, 4*Hp)  bf16 hidden->gates, gate-lane-aligned
                           b_ref,      # (1, 4*Hp)   f32  b_ih + b_hh, gate-lane-aligned
                           hseq_ref,   # out (Tp, Hp) f32 per-timestep hidden states
                           xg_ref,     # scratch (Tp, 4*Hp) f32: hoisted input projection
                           hstage_ref):  # scratch (8, Hp) f32: staging buffer for h writes
    Tp = x_ref.shape[0]
    Hp = whh_ref.shape[0]

    # Hoisted input projection: one (Tp, E) x (E, 4Hp) MXU matmul + bias, outside the loop.
    xg_ref[...] = (
        jnp.dot(x_ref[...], wih_ref[...], preferred_element_type=jnp.float32) + b_ref[...]
    )

    def step(t, carry):
        h, c = carry                                                    # (1, Hp) f32
        gates = xg_ref[pl.ds(t, 1), :] + jnp.dot(
            h.astype(whh_ref.dtype), whh_ref[...],
            preferred_element_type=jnp.float32)                         # (1, 4Hp) f32
        # Gate slices are lane-aligned (Hp is a multiple of 128) -> free vreg views.
        i_g = jax.nn.sigmoid(gates[:, 0 * Hp:1 * Hp])
        f_g = jax.nn.sigmoid(gates[:, 1 * Hp:2 * Hp])
        g_g = jnp.tanh(gates[:, 2 * Hp:3 * Hp])
        o_g = jax.nn.sigmoid(gates[:, 3 * Hp:4 * Hp])
        c_new = f_g * c + i_g * g_g
        h_new = o_g * jnp.tanh(c_new)

        # Stage the hidden row; flush 8 rows at a time as one full-sublane store.
        slot = lax.rem(t, 8)
        hstage_ref[pl.ds(slot, 1), :] = h_new

        @pl.when(slot == 7)
        def _():
            base = pl.multiple_of(t - 7, 8)
            hseq_ref[pl.ds(base, 8), :] = hstage_ref[...]

        return (h_new, c_new)

    h0 = jnp.zeros((1, Hp), jnp.float32)
    c0 = jnp.zeros((1, Hp), jnp.float32)
    # Tp is a multiple of 8, so every 8-row block gets flushed exactly once.
    lax.fori_loop(0, Tp, step, (h0, c0), unroll=8)


# --------------------------------------------------------------------------------------
# Kernel 2: Linear -> Linear -> log_softmax, gridded over T
# --------------------------------------------------------------------------------------
def mlp_logsoftmax_kernel(h_ref,    # (TM, Hp)   f32 hidden-state rows for this tile
                          w1_ref,   # (Hp, L1p)  bf16
                          b1_ref,   # (1, L1p)   f32
                          w2_ref,   # (L1p, Vp)  bf16
                          b2_ref,   # (1, Vp)    f32
                          out_ref,  # (TM, Vp)   f32 log-probabilities (lane-dense)
                          *, num_classes):
    h = h_ref[...].astype(w1_ref.dtype)
    lin1 = jnp.dot(h, w1_ref[...], preferred_element_type=jnp.float32) + b1_ref[...]
    lin2 = (jnp.dot(lin1.astype(w2_ref.dtype), w2_ref[...],
                    preferred_element_type=jnp.float32) + b2_ref[...])

    # Mask padded class lanes so they do not dilute the softmax.
    col = lax.broadcasted_iota(jnp.int32, lin2.shape, 1)
    lin2 = jnp.where(col < num_classes, lin2, jnp.float32(-1e30))

    m = jnp.max(lin2, axis=1, keepdims=True)
    z = lin2 - m
    lse = jnp.log(jnp.sum(jnp.exp(z), axis=1, keepdims=True))
    out_ref[...] = z - lse


# --------------------------------------------------------------------------------------
# Wrapper
# --------------------------------------------------------------------------------------
def lstm_reddit_forward(tokens, params):
    """tokens: (T,) int32 token ids. Returns (T, V) log-probabilities."""
    dims = params["dims"]
    Hp, L1p, V, Vp = dims["Hp"], dims["L1p"], dims["V"], dims["Vp"]

    embeds = params["embedding"][tokens]                     # (T, E) glue gather
    T = tokens.shape[0]
    TM = 128 if T >= 128 else 8                               # T-tile for the MLP grid
    Tp = _round_up(T, TM)
    x = jnp.pad(embeds, ((0, Tp - T), (0, 0))).astype(params["wih"].dtype)

    vmem = pl.BlockSpec(memory_space=pltpu.MemorySpace.VMEM)
    VMEM_LIMIT = 64 * 1024 * 1024   # explicit scoped-VMEM cap: portable across v5e/v6e/v7x

    # --- LSTM recurrence ---
    hseq = pl.pallas_call(
        lstm_recurrence_kernel,
        out_shape=jax.ShapeDtypeStruct((Tp, Hp), jnp.float32),
        in_specs=[vmem] * 4,
        out_specs=vmem,
        scratch_shapes=[
            pltpu.VMEM((Tp, 4 * Hp), jnp.float32),   # hoisted input-projection buffer
            pltpu.VMEM((8, Hp), jnp.float32),        # 8-row hidden-state staging buffer
        ],
        compiler_params=pltpu.CompilerParams(vmem_limit_bytes=VMEM_LIMIT),
    )(x, params["wih"], params["whh"], params["b_gates"])

    # --- MLP + log_softmax, tiled over T (parallel across TensorCores on v7x) ---
    out_padded = pl.pallas_call(
        functools.partial(mlp_logsoftmax_kernel, num_classes=V),
        out_shape=jax.ShapeDtypeStruct((Tp, Vp), jnp.float32),
        grid=(Tp // TM,),
        in_specs=[
            pl.BlockSpec((TM, Hp), lambda i: (i, 0)),
            pl.BlockSpec((Hp, L1p), lambda i: (0, 0)),
            pl.BlockSpec((1, L1p), lambda i: (0, 0)),
            pl.BlockSpec((L1p, Vp), lambda i: (0, 0)),
            pl.BlockSpec((1, Vp), lambda i: (0, 0)),
        ],
        out_specs=pl.BlockSpec((TM, Vp), lambda i: (i, 0)),
        compiler_params=pltpu.CompilerParams(
            dimension_semantics=("parallel",),
            vmem_limit_bytes=VMEM_LIMIT,
        ),
    )(hseq, params["w1"], params["b1"], params["w2"], params["b2"])

    return out_padded[:T, :V]


# --------------------------------------------------------------------------------------
# Parameters: PyTorch-layout construction + packing into padded, lane-aligned kernel layout
# --------------------------------------------------------------------------------------
def make_params(key, vocab_size, embed_dim, hidden_lstm, hidden_lin1, hidden_lin2):
    """PyTorch-layout parameters (as nn.Embedding / nn.LSTM / nn.Linear would hold them)."""
    ks = jax.random.split(key, 9)
    s = 0.05
    H4 = 4 * hidden_lstm
    return {
        "embedding": s * jax.random.normal(ks[0], (vocab_size, embed_dim), jnp.float32),
        "w_ih": s * jax.random.normal(ks[1], (H4, embed_dim), jnp.float32),   # (4H, E)
        "w_hh": s * jax.random.normal(ks[2], (H4, hidden_lstm), jnp.float32),  # (4H, H)
        "b_ih": s * jax.random.normal(ks[3], (H4,), jnp.float32),
        "b_hh": s * jax.random.normal(ks[4], (H4,), jnp.float32),
        "w1": s * jax.random.normal(ks[5], (hidden_lin1, hidden_lstm), jnp.float32),  # (L1, H)
        "b1": s * jax.random.normal(ks[6], (hidden_lin1,), jnp.float32),
        "w2": s * jax.random.normal(ks[7], (hidden_lin2, hidden_lin1), jnp.float32),  # (V, L1)
        "b2": s * jax.random.normal(ks[8], (hidden_lin2,), jnp.float32),
    }


def prepare_params(p, weight_dtype=jnp.bfloat16):
    """Transpose, lane-align (128-pad H/L1/V), and bf16-cast weights for the kernels."""
    w_ih, w_hh = p["w_ih"], p["w_hh"]
    bias = p["b_ih"] + p["b_hh"]
    H4, E = w_ih.shape
    H = H4 // 4
    Hp = _round_up(H, 128)

    def pack_gate_cols(w_t, rows, rows_pad):
        # w_t: (rows, 4H), PyTorch gate order i,f,g,o -> (rows_pad, 4*Hp), each gate lane-aligned
        gates = [w_t[:, k * H:(k + 1) * H] for k in range(4)]
        gates = [jnp.pad(g, ((0, rows_pad - rows), (0, Hp - H))) for g in gates]
        return jnp.concatenate(gates, axis=1)

    wih = pack_gate_cols(w_ih.T, E, E).astype(weight_dtype)        # (E, 4Hp)
    whh = pack_gate_cols(w_hh.T, H, Hp).astype(weight_dtype)       # (Hp, 4Hp)
    b_gates = jnp.concatenate(
        [jnp.pad(bias[k * H:(k + 1) * H], (0, Hp - H)) for k in range(4)]
    ).reshape(1, 4 * Hp).astype(jnp.float32)

    w1, b1 = p["w1"], p["b1"]
    L1 = w1.shape[0]
    L1p = _round_up(L1, 128)
    w1_p = jnp.pad(w1.T, ((0, Hp - H), (0, L1p - L1))).astype(weight_dtype)   # (Hp, L1p)
    b1_p = jnp.pad(b1, (0, L1p - L1)).reshape(1, L1p).astype(jnp.float32)

    w2, b2 = p["w2"], p["b2"]
    V = w2.shape[0]
    Vp = _round_up(V, 128)
    w2_p = jnp.pad(w2.T, ((0, L1p - L1), (0, Vp - V))).astype(weight_dtype)   # (L1p, Vp)
    b2_p = jnp.pad(b2, (0, Vp - V)).reshape(1, Vp).astype(jnp.float32)

    return {
        "embedding": p["embedding"],
        "wih": wih, "whh": whh, "b_gates": b_gates,
        "w1": w1_p, "b1": b1_p, "w2": w2_p, "b2": b2_p,
        "dims": {"E": E, "H": H, "Hp": Hp, "L1": L1, "L1p": L1p, "V": V, "Vp": Vp},
    }


# --------------------------------------------------------------------------------------
# Pure-JAX reference (PyTorch semantics) for a sanity check
# --------------------------------------------------------------------------------------
def reference_forward(tokens, p):
    emb = p["embedding"][tokens]                      # (T, E)
    H = p["w_hh"].shape[1]
    w_ih, w_hh = p["w_ih"], p["w_hh"]
    b = p["b_ih"] + p["b_hh"]

    def step(carry, x_t):
        h, c = carry
        g = x_t @ w_ih.T + h @ w_hh.T + b
        i_g = jax.nn.sigmoid(g[0:H])
        f_g = jax.nn.sigmoid(g[H:2 * H])
        g_g = jnp.tanh(g[2 * H:3 * H])
        o_g = jax.nn.sigmoid(g[3 * H:4 * H])
        c = f_g * c + i_g * g_g
        h = o_g * jnp.tanh(c)
        return (h, c), h

    (_, _), hs = lax.scan(step, (jnp.zeros((H,), jnp.float32), jnp.zeros((H,), jnp.float32)), emb)
    lin1 = hs @ p["w1"].T + p["b1"]
    lin2 = lin1 @ p["w2"].T + p["b2"]
    return jax.nn.log_softmax(lin2, axis=1)


if __name__ == "__main__":
    # Small shapes consistent with the module structure
    # (original: vocab=10004, embed=96, lstm=670, lin1=96, lin2=10004)
    VOCAB = 512
    EMBED = 32
    H_LSTM = 64
    H_LIN1 = 32
    H_LIN2 = 512   # vocab-sized output, as in the original module
    SEQ = 8

    key = jax.random.PRNGKey(0)
    k_tok, k_par = jax.random.split(key)
    tokens = jax.random.randint(k_tok, (SEQ,), 0, VOCAB, dtype=jnp.int32)

    torch_style = make_params(k_par, VOCAB, EMBED, H_LSTM, H_LIN1, H_LIN2)
    params = prepare_params(torch_style, weight_dtype=jnp.bfloat16)

    fwd = jax.jit(functools.partial(lstm_reddit_forward, params=params))
    out = fwd(tokens)
    jax.block_until_ready(out)

    assert out.shape == (SEQ, H_LIN2)
    assert bool(jnp.all(jnp.isfinite(out)))
    # log_softmax rows should sum to 1 in prob space
    row_sums = jnp.exp(out).sum(axis=1)
    assert bool(jnp.allclose(row_sums, 1.0, atol=1e-3))
    # Loose check against a pure-JAX f32 reference (kernel uses bf16 weights)
    ref = reference_forward(tokens, torch_style)
    assert bool(jnp.max(jnp.abs(out - ref)) < 0.1)
    print("KERNEL_OK")
</pallas_src>

<mosaic_0001>
module attributes {stable_mosaic.version = 11 : i64} {
  func.func @mlp_logsoftmax_kernel(%arg0: i32, %arg1: memref<8x128xf32, #tpu.memory_space<vmem>>, %arg2: memref<128x128xbf16, #tpu.memory_space<vmem>>, %arg3: memref<1x128xf32, #tpu.memory_space<vmem>>, %arg4: memref<128x512xbf16, #tpu.memory_space<vmem>>, %arg5: memref<1x512xf32, #tpu.memory_space<vmem>>, %arg6: memref<8x512xf32, #tpu.memory_space<vmem>>) attributes {dimension_semantics = [#tpu.dimension_semantics<parallel>], iteration_bounds = array<i64: 1>, scalar_prefetch = 0 : i64, scratch_operands = 0 : i64, tpu.core_type = #tpu.core_type<tc>, window_params = [{transform_indices = @transform_0, window_bounds = array<i64: 8, 128>}, {pipeline_mode = #tpu.pipeline_mode<synchronous>, transform_indices = @transform_1, window_bounds = array<i64: 128, 128>}, {pipeline_mode = #tpu.pipeline_mode<synchronous>, transform_indices = @transform_2, window_bounds = array<i64: 1, 128>}, {pipeline_mode = #tpu.pipeline_mode<synchronous>, transform_indices = @transform_3, window_bounds = array<i64: 128, 512>}, {pipeline_mode = #tpu.pipeline_mode<synchronous>, transform_indices = @transform_4, window_bounds = array<i64: 1, 512>}, {transform_indices = @transform_5, window_bounds = array<i64: 8, 512>}]} {
    %c0 = arith.constant 0 : index
    %c0_0 = arith.constant 0 : index
    %0 = vector.load %arg1[%c0, %c0_0] : memref<8x128xf32, #tpu.memory_space<vmem>>, vector<8x128xf32>
    %1 = arith.truncf %0 : vector<8x128xf32> to vector<8x128xbf16>
    %c0_1 = arith.constant 0 : index
    %c0_2 = arith.constant 0 : index
    %2 = vector.load %arg2[%c0_1, %c0_2] : memref<128x128xbf16, #tpu.memory_space<vmem>>, vector<128x128xbf16>
    %cst = arith.constant dense<0.000000e+00> : vector<8x128xf32>
    %3 = tpu.matmul %1, %2, %cst {dimension_numbers = #tpu.dot_dimension_numbers<[1], [0], [0], [1], [0, 0, 1, 1], [], []>} : vector<8x128xbf16>, vector<128x128xbf16>, vector<8x128xf32> -> vector<8x128xf32>
    %c0_3 = arith.constant 0 : index
    %c0_4 = arith.constant 0 : index
    %4 = vector.load %arg3[%c0_3, %c0_4] : memref<1x128xf32, #tpu.memory_space<vmem>>, vector<1x128xf32>
    %5 = vector.broadcast %4 : vector<1x128xf32> to vector<8x128xf32>
    %6 = arith.addf %3, %5 : vector<8x128xf32>
    %7 = arith.truncf %6 : vector<8x128xf32> to vector<8x128xbf16>
    %c0_5 = arith.constant 0 : index
    %c0_6 = arith.constant 0 : index
    %8 = vector.load %arg4[%c0_5, %c0_6] : memref<128x512xbf16, #tpu.memory_space<vmem>>, vector<128x512xbf16>
    %cst_7 = arith.constant dense<0.000000e+00> : vector<8x512xf32>
    %9 = tpu.matmul %7, %8, %cst_7 {dimension_numbers = #tpu.dot_dimension_numbers<[1], [0], [0], [1], [0, 0, 1, 1], [], []>} : vector<8x128xbf16>, vector<128x512xbf16>, vector<8x512xf32> -> vector<8x512xf32>
    %c0_8 = arith.constant 0 : index
    %c0_9 = arith.constant 0 : index
    %10 = vector.load %arg5[%c0_8, %c0_9] : memref<1x512xf32, #tpu.memory_space<vmem>>, vector<1x512xf32>
    %11 = vector.broadcast %10 : vector<1x512xf32> to vector<8x512xf32>
    %12 = arith.addf %9, %11 : vector<8x512xf32>
    %13 = tpu.iota {dimensions = array<i32: 1>} : vector<8x512xi32>
    %c512_i32 = arith.constant 512 : i32
    %14 = vector.broadcast %c512_i32 : i32 to vector<8x512xi32>
    %15 = arith.cmpi slt, %13, %14 : vector<8x512xi32>
    %cst_10 = arith.constant -1.000000e+30 : f32
    %16 = vector.broadcast %cst_10 : f32 to vector<8x512xf32>
    %17 = arith.select %15, %12, %16 : vector<8x512xi1>, vector<8x512xf32>
    %cst_11 = arith.constant dense<0xFF800000> : vector<8xf32>
    %18 = vector.multi_reduction <maximumf>, %17, %cst_11 [1] : vector<8x512xf32> to vector<8xf32>
    %19 = vector.shape_cast %18 : vector<8xf32> to vector<8x1xf32>
    %20 = vector.broadcast %19 : vector<8x1xf32> to vector<8x512xf32>
    %21 = arith.subf %17, %20 : vector<8x512xf32>
    %22 = math.exp %21 : vector<8x512xf32>
    %cst_12 = arith.constant dense<0.000000e+00> : vector<8xf32>
    %23 = vector.multi_reduction <add>, %22, %cst_12 [1] : vector<8x512xf32> to vector<8xf32>
    %24 = vector.shape_cast %23 : vector<8xf32> to vector<8x1xf32>
    %25 = math.log %24 : vector<8x1xf32>
    %26 = vector.broadcast %25 : vector<8x1xf32> to vector<8x512xf32>
    %27 = arith.subf %21, %26 : vector<8x512xf32>
    %c0_13 = arith.constant 0 : index
    %c0_14 = arith.constant 0 : index
    %28 = vector.load %arg6[%c0_13, %c0_14] : memref<8x512xf32, #tpu.memory_space<vmem>>, vector<8x512xf32>
    tpu.vector_store %arg6[%c0_13, %c0_14], %27 {strides = array<i32>} : memref<8x512xf32, #tpu.memory_space<vmem>>, vector<8x512xf32>,
    return
  }
  func.func @transform_0(%arg0: i32) -> (i32, i32) {
    %c0_i32 = arith.constant 0 : i32
    %c0_i32_0 = arith.constant 0 : i32
    return %arg0, %c0_i32 : i32, i32
  }
  func.func @transform_1(%arg0: i32) -> (i32, i32) {
    %c0_i32 = arith.constant 0 : i32
    %c0_i32_0 = arith.constant 0 : i32
    %c0_i32_1 = arith.constant 0 : i32
    return %c0_i32, %c0_i32_0 : i32, i32
  }
  func.func @transform_2(%arg0: i32) -> (i32, i32) {
    %c0_i32 = arith.constant 0 : i32
    %c0_i32_0 = arith.constant 0 : i32
    %c0_i32_1 = arith.constant 0 : i32
    return %c0_i32, %c0_i32_0 : i32, i32
  }
  func.func @transform_3(%arg0: i32) -> (i32, i32) {
    %c0_i32 = arith.constant 0 : i32
    %c0_i32_0 = arith.constant 0 : i32
    %c0_i32_1 = arith.constant 0 : i32
    return %c0_i32, %c0_i32_0 : i32, i32
  }
  func.func @transform_4(%arg0: i32) -> (i32, i32) {
    %c0_i32 = arith.constant 0 : i32
    %c0_i32_0 = arith.constant 0 : i32
    %c0_i32_1 = arith.constant 0 : i32
    return %c0_i32, %c0_i32_0 : i32, i32
  }
  func.func @transform_5(%arg0: i32) -> (i32, i32) {
    %c0_i32 = arith.constant 0 : i32
    %c0_i32_0 = arith.constant 0 : i32
    return %arg0, %c0_i32 : i32, i32
  }
}

module attributes {stable_mosaic.version = 11 : i64} {
  func.func @lstm_recurrence_kernel(%arg0: memref<8x32xbf16, #tpu.memory_space<vmem>>, %arg1: memref<32x512xbf16, #tpu.memory_space<vmem>>, %arg2: memref<128x512xbf16, #tpu.memory_space<vmem>>, %arg3: memref<1x512xf32, #tpu.memory_space<vmem>>, %arg4: memref<8x128xf32, #tpu.memory_space<vmem>>, %arg5: memref<8x512xf32, #tpu.memory_space<vmem>>, %arg6: memref<8x128xf32, #tpu.memory_space<vmem>>) attributes {dimension_semantics = [], scalar_prefetch = 0 : i64, scratch_operands = 2 : i64, tpu.core_type = #tpu.core_type<tc>} {
    %c0 = arith.constant 0 : index
    %c0_0 = arith.constant 0 : index
    %0 = vector.load %arg0[%c0, %c0_0] : memref<8x32xbf16, #tpu.memory_space<vmem>>, vector<8x32xbf16>
    %c0_1 = arith.constant 0 : index
    %c0_2 = arith.constant 0 : index
    %1 = vector.load %arg1[%c0_1, %c0_2] : memref<32x512xbf16, #tpu.memory_space<vmem>>, vector<32x512xbf16>
    %cst = arith.constant dense<0.000000e+00> : vector<8x512xf32>
    %2 = tpu.matmul %0, %1, %cst {dimension_numbers = #tpu.dot_dimension_numbers<[1], [0], [0], [1], [0, 0, 1, 1], [], []>} : vector<8x32xbf16>, vector<32x512xbf16>, vector<8x512xf32> -> vector<8x512xf32>
    %c0_3 = arith.constant 0 : index
    %c0_4 = arith.constant 0 : index
    %3 = vector.load %arg3[%c0_3, %c0_4] : memref<1x512xf32, #tpu.memory_space<vmem>>, vector<1x512xf32>
    %4 = vector.broadcast %3 : vector<1x512xf32> to vector<8x512xf32>
    %5 = arith.addf %2, %4 : vector<8x512xf32>
    %c0_5 = arith.constant 0 : index
    %c0_6 = arith.constant 0 : index
    %6 = vector.load %arg5[%c0_5, %c0_6] : memref<8x512xf32, #tpu.memory_space<vmem>>, vector<8x512xf32>
    tpu.vector_store %arg5[%c0_5, %c0_6], %5 {strides = array<i32>} : memref<8x512xf32, #tpu.memory_space<vmem>>, vector<8x512xf32>,
    %cst_7 = arith.constant 0.000000e+00 : f32
    %7 = vector.broadcast %cst_7 : f32 to vector<1x128xf32>
    %cst_8 = arith.constant 0.000000e+00 : f32
    %8 = vector.broadcast %cst_8 : f32 to vector<1x128xf32>
    %c0_i32 = arith.constant 0 : i32
    %9 = arith.index_cast %c0_i32 : i32 to index
    %c0_9 = arith.constant 0 : index
    %10 = vector.load %arg5[%9, %c0_9] : memref<8x512xf32, #tpu.memory_space<vmem>>, vector<1x512xf32>
    %11 = arith.truncf %7 : vector<1x128xf32> to vector<1x128xbf16>
    %c0_10 = arith.constant 0 : index
    %c0_11 = arith.constant 0 : index
    %12 = vector.load %arg2[%c0_10, %c0_11] : memref<128x512xbf16, #tpu.memory_space<vmem>>, vector<128x512xbf16>
    %cst_12 = arith.constant dense<0.000000e+00> : vector<1x512xf32>
    %13 = tpu.matmul %11, %12, %cst_12 {dimension_numbers = #tpu.dot_dimension_numbers<[1], [0], [0], [1], [0, 0, 1, 1], [], []>} : vector<1x128xbf16>, vector<128x512xbf16>, vector<1x512xf32> -> vector<1x512xf32>
    %14 = arith.addf %10, %13 : vector<1x512xf32>
    %15 = vector.extract_strided_slice %14 {offsets = [0, 0], sizes = [1, 128], strides = [1, 1]} : vector<1x512xf32> to vector<1x128xf32>
    %16 = arith.negf %15 : vector<1x128xf32>
    %17 = math.exp %16 : vector<1x128xf32>
    %cst_13 = arith.constant 1.000000e+00 : f32
    %18 = vector.broadcast %cst_13 : f32 to vector<1x128xf32>
    %19 = arith.addf %18, %17 : vector<1x128xf32>
    %20 = arith.divf %18, %19 : vector<1x128xf32>
    %21 = vector.extract_strided_slice %14 {offsets = [0, 128], sizes = [1, 128], strides = [1, 1]} : vector<1x512xf32> to vector<1x128xf32>
    %22 = arith.negf %21 : vector<1x128xf32>
    %23 = math.exp %22 : vector<1x128xf32>
    %cst_14 = arith.constant 1.000000e+00 : f32
    %24 = vector.broadcast %cst_14 : f32 to vector<1x128xf32>
    %25 = arith.addf %24, %23 : vector<1x128xf32>
    %26 = arith.divf %24, %25 : vector<1x128xf32>
    %27 = vector.extract_strided_slice %14 {offsets = [0, 256], sizes = [1, 128], strides = [1, 1]} : vector<1x512xf32> to vector<1x128xf32>
    %28 = math.tanh %27 : vector<1x128xf32>
    %29 = vector.extract_strided_slice %14 {offsets = [0, 384], sizes = [1, 128], strides = [1, 1]} : vector<1x512xf32> to vector<1x128xf32>
    %30 = arith.negf %29 : vector<1x128xf32>
    %31 = math.exp %30 : vector<1x128xf32>
    %cst_15 = arith.constant 1.000000e+00 : f32
    %32 = vector.broadcast %cst_15 : f32 to vector<1x128xf32>
    %33 = arith.addf %32, %31 : vector<1x128xf32>
    %34 = arith.divf %32, %33 : vector<1x128xf32>
    %35 = arith.mulf %26, %8 : vector<1x128xf32>
    %36 = arith.mulf %20, %28 : vector<1x128xf32>
    %37 = arith.addf %35, %36 : vector<1x128xf32>
    %38 = math.tanh %37 : vector<1x128xf32>
    %39 = arith.mulf %34, %38 : vector<1x128xf32>
    %c8_i32 = arith.constant 8 : i32
    %40 = arith.remsi %c0_i32, %c8_i32 : i32
    %41 = arith.index_cast %40 : i32 to index
    %c0_16 = arith.constant 0 : index
    %42 = vector.load %arg6[%41, %c0_16] : memref<8x128xf32, #tpu.memory_space<vmem>>, vector<1x128xf32>
    tpu.vector_store %arg6[%41, %c0_16], %39 {strides = array<i32>} : memref<8x128xf32, #tpu.memory_space<vmem>>, vector<1x128xf32>,
    %c7_i32 = arith.constant 7 : i32
    %43 = arith.cmpi eq, %40, %c7_i32 : i32
    %44 = arith.extui %43 : i1 to i32
    %c0_i32_17 = arith.constant 0 : i32
    %45 = arith.cmpi ne, %44, %c0_i32_17 : i32
    scf.if %45 {
      %c7_i32_97 = arith.constant 7 : i32
      %305 = arith.subi %c0_i32, %c7_i32_97 : i32
      %306 = tpu.assume_multiple %305, 8 : i32
      %c0_98 = arith.constant 0 : index
      %c0_99 = arith.constant 0 : index
      %307 = vector.load %arg6[%c0_98, %c0_99] : memref<8x128xf32, #tpu.memory_space<vmem>>, vector<8x128xf32>
      %308 = arith.index_cast %306 : i32 to index
      %c0_100 = arith.constant 0 : index
      %309 = vector.load %arg4[%308, %c0_100] : memref<8x128xf32, #tpu.memory_space<vmem>>, vector<8x128xf32>
      tpu.vector_store %arg4[%308, %c0_100], %307 {strides = array<i32>} : memref<8x128xf32, #tpu.memory_space<vmem>>, vector<8x128xf32>,
    } else {
    }
    %c1_i32 = arith.constant 1 : i32
    %46 = arith.index_cast %c1_i32 : i32 to index
    %c0_18 = arith.constant 0 : index
    %47 = vector.load %arg5[%46, %c0_18] : memref<8x512xf32, #tpu.memory_space<vmem>>, vector<1x512xf32>
    %48 = arith.truncf %39 : vector<1x128xf32> to vector<1x128xbf16>
    %c0_19 = arith.constant 0 : index
    %c0_20 = arith.constant 0 : index
    %49 = vector.load %arg2[%c0_19, %c0_20] : memref<128x512xbf16, #tpu.memory_space<vmem>>, vector<128x512xbf16>
    %cst_21 = arith.constant dense<0.000000e+00> : vector<1x512xf32>
    %50 = tpu.matmul %48, %49, %cst_21 {dimension_numbers = #tpu.dot_dimension_numbers<[1], [0], [0], [1], [0, 0, 1, 1], [], []>} : vector<1x128xbf16>, vector<128x512xbf16>, vector<1x512xf32> -> vector<1x512xf32>
    %51 = arith.addf %47, %50 : vector<1x512xf32>
    %52 = vector.extract_strided_slice %51 {offsets = [0, 0], sizes = [1, 128], strides = [1, 1]} : vector<1x512xf32> to vector<1x128xf32>
    %53 = arith.negf %52 : vector<1x128xf32>
    %54 = math.exp %53 : vector<1x128xf32>
    %cst_22 = arith.constant 1.000000e+00 : f32
    %55 = vector.broadcast %cst_22 : f32 to vector<1x128xf32>
    %56 = arith.addf %55, %54 : vector<1x128xf32>
    %57 = arith.divf %55, %56 : vector<1x128xf32>
    %58 = vector.extract_strided_slice %51 {offsets = [0, 128], sizes = [1, 128], strides = [1, 1]} : vector<1x512xf32> to vector<1x128xf32>
    %59 = arith.negf %58 : vector<1x128xf32>
    %60 = math.exp %59 : vector<1x128xf32>
    %cst_23 = arith.constant 1.000000e+00 : f32
    %61 = vector.broadcast %cst_23 : f32 to vector<1x128xf32>
    %62 = arith.addf %61, %60 : vector<1x128xf32>
    %63 = arith.divf %61, %62 : vector<1x128xf32>
    %64 = vector.extract_strided_slice %51 {offsets = [0, 256], sizes = [1, 128], strides = [1, 1]} : vector<1x512xf32> to vector<1x128xf32>
    %65 = math.tanh %64 : vector<1x128xf32>
    %66 = vector.extract_strided_slice %51 {offsets = [0, 384], sizes = [1, 128], strides = [1, 1]} : vector<1x512xf32> to vector<1x128xf32>
    %67 = arith.negf %66 : vector<1x128xf32>
    %68 = math.exp %67 : vector<1x128xf32>
    %cst_24 = arith.constant 1.000000e+00 : f32
    %69 = vector.broadcast %cst_24 : f32 to vector<1x128xf32>
    %70 = arith.addf %69, %68 : vector<1x128xf32>
    %71 = arith.divf %69, %70 : vector<1x128xf32>
    %72 = arith.mulf %63, %37 : vector<1x128xf32>
    %73 = arith.mulf %57, %65 : vector<1x128xf32>
    %74 = arith.addf %72, %73 : vector<1x128xf32>
    %75 = math.tanh %74 : vector<1x128xf32>
    %76 = arith.mulf %71, %75 : vector<1x128xf32>
    %c8_i32_25 = arith.constant 8 : i32
    %77 = arith.remsi %c1_i32, %c8_i32_25 : i32
    %78 = arith.index_cast %77 : i32 to index
    %c0_26 = arith.constant 0 : index
    %79 = vector.load %arg6[%78, %c0_26] : memref<8x128xf32, #tpu.memory_space<vmem>>, vector<1x128xf32>
    tpu.vector_store %arg6[%78, %c0_26], %76 {strides = array<i32>} : memref<8x128xf32, #tpu.memory_space<vmem>>, vector<1x128xf32>,
    %c7_i32_27 = arith.constant 7 : i32
    %80 = arith.cmpi eq, %77, %c7_i32_27 : i32
    %81 = arith.extui %80 : i1 to i32
    %c0_i32_28 = arith.constant 0 : i32
    %82 = arith.cmpi ne, %81, %c0_i32_28 : i32
    scf.if %82 {
      %c7_i32_97 = arith.constant 7 : i32
      %305 = arith.subi %c1_i32, %c7_i32_97 : i32
      %306 = tpu.assume_multiple %305, 8 : i32
      %c0_98 = arith.constant 0 : index
      %c0_99 = arith.constant 0 : index
      %307 = vector.load %arg6[%c0_98, %c0_99] : memref<8x128xf32, #tpu.memory_space<vmem>>, vector<8x128xf32>
      %308 = arith.index_cast %306 : i32 to index
      %c0_100 = arith.constant 0 : index
      %309 = vector.load %arg4[%308, %c0_100] : memref<8x128xf32, #tpu.memory_space<vmem>>, vector<8x128xf32>
      tpu.vector_store %arg4[%308, %c0_100], %307 {strides = array<i32>} : memref<8x128xf32, #tpu.memory_space<vmem>>, vector<8x128xf32>,
    } else {
    }
    %c2_i32 = arith.constant 2 : i32
    %83 = arith.index_cast %c2_i32 : i32 to index
    %c0_29 = arith.constant 0 : index
    %84 = vector.load %arg5[%83, %c0_29] : memref<8x512xf32, #tpu.memory_space<vmem>>, vector<1x512xf32>
    %85 = arith.truncf %76 : vector<1x128xf32> to vector<1x128xbf16>
    %c0_30 = arith.constant 0 : index
    %c0_31 = arith.constant 0 : index
    %86 = vector.load %arg2[%c0_30, %c0_31] : memref<128x512xbf16, #tpu.memory_space<vmem>>, vector<128x512xbf16>
    %cst_32 = arith.constant dense<0.000000e+00> : vector<1x512xf32>
    %87 = tpu.matmul %85, %86, %cst_32 {dimension_numbers = #tpu.dot_dimension_numbers<[1], [0], [0], [1], [0, 0, 1, 1], [], []>} : vector<1x128xbf16>, vector<128x512xbf16>, vector<1x512xf32> -> vector<1x512xf32>
    %88 = arith.addf %84, %87 : vector<1x512xf32>
    %89 = vector.extract_strided_slice %88 {offsets = [0, 0], sizes = [1, 128], strides = [1, 1]} : vector<1x512xf32> to vector<1x128xf32>
    %90 = arith.negf %89 : vector<1x128xf32>
    %91 = math.exp %90 : vector<1x128xf32>
    %cst_33 = arith.constant 1.000000e+00 : f32
    %92 = vector.broadcast %cst_33 : f32 to vector<1x128xf32>
    %93 = arith.addf %92, %91 : vector<1x128xf32>
    %94 = arith.divf %92, %93 : vector<1x128xf32>
    %95 = vector.extract_strided_slice %88 {offsets = [0, 128], sizes = [1, 128], strides = [1, 1]} : vector<1x512xf32> to vector<1x128xf32>
    %96 = arith.negf %95 : vector<1x128xf32>
    %97 = math.exp %96 : vector<1x128xf32>
    %cst_34 = arith.constant 1.000000e+00 : f32
    %98 = vector.broadcast %cst_34 : f32 to vector<1x128xf32>
    %99 = arith.addf %98, %97 : vector<1x128xf32>
    %100 = arith.divf %98, %99 : vector<1x128xf32>
    %101 = vector.extract_strided_slice %88 {offsets = [0, 256], sizes = [1, 128], strides = [1, 1]} : vector<1x512xf32> to vector<1x128xf32>
    %102 = math.tanh %101 : vector<1x128xf32>
    %103 = vector.extract_strided_slice %88 {offsets = [0, 384], sizes = [1, 128], strides = [1, 1]} : vector<1x512xf32> to vector<1x128xf32>
    %104 = arith.negf %103 : vector<1x128xf32>
    %105 = math.exp %104 : vector<1x128xf32>
    %cst_35 = arith.constant 1.000000e+00 : f32
    %106 = vector.broadcast %cst_35 : f32 to vector<1x128xf32>
    %107 = arith.addf %106, %105 : vector<1x128xf32>
    %108 = arith.divf %106, %107 : vector<1x128xf32>
    %109 = arith.mulf %100, %74 : vector<1x128xf32>
    %110 = arith.mulf %94, %102 : vector<1x128xf32>
    %111 = arith.addf %109, %110 : vector<1x128xf32>
    %112 = math.tanh %111 : vector<1x128xf32>
    %113 = arith.mulf %108, %112 : vector<1x128xf32>
    %c8_i32_36 = arith.constant 8 : i32
    %114 = arith.remsi %c2_i32, %c8_i32_36 : i32
    %115 = arith.index_cast %114 : i32 to index
    %c0_37 = arith.constant 0 : index
    %116 = vector.load %arg6[%115, %c0_37] : memref<8x128xf32, #tpu.memory_space<vmem>>, vector<1x128xf32>
    tpu.vector_store %arg6[%115, %c0_37], %113 {strides = array<i32>} : memref<8x128xf32, #tpu.memory_space<vmem>>, vector<1x128xf32>,
    %c7_i32_38 = arith.constant 7 : i32
    %117 = arith.cmpi eq, %114, %c7_i32_38 : i32
    %118 = arith.extui %117 : i1 to i32
    %c0_i32_39 = arith.constant 0 : i32
    %119 = arith.cmpi ne, %118, %c0_i32_39 : i32
    scf.if %119 {
      %c7_i32_97 = arith.constant 7 : i32
      %305 = arith.subi %c2_i32, %c7_i32_97 : i32
      %306 = tpu.assume_multiple %305, 8 : i32
      %c0_98 = arith.constant 0 : index
      %c0_99 = arith.constant 0 : index
      %307 = vector.load %arg6[%c0_98, %c0_99] : memref<8x128xf32, #tpu.memory_space<vmem>>, vector<8x128xf32>
      %308 = arith.index_cast %306 : i32 to index
      %c0_100 = arith.constant 0 : index
      %309 = vector.load %arg4[%308, %c0_100] : memref<8x128xf32, #tpu.memory_space<vmem>>, vector<8x128xf32>
      tpu.vector_store %arg4[%308, %c0_100], %307 {strides = array<i32>} : memref<8x128xf32, #tpu.memory_space<vmem>>, vector<8x128xf32>,
    } else {
    }
    %c3_i32 = arith.constant 3 : i32
    %120 = arith.index_cast %c3_i32 : i32 to index
    %c0_40 = arith.constant 0 : index
    %121 = vector.load %arg5[%120, %c0_40] : memref<8x512xf32, #tpu.memory_space<vmem>>, vector<1x512xf32>
    %122 = arith.truncf %113 : vector<1x128xf32> to vector<1x128xbf16>
    %c0_41 = arith.constant 0 : index
    %c0_42 = arith.constant 0 : index
    %123 = vector.load %arg2[%c0_41, %c0_42] : memref<128x512xbf16, #tpu.memory_space<vmem>>, vector<128x512xbf16>
    %cst_43 = arith.constant dense<0.000000e+00> : vector<1x512xf32>
    %124 = tpu.matmul %122, %123, %cst_43 {dimension_numbers = #tpu.dot_dimension_numbers<[1], [0], [0], [1], [0, 0, 1, 1], [], []>} : vector<1x128xbf16>, vector<128x512xbf16>, vector<1x512xf32> -> vector<1x512xf32>
    %125 = arith.addf %121, %124 : vector<1x512xf32>
    %126 = vector.extract_strided_slice %125 {offsets = [0, 0], sizes = [1, 128], strides = [1, 1]} : vector<1x512xf32> to vector<1x128xf32>
    %127 = arith.negf %126 : vector<1x128xf32>
    %128 = math.exp %127 : vector<1x128xf32>
    %cst_44 = arith.constant 1.000000e+00 : f32
    %129 = vector.broadcast %cst_44 : f32 to vector<1x128xf32>
    %130 = arith.addf %129, %128 : vector<1x128xf32>
    %131 = arith.divf %129, %130 : vector<1x128xf32>
    %132 = vector.extract_strided_slice %125 {offsets = [0, 128], sizes = [1, 128], strides = [1, 1]} : vector<1x512xf32> to vector<1x128xf32>
    %133 = arith.negf %132 : vector<1x128xf32>
    %134 = math.exp %133 : vector<1x128xf32>
    %cst_45 = arith.constant 1.000000e+00 : f32
    %135 = vector.broadcast %cst_45 : f32 to vector<1x128xf32>
    %136 = arith.addf %135, %134 : vector<1x128xf32>
    %137 = arith.divf %135, %136 : vector<1x128xf32>
    %138 = vector.extract_strided_slice %125 {offsets = [0, 256], sizes = [1, 128], strides = [1, 1]} : vector<1x512xf32> to vector<1x128xf32>
    %139 = math.tanh %138 : vector<1x128xf32>
    %140 = vector.extract_strided_slice %125 {offsets = [0, 384], sizes = [1, 128], strides = [1, 1]} : vector<1x512xf32> to vector<1x128xf32>
    %141 = arith.negf %140 : vector<1x128xf32>
    %142 = math.exp %141 : vector<1x128xf32>
    %cst_46 = arith.constant 1.000000e+00 : f32
    %143 = vector.broadcast %cst_46 : f32 to vector<1x128xf32>
    %144 = arith.addf %143, %142 : vector<1x128xf32>
    %145 = arith.divf %143, %144 : vector<1x128xf32>
    %146 = arith.mulf %137, %111 : vector<1x128xf32>
    %147 = arith.mulf %131, %139 : vector<1x128xf32>
    %148 = arith.addf %146, %147 : vector<1x128xf32>
    %149 = math.tanh %148 : vector<1x128xf32>
    %150 = arith.mulf %145, %149 : vector<1x128xf32>
    %c8_i32_47 = arith.constant 8 : i32
    %151 = arith.remsi %c3_i32, %c8_i32_47 : i32
    %152 = arith.index_cast %151 : i32 to index
    %c0_48 = arith.constant 0 : index
    %153 = vector.load %arg6[%152, %c0_48] : memref<8x128xf32, #tpu.memory_space<vmem>>, vector<1x128xf32>
    tpu.vector_store %arg6[%152, %c0_48], %150 {strides = array<i32>} : memref<8x128xf32, #tpu.memory_space<vmem>>, vector<1x128xf32>,
    %c7_i32_49 = arith.constant 7 : i32
    %154 = arith.cmpi eq, %151, %c7_i32_49 : i32
    %155 = arith.extui %154 : i1 to i32
    %c0_i32_50 = arith.constant 0 : i32
    %156 = arith.cmpi ne, %155, %c0_i32_50 : i32
    scf.if %156 {
      %c7_i32_97 = arith.constant 7 : i32
      %305 = arith.subi %c3_i32, %c7_i32_97 : i32
      %306 = tpu.assume_multiple %305, 8 : i32
      %c0_98 = arith.constant 0 : index
      %c0_99 = arith.constant 0 : index
      %307 = vector.load %arg6[%c0_98, %c0_99] : memref<8x128xf32, #tpu.memory_space<vmem>>, vector<8x128xf32>
      %308 = arith.index_cast %306 : i32 to index
      %c0_100 = arith.constant 0 : index
      %309 = vector.load %arg4[%308, %c0_100] : memref<8x128xf32, #tpu.memory_space<vmem>>, vector<8x128xf32>
      tpu.vector_store %arg4[%308, %c0_100], %307 {strides = array<i32>} : memref<8x128xf32, #tpu.memory_space<vmem>>, vector<8x128xf32>,
    } else {
    }
    %c4_i32 = arith.constant 4 : i32
    %157 = arith.index_cast %c4_i32 : i32 to index
    %c0_51 = arith.constant 0 : index
    %158 = vector.load %arg5[%157, %c0_51] : memref<8x512xf32, #tpu.memory_space<vmem>>, vector<1x512xf32>
    %159 = arith.truncf %150 : vector<1x128xf32> to vector<1x128xbf16>
    %c0_52 = arith.constant 0 : index
    %c0_53 = arith.constant 0 : index
    %160 = vector.load %arg2[%c0_52, %c0_53] : memref<128x512xbf16, #tpu.memory_space<vmem>>, vector<128x512xbf16>
    %cst_54 = arith.constant dense<0.000000e+00> : vector<1x512xf32>
    %161 = tpu.matmul %159, %160, %cst_54 {dimension_numbers = #tpu.dot_dimension_numbers<[1], [0], [0], [1], [0, 0, 1, 1], [], []>} : vector<1x128xbf16>, vector<128x512xbf16>, vector<1x512xf32> -> vector<1x512xf32>
    %162 = arith.addf %158, %161 : vector<1x512xf32>
    %163 = vector.extract_strided_slice %162 {offsets = [0, 0], sizes = [1, 128], strides = [1, 1]} : vector<1x512xf32> to vector<1x128xf32>
    %164 = arith.negf %163 : vector<1x128xf32>
    %165 = math.exp %164 : vector<1x128xf32>
    %cst_55 = arith.constant 1.000000e+00 : f32
    %166 = vector.broadcast %cst_55 : f32 to vector<1x128xf32>
    %167 = arith.addf %166, %165 : vector<1x128xf32>
    %168 = arith.divf %166, %167 : vector<1x128xf32>
    %169 = vector.extract_strided_slice %162 {offsets = [0, 128], sizes = [1, 128], strides = [1, 1]} : vector<1x512xf32> to vector<1x128xf32>
    %170 = arith.negf %169 : vector<1x128xf32>
    %171 = math.exp %170 : vector<1x128xf32>
    %cst_56 = arith.constant 1.000000e+00 : f32
    %172 = vector.broadcast %cst_56 : f32 to vector<1x128xf32>
    %173 = arith.addf %172, %171 : vector<1x128xf32>
    %174 = arith.divf %172, %173 : vector<1x128xf32>
    %175 = vector.extract_strided_slice %162 {offsets = [0, 256], sizes = [1, 128], strides = [1, 1]} : vector<1x512xf32> to vector<1x128xf32>
    %176 = math.tanh %175 : vector<1x128xf32>
    %177 = vector.extract_strided_slice %162 {offsets = [0, 384], sizes = [1, 128], strides = [1, 1]} : vector<1x512xf32> to vector<1x128xf32>
    %178 = arith.negf %177 : vector<1x128xf32>
    %179 = math.exp %178 : vector<1x128xf32>
    %cst_57 = arith.constant 1.000000e+00 : f32
    %180 = vector.broadcast %cst_57 : f32 to vector<1x128xf32>
    %181 = arith.addf %180, %179 : vector<1x128xf32>
    %182 = arith.divf %180, %181 : vector<1x128xf32>
    %183 = arith.mulf %174, %148 : vector<1x128xf32>
    %184 = arith.mulf %168, %176 : vector<1x128xf32>
    %185 = arith.addf %183, %184 : vector<1x128xf32>
    %186 = math.tanh %185 : vector<1x128xf32>
    %187 = arith.mulf %182, %186 : vector<1x128xf32>
    %c8_i32_58 = arith.constant 8 : i32
    %188 = arith.remsi %c4_i32, %c8_i32_58 : i32
    %189 = arith.index_cast %188 : i32 to index
    %c0_59 = arith.constant 0 : index
    %190 = vector.load %arg6[%189, %c0_59] : memref<8x128xf32, #tpu.memory_space<vmem>>, vector<1x128xf32>
    tpu.vector_store %arg6[%189, %c0_59], %187 {strides = array<i32>} : memref<8x128xf32, #tpu.memory_space<vmem>>, vector<1x128xf32>,
    %c7_i32_60 = arith.constant 7 : i32
    %191 = arith.cmpi eq, %188, %c7_i32_60 : i32
    %192 = arith.extui %191 : i1 to i32
    %c0_i32_61 = arith.constant 0 : i32
    %193 = arith.cmpi ne, %192, %c0_i32_61 : i32
    scf.if %193 {
      %c7_i32_97 = arith.constant 7 : i32
      %305 = arith.subi %c4_i32, %c7_i32_97 : i32
      %306 = tpu.assume_multiple %305, 8 : i32
      %c0_98 = arith.constant 0 : index
      %c0_99 = arith.constant 0 : index
      %307 = vector.load %arg6[%c0_98, %c0_99] : memref<8x128xf32, #tpu.memory_space<vmem>>, vector<8x128xf32>
      %308 = arith.index_cast %306 : i32 to index
      %c0_100 = arith.constant 0 : index
      %309 = vector.load %arg4[%308, %c0_100] : memref<8x128xf32, #tpu.memory_space<vmem>>, vector<8x128xf32>
      tpu.vector_store %arg4[%308, %c0_100], %307 {strides = array<i32>} : memref<8x128xf32, #tpu.memory_space<vmem>>, vector<8x128xf32>,
    } else {
    }
    %c5_i32 = arith.constant 5 : i32
    %194 = arith.index_cast %c5_i32 : i32 to index
    %c0_62 = arith.constant 0 : index
    %195 = vector.load %arg5[%194, %c0_62] : memref<8x512xf32, #tpu.memory_space<vmem>>, vector<1x512xf32>
    %196 = arith.truncf %187 : vector<1x128xf32> to vector<1x128xbf16>
    %c0_63 = arith.constant 0 : index
    %c0_64 = arith.constant 0 : index
    %197 = vector.load %arg2[%c0_63, %c0_64] : memref<128x512xbf16, #tpu.memory_space<vmem>>, vector<128x512xbf16>
    %cst_65 = arith.constant dense<0.000000e+00> : vector<1x512xf32>
    %198 = tpu.matmul %196, %197, %cst_65 {dimension_numbers = #tpu.dot_dimension_numbers<[1], [0], [0], [1], [0, 0, 1, 1], [], []>} : vector<1x128xbf16>, vector<128x512xbf16>, vector<1x512xf32> -> vector<1x512xf32>
    %199 = arith.addf %195, %198 : vector<1x512xf32>
    %200 = vector.extract_strided_slice %199 {offsets = [0, 0], sizes = [1, 128], strides = [1, 1]} : vector<1x512xf32> to vector<1x128xf32>
    %201 = arith.negf %200 : vector<1x128xf32>
    %202 = math.exp %201 : vector<1x128xf32>
    %cst_66 = arith.constant 1.000000e+00 : f32
    %203 = vector.broadcast %cst_66 : f32 to vector<1x128xf32>
    %204 = arith.addf %203, %202 : vector<1x128xf32>
    %205 = arith.divf %203, %204 : vector<1x128xf32>
    %206 = vector.extract_strided_slice %199 {offsets = [0, 128], sizes = [1, 128], strides = [1, 1]} : vector<1x512xf32> to vector<1x128xf32>
    %207 = arith.negf %206 : vector<1x128xf32>
    %208 = math.exp %207 : vector<1x128xf32>
    %cst_67 = arith.constant 1.000000e+00 : f32
    %209 = vector.broadcast %cst_67 : f32 to vector<1x128xf32>
    %210 = arith.addf %209, %208 : vector<1x128xf32>
    %211 = arith.divf %209, %210 : vector<1x128xf32>
    %212 = vector.extract_strided_slice %199 {offsets = [0, 256], sizes = [1, 128], strides = [1, 1]} : vector<1x512xf32> to vector<1x128xf32>
    %213 = math.tanh %212 : vector<1x128xf32>
    %214 = vector.extract_strided_slice %199 {offsets = [0, 384], sizes = [1, 128], strides = [1, 1]} : vector<1x512xf32> to vector<1x128xf32>
    %215 = arith.negf %214 : vector<1x128xf32>
    %216 = math.exp %215 : vector<1x128xf32>
    %cst_68 = arith.constant 1.000000e+00 : f32
    %217 = vector.broadcast %cst_68 : f32 to vector<1x128xf32>
    %218 = arith.addf %217, %216 : vector<1x128xf32>
    %219 = arith.divf %217, %218 : vector<1x128xf32>
    %220 = arith.mulf %211, %185 : vector<1x128xf32>
    %221 = arith.mulf %205, %213 : vector<1x128xf32>
    %222 = arith.addf %220, %221 : vector<1x128xf32>
    %223 = math.tanh %222 : vector<1x128xf32>
    %224 = arith.mulf %219, %223 : vector<1x128xf32>
    %c8_i32_69 = arith.constant 8 : i32
    %225 = arith.remsi %c5_i32, %c8_i32_69 : i32
    %226 = arith.index_cast %225 : i32 to index
    %c0_70 = arith.constant 0 : index
    %227 = vector.load %arg6[%226, %c0_70] : memref<8x128xf32, #tpu.memory_space<vmem>>, vector<1x128xf32>
    tpu.vector_store %arg6[%226, %c0_70], %224 {strides = array<i32>} : memref<8x128xf32, #tpu.memory_space<vmem>>, vector<1x128xf32>,
    %c7_i32_71 = arith.constant 7 : i32
    %228 = arith.cmpi eq, %225, %c7_i32_71 : i32
    %229 = arith.extui %228 : i1 to i32
    %c0_i32_72 = arith.constant 0 : i32
    %230 = arith.cmpi ne, %229, %c0_i32_72 : i32
    scf.if %230 {
      %c7_i32_97 = arith.constant 7 : i32
      %305 = arith.subi %c5_i32, %c7_i32_97 : i32
      %306 = tpu.assume_multiple %305, 8 : i32
      %c0_98 = arith.constant 0 : index
      %c0_99 = arith.constant 0 : index
      %307 = vector.load %arg6[%c0_98, %c0_99] : memref<8x128xf32, #tpu.memory_space<vmem>>, vector<8x128xf32>
      %308 = arith.index_cast %306 : i32 to index
      %c0_100 = arith.constant 0 : index
      %309 = vector.load %arg4[%308, %c0_100] : memref<8x128xf32, #tpu.memory_space<vmem>>, vector<8x128xf32>
      tpu.vector_store %arg4[%308, %c0_100], %307 {strides = array<i32>} : memref<8x128xf32, #tpu.memory_space<vmem>>, vector<8x128xf32>,
    } else {
    }
    %c6_i32 = arith.constant 6 : i32
    %231 = arith.index_cast %c6_i32 : i32 to index
    %c0_73 = arith.constant 0 : index
    %232 = vector.load %arg5[%231, %c0_73] : memref<8x512xf32, #tpu.memory_space<vmem>>, vector<1x512xf32>
    %233 = arith.truncf %224 : vector<1x128xf32> to vector<1x128xbf16>
    %c0_74 = arith.constant 0 : index
    %c0_75 = arith.constant 0 : index
    %234 = vector.load %arg2[%c0_74, %c0_75] : memref<128x512xbf16, #tpu.memory_space<vmem>>, vector<128x512xbf16>
    %cst_76 = arith.constant dense<0.000000e+00> : vector<1x512xf32>
    %235 = tpu.matmul %233, %234, %cst_76 {dimension_numbers = #tpu.dot_dimension_numbers<[1], [0], [0], [1], [0, 0, 1, 1], [], []>} : vector<1x128xbf16>, vector<128x512xbf16>, vector<1x512xf32> -> vector<1x512xf32>
    %236 = arith.addf %232, %235 : vector<1x512xf32>
    %237 = vector.extract_strided_slice %236 {offsets = [0, 0], sizes = [1, 128], strides = [1, 1]} : vector<1x512xf32> to vector<1x128xf32>
    %238 = arith.negf %237 : vector<1x128xf32>
    %239 = math.exp %238 : vector<1x128xf32>
    %cst_77 = arith.constant 1.000000e+00 : f32
    %240 = vector.broadcast %cst_77 : f32 to vector<1x128xf32>
    %241 = arith.addf %240, %239 : vector<1x128xf32>
    %242 = arith.divf %240, %241 : vector<1x128xf32>
    %243 = vector.extract_strided_slice %236 {offsets = [0, 128], sizes = [1, 128], strides = [1, 1]} : vector<1x512xf32> to vector<1x128xf32>
    %244 = arith.negf %243 : vector<1x128xf32>
    %245 = math.exp %244 : vector<1x128xf32>
    %cst_78 = arith.constant 1.000000e+00 : f32
    %246 = vector.broadcast %cst_78 : f32 to vector<1x128xf32>
    %247 = arith.addf %246, %245 : vector<1x128xf32>
    %248 = arith.divf %246, %247 : vector<1x128xf32>
    %249 = vector.extract_strided_slice %236 {offsets = [0, 256], sizes = [1, 128], strides = [1, 1]} : vector<1x512xf32> to vector<1x128xf32>
    %250 = math.tanh %249 : vector<1x128xf32>
    %251 = vector.extract_strided_slice %236 {offsets = [0, 384], sizes = [1, 128], strides = [1, 1]} : vector<1x512xf32> to vector<1x128xf32>
    %252 = arith.negf %251 : vector<1x128xf32>
    %253 = math.exp %252 : vector<1x128xf32>
    %cst_79 = arith.constant 1.000000e+00 : f32
    %254 = vector.broadcast %cst_79 : f32 to vector<1x128xf32>
    %255 = arith.addf %254, %253 : vector<1x128xf32>
    %256 = arith.divf %254, %255 : vector<1x128xf32>
    %257 = arith.mulf %248, %222 : vector<1x128xf32>
    %258 = arith.mulf %242, %250 : vector<1x128xf32>
    %259 = arith.addf %257, %258 : vector<1x128xf32>
    %260 = math.tanh %259 : vector<1x128xf32>
    %261 = arith.mulf %256, %260 : vector<1x128xf32>
    %c8_i32_80 = arith.constant 8 : i32
    %262 = arith.remsi %c6_i32, %c8_i32_80 : i32
    %263 = arith.index_cast %262 : i32 to index
    %c0_81 = arith.constant 0 : index
    %264 = vector.load %arg6[%263, %c0_81] : memref<8x128xf32, #tpu.memory_space<vmem>>, vector<1x128xf32>
    tpu.vector_store %arg6[%263, %c0_81], %261 {strides = array<i32>} : memref<8x128xf32, #tpu.memory_space<vmem>>, vector<1x128xf32>,
    %c7_i32_82 = arith.constant 7 : i32
    %265 = arith.cmpi eq, %262, %c7_i32_82 : i32
    %266 = arith.extui %265 : i1 to i32
    %c0_i32_83 = arith.constant 0 : i32
    %267 = arith.cmpi ne, %266, %c0_i32_83 : i32
    scf.if %267 {
      %c7_i32_97 = arith.constant 7 : i32
      %305 = arith.subi %c6_i32, %c7_i32_97 : i32
      %306 = tpu.assume_multiple %305, 8 : i32
      %c0_98 = arith.constant 0 : index
      %c0_99 = arith.constant 0 : index
      %307 = vector.load %arg6[%c0_98, %c0_99] : memref<8x128xf32, #tpu.memory_space<vmem>>, vector<8x128xf32>
      %308 = arith.index_cast %306 : i32 to index
      %c0_100 = arith.constant 0 : index
      %309 = vector.load %arg4[%308, %c0_100] : memref<8x128xf32, #tpu.memory_space<vmem>>, vector<8x128xf32>
      tpu.vector_store %arg4[%308, %c0_100], %307 {strides = array<i32>} : memref<8x128xf32, #tpu.memory_space<vmem>>, vector<8x128xf32>,
    } else {
    }
    %c7_i32_84 = arith.constant 7 : i32
    %268 = arith.index_cast %c7_i32_84 : i32 to index
    %c0_85 = arith.constant 0 : index
    %269 = vector.load %arg5[%268, %c0_85] : memref<8x512xf32, #tpu.memory_space<vmem>>, vector<1x512xf32>
    %270 = arith.truncf %261 : vector<1x128xf32> to vector<1x128xbf16>
    %c0_86 = arith.constant 0 : index
    %c0_87 = arith.constant 0 : index
    %271 = vector.load %arg2[%c0_86, %c0_87] : memref<128x512xbf16, #tpu.memory_space<vmem>>, vector<128x512xbf16>
    %cst_88 = arith.constant dense<0.000000e+00> : vector<1x512xf32>
    %272 = tpu.matmul %270, %271, %cst_88 {dimension_numbers = #tpu.dot_dimension_numbers<[1], [0], [0], [1], [0, 0, 1, 1], [], []>} : vector<1x128xbf16>, vector<128x512xbf16>, vector<1x512xf32> -> vector<1x512xf32>
    %273 = arith.addf %269, %272 : vector<1x512xf32>
    %274 = vector.extract_strided_slice %273 {offsets = [0, 0], sizes = [1, 128], strides = [1, 1]} : vector<1x512xf32> to vector<1x128xf32>
    %275 = arith.negf %274 : vector<1x128xf32>
    %276 = math.exp %275 : vector<1x128xf32>
    %cst_89 = arith.constant 1.000000e+00 : f32
    %277 = vector.broadcast %cst_89 : f32 to vector<1x128xf32>
    %278 = arith.addf %277, %276 : vector<1x128xf32>
    %279 = arith.divf %277, %278 : vector<1x128xf32>
    %280 = vector.extract_strided_slice %273 {offsets = [0, 128], sizes = [1, 128], strides = [1, 1]} : vector<1x512xf32> to vector<1x128xf32>
    %281 = arith.negf %280 : vector<1x128xf32>
    %282 = math.exp %281 : vector<1x128xf32>
    %cst_90 = arith.constant 1.000000e+00 : f32
    %283 = vector.broadcast %cst_90 : f32 to vector<1x128xf32>
    %284 = arith.addf %283, %282 : vector<1x128xf32>
    %285 = arith.divf %283, %284 : vector<1x128xf32>
    %286 = vector.extract_strided_slice %273 {offsets = [0, 256], sizes = [1, 128], strides = [1, 1]} : vector<1x512xf32> to vector<1x128xf32>
    %287 = math.tanh %286 : vector<1x128xf32>
    %288 = vector.extract_strided_slice %273 {offsets = [0, 384], sizes = [1, 128], strides = [1, 1]} : vector<1x512xf32> to vector<1x128xf32>
    %289 = arith.negf %288 : vector<1x128xf32>
    %290 = math.exp %289 : vector<1x128xf32>
    %cst_91 = arith.constant 1.000000e+00 : f32
    %291 = vector.broadcast %cst_91 : f32 to vector<1x128xf32>
    %292 = arith.addf %291, %290 : vector<1x128xf32>
    %293 = arith.divf %291, %292 : vector<1x128xf32>
    %294 = arith.mulf %285, %259 : vector<1x128xf32>
    %295 = arith.mulf %279, %287 : vector<1x128xf32>
    %296 = arith.addf %294, %295 : vector<1x128xf32>
    %297 = math.tanh %296 : vector<1x128xf32>
    %298 = arith.mulf %293, %297 : vector<1x128xf32>
    %c8_i32_92 = arith.constant 8 : i32
    %299 = arith.remsi %c7_i32_84, %c8_i32_92 : i32
    %300 = arith.index_cast %299 : i32 to index
    %c0_93 = arith.constant 0 : index
    %301 = vector.load %arg6[%300, %c0_93] : memref<8x128xf32, #tpu.memory_space<vmem>>, vector<1x128xf32>
    tpu.vector_store %arg6[%300, %c0_93], %298 {strides = array<i32>} : memref<8x128xf32, #tpu.memory_space<vmem>>, vector<1x128xf32>,
    %c7_i32_94 = arith.constant 7 : i32
    %302 = arith.cmpi eq, %299, %c7_i32_94 : i32
    %303 = arith.extui %302 : i1 to i32
    %c0_i32_95 = arith.constant 0 : i32
    %304 = arith.cmpi ne, %303, %c0_i32_95 : i32
    scf.if %304 {
      %c7_i32_97 = arith.constant 7 : i32
      %305 = arith.subi %c7_i32_84, %c7_i32_97 : i32
      %306 = tpu.assume_multiple %305, 8 : i32
      %c0_98 = arith.constant 0 : index
      %c0_99 = arith.constant 0 : index
      %307 = vector.load %arg6[%c0_98, %c0_99] : memref<8x128xf32, #tpu.memory_space<vmem>>, vector<8x128xf32>
      %308 = arith.index_cast %306 : i32 to index
      %c0_100 = arith.constant 0 : index
      %309 = vector.load %arg4[%308, %c0_100] : memref<8x128xf32, #tpu.memory_space<vmem>>, vector<8x128xf32>
      tpu.vector_store %arg4[%308, %c0_100], %307 {strides = array<i32>} : memref<8x128xf32, #tpu.memory_space<vmem>>, vector<8x128xf32>,
    } else {
    }
    %c8_i32_96 = arith.constant 8 : i32
    return
  }
}

</mosaic_0001>

<llo_original>
// kernel: lstm_reddit_forward.3
$region0: #{lstm_reddit_forward.3}
  #allocation0 [shape = 'u32[]', space=smem, size = 0x4, offset = 0x4, fixed_abs, tag = 'smem constant byte address 0x4 - core index']
  #allocation1 [shape = 'u32[144,128]{1,0:T(1,128)}', space=vmem, size = 0x12000, scoped, tag = 'internal scratch']
  %s0 = inlined_call_operand.hbm [shape: f32[8,128], index: 0, kind: input, shape index: {}]
  %s1 = inlined_call_operand.hbm [shape: bf16[128,128], index: 1, kind: input, shape index: {}]
  %s2 = inlined_call_operand.hbm [shape: f32[1,128], index: 2, kind: input, shape index: {}]
  %s3 = inlined_call_operand.hbm [shape: bf16[128,512], index: 3, kind: input, shape index: {}]
  %s4 = inlined_call_operand.hbm [shape: f32[1,512], index: 4, kind: input, shape index: {}]
  %s5 = inlined_call_operand.hbm [shape: f32[8,512], index: 5, kind: output, shape index: {}]
  %s6 = sld [smem:[#allocation0]]
  $region50: #{lstm_reddit_forward.3} parent=0
    _
  %s8 = ssub.s32 1, %s6
  %s9 = scalar_select 0, %s8, %s6
  $region1: #{lstm_reddit_forward.3} parent=0
    #allocation2 [shape = 'u8[4096]{0}', space=vmem, size = 0x1000, scoped, tag = 'input window, operand 0, single buffered']
    #allocation3 [shape = 's32[1]{0}', space=sflag, size = 0x4, scoped, tag = 'scoped memory for lstm_reddit_forward.3']
    #allocation4 [shape = 's32[1]{0}', space=sflag, size = 0x4, scoped, tag = 'scoped memory for lstm_reddit_forward.3']
    #allocation5 [shape = 'u8[32768]{0}', space=vmem, size = 0x8000, scoped, tag = 'input window, operand 1, single buffered']
    #allocation6 [shape = 's32[1]{0}', space=sflag, size = 0x4, scoped, tag = 'scoped memory for lstm_reddit_forward.3']
    #allocation7 [shape = 'u8[512]{0}', space=vmem, size = 0x400, scoped, tag = 'input window, operand 2, single buffered']
    #allocation8 [shape = 'u8[131072]{0}', space=vmem, size = 0x20000, scoped, tag = 'input window, operand 3, single buffered']
    #allocation9 [shape = 's32[1]{0}', space=sflag, size = 0x4, scoped, tag = 'scoped memory for lstm_reddit_forward.3']
    #allocation10 [shape = 'u8[2048]{0}', space=vmem, size = 0x800, scoped, tag = 'input window, operand 4, single buffered']
    #allocation11 [shape = 'u8[16384]{0}', space=vmem, size = 0x4000, scoped, tag = 'output window, operand 0, single buffered']
    %10 = vsyncpa [#allocation3], 0
    %11 = vsyncpa [#allocation6], 0
    %12 = vsyncpa [#allocation9], 0
    %13 = vsyncpa [#allocation4], 0
    // Predicated region
    $region2: #{lstm_reddit_forward.3} parent=1 // pred_check
      _
    $region3: #{lstm_reddit_forward.3} parent=1 // pred_check_branch
      %15 = sbr.rel (0) target = $region5
    $region4: #{lstm_reddit_forward.3} parent=1 // pred_region
      %s17 = ssub.s32 128, 128
      %18 = vsyncadd [#allocation3], %s17
      %s20 = sshll.u32 [#allocation2], 4
      %s21 = int_to_ptr.vmem [resolvable:$true] %s20
      %23 = dma.hbm_to_vmem [thread:$0]  %s0, 128, %s21, [#allocation3]
    $region5: #{lstm_reddit_forward.3} parent=1 // pred_fallthru
      _
    // Predicated region
    $region6: #{lstm_reddit_forward.3} parent=1 // pred_check
      _
    $region7: #{lstm_reddit_forward.3} parent=1 // pred_check_branch
      %25 = sbr.rel (0) target = $region9
    $region8: #{lstm_reddit_forward.3} parent=1 // pred_region
      %s27 = ssub.s32 1024, 1024
      %28 = vsyncadd [#allocation6], %s27
      %s29 = sshll.u32 [#allocation5], 4
      %s30 = int_to_ptr.vmem [resolvable:$true] %s29
      %35 = dma.hbm_to_vmem [thread:$0]  %s1, 1024, %s30, [#allocation6], 64, 64, 4
    $region9: #{lstm_reddit_forward.3} parent=1 // pred_fallthru
      _
    // Predicated region
    $region10: #{lstm_reddit_forward.3} parent=1 // pred_check
      _
    $region11: #{lstm_reddit_forward.3} parent=1 // pred_check_branch
      %37 = sbr.rel (0) target = $region13
    $region12: #{lstm_reddit_forward.3} parent=1 // pred_region
      %s39 = ssub.s32 16, 16
      %40 = vsyncadd [#allocation6], %s39
      %s42 = sshll.u32 [#allocation7], 4
      %s43 = int_to_ptr.vmem [resolvable:$true] %s42
      %45 = dma.hbm_to_vmem [thread:$0]  %s2, 16, %s43, [#allocation6]
    $region13: #{lstm_reddit_forward.3} parent=1 // pred_fallthru
      _
    // Predicated region
    $region14: #{lstm_reddit_forward.3} parent=1 // pred_check
      _
    $region15: #{lstm_reddit_forward.3} parent=1 // pred_check_branch
      %47 = sbr.rel (0) target = $region17
    $region16: #{lstm_reddit_forward.3} parent=1 // pred_region
      %s49 = ssub.s32 4096, 4096
      %50 = vsyncadd [#allocation9], %s49
      %s51 = sshll.u32 [#allocation8], 4
      %s52 = int_to_ptr.vmem [resolvable:$true] %s51
      %57 = dma.hbm_to_vmem [thread:$0]  %s3, 4096, %s52, [#allocation9], 256, 256, 16
    $region17: #{lstm_reddit_forward.3} parent=1 // pred_fallthru
      _
    // Predicated region
    $region18: #{lstm_reddit_forward.3} parent=1 // pred_check
      _
    $region19: #{lstm_reddit_forward.3} parent=1 // pred_check_branch
      %59 = sbr.rel (0) target = $region21
    $region20: #{lstm_reddit_forward.3} parent=1 // pred_region
      %s61 = ssub.s32 64, 64
      %62 = vsyncadd [#allocation9], %s61
      %s64 = sshll.u32 [#allocation10], 4
      %s65 = int_to_ptr.vmem [resolvable:$true] %s64
      %67 = dma.hbm_to_vmem [thread:$0]  %s4, 64, %s65, [#allocation9]
    $region21: #{lstm_reddit_forward.3} parent=1 // pred_fallthru
      _
    // Predicated region
    $region22: #{lstm_reddit_forward.3} parent=1 // pred_check
      _
    $region23: #{lstm_reddit_forward.3} parent=1 // pred_check_branch
      %69 = sbr.rel (0) target = $region25
    $region24: #{lstm_reddit_forward.3} parent=1 // pred_region
      %70 = dma.done [#allocation3], 128
    $region25: #{lstm_reddit_forward.3} parent=1 // pred_fallthru
      _
    // Predicated region
    $region26: #{lstm_reddit_forward.3} parent=1 // pred_check
      _
    $region27: #{lstm_reddit_forward.3} parent=1 // pred_check_branch
      %72 = sbr.rel (0) target = $region29
    $region28: #{lstm_reddit_forward.3} parent=1 // pred_region
      %73 = dma.done [#allocation6], 1024
    $region29: #{lstm_reddit_forward.3} parent=1 // pred_fallthru
      _
    // Predicated region
    $region30: #{lstm_reddit_forward.3} parent=1 // pred_check
      _
    $region31: #{lstm_reddit_forward.3} parent=1 // pred_check_branch
      %75 = sbr.rel (0) target = $region33
    $region32: #{lstm_reddit_forward.3} parent=1 // pred_region
      %76 = dma.done [#allocation6], 16
    $region33: #{lstm_reddit_forward.3} parent=1 // pred_fallthru
      _
    // Predicated region
    $region34: #{lstm_reddit_forward.3} parent=1 // pred_check
      _
    $region35: #{lstm_reddit_forward.3} parent=1 // pred_check_branch
      %78 = sbr.rel (0) target = $region37
    $region36: #{lstm_reddit_forward.3} parent=1 // pred_region
      %79 = dma.done [#allocation9], 4096
    $region37: #{lstm_reddit_forward.3} parent=1 // pred_fallthru
      _
    // Predicated region
    $region38: #{lstm_reddit_forward.3} parent=1 // pred_check
      _
    $region39: #{lstm_reddit_forward.3} parent=1 // pred_check_branch
      %81 = sbr.rel (0) target = $region41
    $region40: #{lstm_reddit_forward.3} parent=1 // pred_region
      %82 = dma.done [#allocation9], 64
    $region41: #{lstm_reddit_forward.3} parent=1 // pred_fallthru
      _
    %v84 = vld [vmem:[#allocation2] sm:$0xff]
    %v85 = vpack.c.bf16 %v84, %v84
    %v86 = vld [vmem:[#allocation5] sm:$0xf]
    %v87 = vld [vmem:[#allocation5 + $0x4] sm:$0xf]
    %v88 = vld [vmem:[#allocation5 + $0x8] sm:$0xf]
    %v89 = vld [vmem:[#allocation5 + $0xc] sm:$0xf]
    %v90 = vld [vmem:[#allocation5 + $0x10] sm:$0xf]
    %v91 = vld [vmem:[#allocation5 + $0x14] sm:$0xf]
    %v92 = vld [vmem:[#allocation5 + $0x18] sm:$0xf]
    %v93 = vld [vmem:[#allocation5 + $0x1c] sm:$0xf]
    %v94 = vld [vmem:[#allocation5 + $0x20] sm:$0xf]
    %v95 = vld [vmem:[#allocation5 + $0x24] sm:$0xf]
    %v96 = vld [vmem:[#allocation5 + $0x28] sm:$0xf]
    %v97 = vld [vmem:[#allocation5 + $0x2c] sm:$0xf]
    %v98 = vld [vmem:[#allocation5 + $0x30] sm:$0xf]
    %v99 = vld [vmem:[#allocation5 + $0x34] sm:$0xf]
    %v100 = vld [vmem:[#allocation5 + $0x38] sm:$0xf]
    %v101 = vld [vmem:[#allocation5 + $0x3c] sm:$0xf]
    %v102 = vld [vmem:[#allocation7] sm:$0x1]
    %v104 = vlaneseq
    %v105 = vshrl.u32 %v104, 7
    %v106 = vsub.s32 0, %v105
    %v107 = vrot.slane %v102, %v106
    %v125 = vunpack.c.l.b16 %v86
    %v126 = vunpack.c.l.b16 %v87
    %v127 = vunpack.c.l.b16 %v88
    %v128 = vunpack.c.l.b16 %v89
    %v129 = vunpack.c.l.b16 %v90
    %v130 = vunpack.c.l.b16 %v91
    %v131 = vunpack.c.l.b16 %v92
    %v132 = vunpack.c.l.b16 %v93
    %v133 = vunpack.c.l.b16 %v94
    %v134 = vunpack.c.l.b16 %v95
    %v135 = vunpack.c.l.b16 %v96
    %v136 = vunpack.c.l.b16 %v97
    %v137 = vunpack.c.l.b16 %v98
    %v138 = vunpack.c.l.b16 %v99
    %v139 = vunpack.c.l.b16 %v100
    %v140 = vunpack.c.l.b16 %v101
    %v141 = vpack.c.b16 %v126, %v125
    %v142 = vpack.c.b16 %v128, %v127
    %v143 = vpack.c.b16 %v130, %v129
    %v144 = vpack.c.b16 %v132, %v131
    %v145 = vpack.c.b16 %v134, %v133
    %v146 = vpack.c.b16 %v136, %v135
    %v147 = vpack.c.b16 %v138, %v137
    %v148 = vpack.c.b16 %v140, %v139
    %157 = vmatprep.subr.bf16.mxu0 0
    %158 = vmatpush1.bf16.msra.mxu0 %v141
    %159 = vmatprep.subr.bf16.mxu0 0
    %160 = vmatpush1.bf16.msra.mxu0 %v142
    %161 = vmatprep.subr.bf16.mxu0 0
    %162 = vmatpush1.bf16.msra.mxu0 %v143
    %163 = vmatprep.subr.bf16.mxu0 0
    %164 = vmatpush1.bf16.msra.mxu0 %v144
    %165 = vmatprep.subr.bf16.mxu0 0
    %166 = vmatpush1.bf16.msra.mxu0 %v145
    %167 = vmatprep.subr.bf16.mxu0 0
    %168 = vmatpush1.bf16.msra.mxu0 %v146
    %169 = vmatprep.subr.bf16.mxu0 0
    %170 = vmatpush1.bf16.msra.mxu0 %v147
    %171 = vmatprep.subr.bf16.mxu0 0
    %172 = vmatpush1.bf16.msra.mxu0 %v148
    %173 = vmatprep.subr.bf16.mxu0 0
    %174 = vmatpush1.bf16.msra.mxu0 0
    %175 = vmatprep.subr.bf16.mxu0 0
    %176 = vmatpush1.bf16.msra.mxu0 0
    %177 = vmatprep.subr.bf16.mxu0 0
    %178 = vmatpush1.bf16.msra.mxu0 0
    %179 = vmatprep.subr.bf16.mxu0 0
    %180 = vmatpush1.bf16.msra.mxu0 0
    %181 = vmatprep.subr.bf16.mxu0 0
    %182 = vmatpush1.bf16.msra.mxu0 0
    %183 = vmatprep.subr.bf16.mxu0 0
    %184 = vmatpush1.bf16.msra.mxu0 0
    %185 = vmatprep.subr.bf16.mxu0 0
    %186 = vmatpush1.bf16.msra.mxu0 0
    %187 = vmatprep.subr.bf16.mxu0 0
    %188 = vmatpush1.bf16.msra.mxu0 0
    %189 = vmatprep.mubr.bf16.mxu0 0
    %190 = vmatmul.mubr.bf16.gmra.mrb[0].mxu0 %v85
    %v191 = vpop.f32.mrb[0].mxu0
    %v192 = vadd.f32 %v107, %v191
    %v193 = vpop.f32.mrb[0].mxu0
    %v194 = vpop.f32.mrb[0].mxu0
    %v195 = vpop.f32.mrb[0].mxu0
    %196 = vdwg.mxu0
    %v197 = vpack.c.bf16 %v192, %v192
    %v198 = vld [vmem:[#allocation8] sm:$0xff]
    %v199 = vld [vmem:[#allocation8 + $0x8] sm:$0xff]
    %v200 = vld [vmem:[#allocation8 + $0x10] sm:$0xff]
    %v201 = vld [vmem:[#allocation8 + $0x18] sm:$0xff]
    %v202 = vld [vmem:[#allocation8 + $0x20] sm:$0xff]
    %v203 = vld [vmem:[#allocation8 + $0x28] sm:$0xff]
    %v204 = vld [vmem:[#allocation8 + $0x30] sm:$0xff]
    %v205 = vld [vmem:[#allocation8 + $0x38] sm:$0xff]
    %v206 = vld [vmem:[#allocation8 + $0x40] sm:$0xff]
    %v207 = vld [vmem:[#allocation8 + $0x48] sm:$0xff]
    %v208 = vld [vmem:[#allocation8 + $0x50] sm:$0xff]
    %v209 = vld [vmem:[#allocation8 + $0x58] sm:$0xff]
    %v210 = vld [vmem:[#allocation8 + $0x60] sm:$0xff]
    %v211 = vld [vmem:[#allocation8 + $0x68] sm:$0xff]
    %v212 = vld [vmem:[#allocation8 + $0x70] sm:$0xff]
    %v213 = vld [vmem:[#allocation8 + $0x78] sm:$0xff]
    %v214 = vld [vmem:[#allocation8 + $0x80] sm:$0xff]
    %v215 = vld [vmem:[#allocation8 + $0x88] sm:$0xff]
    %v216 = vld [vmem:[#allocation8 + $0x90] sm:$0xff]
    %v217 = vld [vmem:[#allocation8 + $0x98] sm:$0xff]
    %v218 = vld [vmem:[#allocation8 + $0xa0] sm:$0xff]
    %v219 = vld [vmem:[#allocation8 + $0xa8] sm:$0xff]
    %v220 = vld [vmem:[#allocation8 + $0xb0] sm:$0xff]
    %v221 = vld [vmem:[#allocation8 + $0xb8] sm:$0xff]
    %v222 = vld [vmem:[#allocation8 + $0xc0] sm:$0xff]
    %v223 = vld [vmem:[#allocation8 + $0xc8] sm:$0xff]
    %v224 = vld [vmem:[#allocation8 + $0xd0] sm:$0xff]
    %v225 = vld [vmem:[#allocation8 + $0xd8] sm:$0xff]
    %v226 = vld [vmem:[#allocation8 + $0xe0] sm:$0xff]
    %v227 = vld [vmem:[#allocation8 + $0xe8] sm:$0xff]
    %v228 = vld [vmem:[#allocation8 + $0xf0] sm:$0xff]
    %v229 = vld [vmem:[#allocation8 + $0xf8] sm:$0xff]
    %v230 = vld [vmem:[#allocation10] sm:$0xf]
    %v232 = vlaneseq
    %v233 = vshrl.u32 %v232, 7
    %v234 = vsub.s32 0, %v233
    %v235 = vrot.slane %v230, %v234
    %v236 = vlaneseq
    %v237 = vshrl.u32 %v236, 7
    %v238 = vsub.s32 1, %v237
    %v239 = vrot.slane %v230, %v238
    %v240 = vlaneseq
    %v241 = vshrl.u32 %v240, 7
    %v242 = vsub.s32 2, %v241
    %v243 = vrot.slane %v230, %v242
    %v244 = vlaneseq
    %v245 = vshrl.u32 %v244, 7
    %v246 = vsub.s32 3, %v245
    %v247 = vrot.slane %v230, %v246
    %v284 = vunpack.c.l.b16 %v198
    %v285 = vunpack.c.h.b16 %v198
    %v286 = vunpack.c.l.b16 %v199
    %v287 = vunpack.c.h.b16 %v199
    %v288 = vunpack.c.l.b16 %v200
    %v289 = vunpack.c.h.b16 %v200
    %v290 = vunpack.c.l.b16 %v201
    %v291 = vunpack.c.h.b16 %v201
    %v292 = vunpack.c.l.b16 %v202
    %v293 = vunpack.c.h.b16 %v202
    %v294 = vunpack.c.l.b16 %v203
    %v295 = vunpack.c.h.b16 %v203
    %v296 = vunpack.c.l.b16 %v204
    %v297 = vunpack.c.h.b16 %v204
    %v298 = vunpack.c.l.b16 %v205
    %v299 = vunpack.c.h.b16 %v205
    %v300 = vunpack.c.l.b16 %v206
    %v301 = vunpack.c.h.b16 %v206
    %v302 = vunpack.c.l.b16 %v207
    %v303 = vunpack.c.h.b16 %v207
    %v304 = vunpack.c.l.b16 %v208
    %v305 = vunpack.c.h.b16 %v208
    %v306 = vunpack.c.l.b16 %v209
    %v307 = vunpack.c.h.b16 %v209
    %v308 = vunpack.c.l.b16 %v210
    %v309 = vunpack.c.h.b16 %v210
    %v310 = vunpack.c.l.b16 %v211
    %v311 = vunpack.c.h.b16 %v211
    %v312 = vunpack.c.l.b16 %v212
    %v313 = vunpack.c.h.b16 %v212
    %v314 = vunpack.c.l.b16 %v213
    %v315 = vunpack.c.h.b16 %v213
    %v316 = vunpack.c.l.b16 %v214
    %v317 = vunpack.c.h.b16 %v214
    %v318 = vunpack.c.l.b16 %v215
    %v319 = vunpack.c.h.b16 %v215
    %v320 = vunpack.c.l.b16 %v216
    %v321 = vunpack.c.h.b16 %v216
    %v322 = vunpack.c.l.b16 %v217
    %v323 = vunpack.c.h.b16 %v217
    %v324 = vunpack.c.l.b16 %v218
    %v325 = vunpack.c.h.b16 %v218
    %v326 = vunpack.c.l.b16 %v219
    %v327 = vunpack.c.h.b16 %v219
    %v328 = vunpack.c.l.b16 %v220
    %v329 = vunpack.c.h.b16 %v220
    %v330 = vunpack.c.l.b16 %v221
    %v331 = vunpack.c.h.b16 %v221
    %v332 = vunpack.c.l.b16 %v222
    %v333 = vunpack.c.h.b16 %v222
    %v334 = vunpack.c.l.b16 %v223
    %v335 = vunpack.c.h.b16 %v223
    %v336 = vunpack.c.l.b16 %v224
    %v337 = vunpack.c.h.b16 %v224
    %v338 = vunpack.c.l.b16 %v225
    %v339 = vunpack.c.h.b16 %v225
    %v340 = vunpack.c.l.b16 %v226
    %v341 = vunpack.c.h.b16 %v226
    %v342 = vunpack.c.l.b16 %v227
    %v343 = vunpack.c.h.b16 %v227
    %v344 = vunpack.c.l.b16 %v228
    %v345 = vunpack.c.h.b16 %v228
    %v346 = vunpack.c.l.b16 %v229
    %v347 = vunpack.c.h.b16 %v229
    %v348 = vpack.c.b16 %v288, %v284
    %v349 = vpack.c.b16 %v289, %v285
    %v350 = vpack.c.b16 %v290, %v286
    %v351 = vpack.c.b16 %v291, %v287
    %v352 = vpack.c.b16 %v296, %v292
    %v353 = vpack.c.b16 %v297, %v293
    %v354 = vpack.c.b16 %v298, %v294
    %v355 = vpack.c.b16 %v299, %v295
    %v356 = vpack.c.b16 %v304, %v300
    %v357 = vpack.c.b16 %v305, %v301
    %v358 = vpack.c.b16 %v306, %v302
    %v359 = vpack.c.b16 %v307, %v303
    %v360 = vpack.c.b16 %v312, %v308
    %v361 = vpack.c.b16 %v313, %v309
    %v362 = vpack.c.b16 %v314, %v310
    %v363 = vpack.c.b16 %v315, %v311
    %v364 = vpack.c.b16 %v320, %v316
    %v365 = vpack.c.b16 %v321, %v317
    %v366 = vpack.c.b16 %v322, %v318
    %v367 = vpack.c.b16 %v323, %v319
    %v368 = vpack.c.b16 %v328, %v324
    %v369 = vpack.c.b16 %v329, %v325
    %v370 = vpack.c.b16 %v330, %v326
    %v371 = vpack.c.b16 %v331, %v327
    %v372 = vpack.c.b16 %v336, %v332
    %v373 = vpack.c.b16 %v337, %v333
    %v374 = vpack.c.b16 %v338, %v334
    %v375 = vpack.c.b16 %v339, %v335
    %v376 = vpack.c.b16 %v344, %v340
    %v377 = vpack.c.b16 %v345, %v341
    %v378 = vpack.c.b16 %v346, %v342
    %v379 = vpack.c.b16 %v347, %v343
    %412 = vmatprep.subr.bf16.mxu0 %v349
    %413 = vmatpush1.bf16.msra.mxu0 %v348
    %414 = vmatprep.subr.bf16.mxu0 %v353
    %415 = vmatpush1.bf16.msra.mxu0 %v352
    %416 = vmatprep.subr.bf16.mxu0 %v357
    %417 = vmatpush1.bf16.msra.mxu0 %v356
    %418 = vmatprep.subr.bf16.mxu0 %v361
    %419 = vmatpush1.bf16.msra.mxu0 %v360
    %420 = vmatprep.subr.bf16.mxu0 %v365
    %421 = vmatpush1.bf16.msra.mxu0 %v364
    %422 = vmatprep.subr.bf16.mxu0 %v369
    %423 = vmatpush1.bf16.msra.mxu0 %v368
    %424 = vmatprep.subr.bf16.mxu0 %v373
    %425 = vmatpush1.bf16.msra.mxu0 %v372
    %426 = vmatprep.subr.bf16.mxu0 %v377
    %427 = vmatpush1.bf16.msra.mxu0 %v376
    %428 = vmatprep.subr.bf16.mxu0 0
    %429 = vmatpush1.bf16.msra.mxu0 0
    %430 = vmatprep.subr.bf16.mxu0 0
    %431 = vmatpush1.bf16.msra.mxu0 0
    %432 = vmatprep.subr.bf16.mxu0 0
    %433 = vmatpush1.bf16.msra.mxu0 0
    %434 = vmatprep.subr.bf16.mxu0 0
    %435 = vmatpush1.bf16.msra.mxu0 0
    %436 = vmatprep.subr.bf16.mxu0 0
    %437 = vmatpush1.bf16.msra.mxu0 0
    %438 = vmatprep.subr.bf16.mxu0 0
    %439 = vmatpush1.bf16.msra.mxu0 0
    %440 = vmatprep.subr.bf16.mxu0 0
    %441 = vmatpush1.bf16.msra.mxu0 0
    %442 = vmatprep.subr.bf16.mxu0 0
    %443 = vmatpush1.bf16.msra.mxu0 0
    %444 = vmatprep.mubr.bf16.mxu0 0
    %445 = vmatmul.mubr.bf16.gmra.mrb[0].mxu0 %v197
    %v446 = vpop.f32.mrb[0].mxu0
    %v447 = vadd.f32 %v235, %v446
    %v448 = vpop.f32.mrb[0].mxu0
    %v449 = vadd.f32 %v239, %v448
    %v450 = vpop.f32.mrb[0].mxu0
    %v451 = vpop.f32.mrb[0].mxu0
    %452 = vdwg.mxu0
    %453 = vmatprep.subr.bf16.mxu0 %v351
    %454 = vmatpush1.bf16.msra.mxu0 %v350
    %455 = vmatprep.subr.bf16.mxu0 %v355
    %456 = vmatpush1.bf16.msra.mxu0 %v354
    %457 = vmatprep.subr.bf16.mxu0 %v359
    %458 = vmatpush1.bf16.msra.mxu0 %v358
    %459 = vmatprep.subr.bf16.mxu0 %v363
    %460 = vmatpush1.bf16.msra.mxu0 %v362
    %461 = vmatprep.subr.bf16.mxu0 %v367
    %462 = vmatpush1.bf16.msra.mxu0 %v366
    %463 = vmatprep.subr.bf16.mxu0 %v371
    %464 = vmatpush1.bf16.msra.mxu0 %v370
    %465 = vmatprep.subr.bf16.mxu0 %v375
    %466 = vmatpush1.bf16.msra.mxu0 %v374
    %467 = vmatprep.subr.bf16.mxu0 %v379
    %468 = vmatpush1.bf16.msra.mxu0 %v378
    %469 = vmatprep.subr.bf16.mxu0 0
    %470 = vmatpush1.bf16.msra.mxu0 0
    %471 = vmatprep.subr.bf16.mxu0 0
    %472 = vmatpush1.bf16.msra.mxu0 0
    %473 = vmatprep.subr.bf16.mxu0 0
    %474 = vmatpush1.bf16.msra.mxu0 0
    %475 = vmatprep.subr.bf16.mxu0 0
    %476 = vmatpush1.bf16.msra.mxu0 0
    %477 = vmatprep.subr.bf16.mxu0 0
    %478 = vmatpush1.bf16.msra.mxu0 0
    %479 = vmatprep.subr.bf16.mxu0 0
    %480 = vmatpush1.bf16.msra.mxu0 0
    %481 = vmatprep.subr.bf16.mxu0 0
    %482 = vmatpush1.bf16.msra.mxu0 0
    %483 = vmatprep.subr.bf16.mxu0 0
    %484 = vmatpush1.bf16.msra.mxu0 0
    %485 = vmatprep.mubr.bf16.mxu0 0
    %486 = vmatmul.mubr.bf16.gmra.mrb[0].mxu0 %v197
    %v487 = vpop.f32.mrb[0].mxu0
    %v488 = vadd.f32 %v243, %v487
    %v489 = vpop.f32.mrb[0].mxu0
    %v490 = vadd.f32 %v247, %v489
    %v491 = vpop.f32.mrb[0].mxu0
    %v492 = vpop.f32.mrb[0].mxu0
    %493 = vdwg.mxu0
    %v494 = vlaneseq
    %v495 = vand.u32 %v494, 127
    %v496 = vadd.s32 %v495, 128
    %v497 = vadd.s32 %v495, 256
    %v498 = vadd.s32 %v495, 384
    %vm499 = vcmp.lt.s32.totalorder %v495, 512
    %vm500 = vcmp.lt.s32.totalorder %v496, 512
    %vm501 = vcmp.lt.s32.totalorder %v497, 512
    %vm502 = vcmp.lt.s32.totalorder %v498, 512
    %v503 = vsel %vm499, %v447, -1e+30
    %v504 = vsel %vm500, %v449, -1e+30
    %v505 = vsel %vm501, %v488, -1e+30
    %v506 = vsel %vm502, %v490, -1e+30
    %v507 = vmax.f32 %v503, %v504
    %v508 = vmax.f32 %v505, %v506
    %v509 = vmax.f32 %v507, %v508
    %510 = vmax.xlane.f32.xlu0 %v509
    %v511 = vpop.xlane.xlu0 %510
    %v512 = vsub.f32 %v503, %v511
    %v513 = vsub.f32 %v504, %v511
    %v514 = vsub.f32 %v505, %v511
    %v515 = vsub.f32 %v506, %v511
    %v516 = vmul.f32 %v512, 1.442695
    %v517 = vpow.pop %v516
    %v518 = vmul.f32 %v513, 1.442695
    %v519 = vpow.pop %v518
    %v520 = vmul.f32 %v514, 1.442695
    %v521 = vpow.pop %v520
    %v522 = vmul.f32 %v515, 1.442695
    %v523 = vpow.pop %v522
    %v524 = vadd.f32 %v517, %v519
    %v525 = vadd.f32 %v524, %v521
    %v526 = vadd.f32 %v525, %v523
    %527 = vadd.xlane.f32.xlu0 %v526
    %v528 = vpop.xlane.xlu0 %527
    %v529 = vlog2.pop %v528
    %v530 = vmul.f32 %v529, 0.6931472
    %v531 = vsub.f32 %v512, %v530
    %v532 = vsub.f32 %v513, %v530
    %v533 = vsub.f32 %v514, %v530
    %v534 = vsub.f32 %v515, %v530
    %535 = vst [vmem:[#allocation11] sm:$0xff] %v531
    %536 = vst [vmem:[#allocation11 + $0x8] sm:$0xff] %v532
    %537 = vst [vmem:[#allocation11 + $0x10] sm:$0xff] %v533
    %538 = vst [vmem:[#allocation11 + $0x18] sm:$0xff] %v534
    // Predicated region
    $region42: #{lstm_reddit_forward.3} parent=1 // pred_check
      _
    $region43: #{lstm_reddit_forward.3} parent=1 // pred_check_branch
      %540 = sbr.rel (0) target = $region45
    $region44: #{lstm_reddit_forward.3} parent=1 // pred_region
      %s542 = ssub.s32 512, 512
      %543 = vsyncadd [#allocation4], %s542
      %s545 = sshll.u32 [#allocation11], 4
      %s546 = int_to_ptr.vmem [resolvable:$true] %s545
      %548 = dma.vmem_to_hbm [thread:$0]  %s546, 512, %s5, [#allocation4]
    $region45: #{lstm_reddit_forward.3} parent=1 // pred_fallthru
      _
    // Predicated region
    $region46: #{lstm_reddit_forward.3} parent=1 // pred_check
      _
    $region47: #{lstm_reddit_forward.3} parent=1 // pred_check_branch
      %550 = sbr.rel (0) target = $region49
    $region48: #{lstm_reddit_forward.3} parent=1 // pred_region
      %551 = dma.done [#allocation4], 512
    $region49: #{lstm_reddit_forward.3} parent=1 // pred_fallthru
      _
    %552 = vsyncpa [#allocation3], 1
    %553 = vsyncpa [#allocation6], 1
    %554 = vsyncpa [#allocation9], 1
    %555 = vsyncpa [#allocation4], 1

// kernel: lstm_reddit_forward.2
$region0: #{lstm_reddit_forward.2}
  #allocation0 [shape = 'u32[]', space=smem, size = 0x4, offset = 0x4, fixed_abs, tag = 'smem constant byte address 0x4 - core index']
  #allocation1 [shape = 'u32[144,128]{1,0:T(1,128)}', space=vmem, size = 0x12000, scoped, tag = 'internal scratch']
  #allocation2 [shape = 'f32[8,512]{1,0:T(8,128)}', space=vmem, size = 0x4000, scoped, tag = 'scratch operand']
  #allocation3 [shape = 'f32[8,128]{1,0:T(8,128)}', space=vmem, size = 0x1000, scoped, tag = 'scratch operand']
  %s0 = inlined_call_operand.hbm [shape: bf16[8,32], index: 0, kind: input, shape index: {}]
  %s1 = inlined_call_operand.hbm [shape: bf16[32,512], index: 1, kind: input, shape index: {}]
  %s2 = inlined_call_operand.hbm [shape: bf16[128,512], index: 2, kind: input, shape index: {}]
  %s3 = inlined_call_operand.hbm [shape: f32[1,512], index: 3, kind: input, shape index: {}]
  %s4 = inlined_call_operand.hbm [shape: f32[8,128], index: 4, kind: output, shape index: {}]
  %s5 = sld [smem:[#allocation0]]
  $region42: #{lstm_reddit_forward.2} parent=0
    _
  %s7 = ssub.s32 1, %s5
  %s8 = scalar_select 0, %s7, %s5
  $region1: #{lstm_reddit_forward.2} parent=0
    #allocation4 [shape = 'u8[2048]{0}', space=vmem, size = 0x800, scoped, tag = 'input window, operand 0, single buffered']
    #allocation5 [shape = 's32[1]{0}', space=sflag, size = 0x4, scoped, tag = 'scoped memory for lstm_reddit_forward.2']
    #allocation6 [shape = 's32[1]{0}', space=sflag, size = 0x4, scoped, tag = 'scoped memory for lstm_reddit_forward.2']
    #allocation7 [shape = 'u8[32768]{0}', space=vmem, size = 0x8000, scoped, tag = 'input window, operand 1, single buffered']
    #allocation8 [shape = 's32[1]{0}', space=sflag, size = 0x4, scoped, tag = 'scoped memory for lstm_reddit_forward.2']
    #allocation9 [shape = 'u8[131072]{0}', space=vmem, size = 0x20000, scoped, tag = 'input window, operand 2, single buffered']
    #allocation10 [shape = 'u8[2048]{0}', space=vmem, size = 0x800, scoped, tag = 'input window, operand 3, single buffered']
    #allocation11 [shape = 's32[1]{0}', space=sflag, size = 0x4, scoped, tag = 'scoped memory for lstm_reddit_forward.2']
    #allocation12 [shape = 'u8[4096]{0}', space=vmem, size = 0x1000, scoped, tag = 'output window, operand 0, single buffered']
    %9 = vsyncpa [#allocation5], 0
    %10 = vsyncpa [#allocation8], 0
    %11 = vsyncpa [#allocation11], 0
    %12 = vsyncpa [#allocation6], 0
    // Predicated region
    $region2: #{lstm_reddit_forward.2} parent=1 // pred_check
      _
    $region3: #{lstm_reddit_forward.2} parent=1 // pred_check_branch
      %14 = sbr.rel (0) target = $region5
    $region4: #{lstm_reddit_forward.2} parent=1 // pred_region
      %s16 = ssub.s32 64, 64
      %17 = vsyncadd [#allocation5], %s16
      %s19 = sshll.u32 [#allocation4], 4
      %s20 = int_to_ptr.vmem [resolvable:$true] %s19
      %22 = dma.hbm_to_vmem [thread:$0]  %s0, 64, %s20, [#allocation5]
    $region5: #{lstm_reddit_forward.2} parent=1 // pred_fallthru
      _
    // Predicated region
    $region6: #{lstm_reddit_forward.2} parent=1 // pred_check
      _
    $region7: #{lstm_reddit_forward.2} parent=1 // pred_check_branch
      %24 = sbr.rel (0) target = $region9
    $region8: #{lstm_reddit_forward.2} parent=1 // pred_region
      %s26 = ssub.s32 1024, 1024
      %27 = vsyncadd [#allocation8], %s26
      %s28 = sshll.u32 [#allocation7], 4
      %s29 = int_to_ptr.vmem [resolvable:$true] %s28
      %34 = dma.hbm_to_vmem [thread:$0]  %s1, 1024, %s29, [#allocation8], 256, 256, 16
    $region9: #{lstm_reddit_forward.2} parent=1 // pred_fallthru
      _
    // Predicated region
    $region10: #{lstm_reddit_forward.2} parent=1 // pred_check
      _
    $region11: #{lstm_reddit_forward.2} parent=1 // pred_check_branch
      %36 = sbr.rel (0) target = $region13
    $region12: #{lstm_reddit_forward.2} parent=1 // pred_region
      %s38 = ssub.s32 4096, 4096
      %39 = vsyncadd [#allocation8], %s38
      %s40 = sshll.u32 [#allocation9], 4
      %s41 = int_to_ptr.vmem [resolvable:$true] %s40
      %46 = dma.hbm_to_vmem [thread:$0]  %s2, 4096, %s41, [#allocation8], 256, 256, 16
    $region13: #{lstm_reddit_forward.2} parent=1 // pred_fallthru
      _
    // Predicated region
    $region14: #{lstm_reddit_forward.2} parent=1 // pred_check
      _
    $region15: #{lstm_reddit_forward.2} parent=1 // pred_check_branch
      %48 = sbr.rel (0) target = $region17
    $region16: #{lstm_reddit_forward.2} parent=1 // pred_region
      %s50 = ssub.s32 64, 64
      %51 = vsyncadd [#allocation11], %s50
      %s53 = sshll.u32 [#allocation10], 4
      %s54 = int_to_ptr.vmem [resolvable:$true] %s53
      %56 = dma.hbm_to_vmem [thread:$0]  %s3, 64, %s54, [#allocation11]
    $region17: #{lstm_reddit_forward.2} parent=1 // pred_fallthru
      _
    // Predicated region
    $region18: #{lstm_reddit_forward.2} parent=1 // pred_check
      _
    $region19: #{lstm_reddit_forward.2} parent=1 // pred_check_branch
      %58 = sbr.rel (0) target = $region21
    $region20: #{lstm_reddit_forward.2} parent=1 // pred_region
      %59 = dma.done [#allocation5], 64
    $region21: #{lstm_reddit_forward.2} parent=1 // pred_fallthru
      _
    // Predicated region
    $region22: #{lstm_reddit_forward.2} parent=1 // pred_check
      _
    $region23: #{lstm_reddit_forward.2} parent=1 // pred_check_branch
      %61 = sbr.rel (0) target = $region25
    $region24: #{lstm_reddit_forward.2} parent=1 // pred_region
      %62 = dma.done [#allocation8], 1024
    $region25: #{lstm_reddit_forward.2} parent=1 // pred_fallthru
      _
    // Predicated region
    $region26: #{lstm_reddit_forward.2} parent=1 // pred_check
      _
    $region27: #{lstm_reddit_forward.2} parent=1 // pred_check_branch
      %64 = sbr.rel (0) target = $region29
    $region28: #{lstm_reddit_forward.2} parent=1 // pred_region
      %65 = dma.done [#allocation8], 4096
    $region29: #{lstm_reddit_forward.2} parent=1 // pred_fallthru
      _
    // Predicated region
    $region30: #{lstm_reddit_forward.2} parent=1 // pred_check
      _
    $region31: #{lstm_reddit_forward.2} parent=1 // pred_check_branch
      %67 = sbr.rel (0) target = $region33
    $region32: #{lstm_reddit_forward.2} parent=1 // pred_region
      %68 = dma.done [#allocation11], 64
    $region33: #{lstm_reddit_forward.2} parent=1 // pred_fallthru
      _
    %v70 = vld [vmem:[#allocation4] sm:$0xf]
    %v71 = vld [vmem:[#allocation7] sm:$0xff]
    %v72 = vld [vmem:[#allocation7 + $0x8] sm:$0xff]
    %v73 = vld [vmem:[#allocation7 + $0x10] sm:$0xff]
    %v74 = vld [vmem:[#allocation7 + $0x18] sm:$0xff]
    %v75 = vld [vmem:[#allocation7 + $0x20] sm:$0xff]
    %v76 = vld [vmem:[#allocation7 + $0x28] sm:$0xff]
    %v77 = vld [vmem:[#allocation7 + $0x30] sm:$0xff]
    %v78 = vld [vmem:[#allocation7 + $0x38] sm:$0xff]
    %v79 = vld [vmem:[#allocation10] sm:$0xf]
    %v81 = vlaneseq
    %v82 = vshrl.u32 %v81, 7
    %v83 = vsub.s32 0, %v82
    %v84 = vrot.slane %v79, %v83
    %v85 = vlaneseq
    %v86 = vshrl.u32 %v85, 7
    %v87 = vsub.s32 1, %v86
    %v88 = vrot.slane %v79, %v87
    %v89 = vlaneseq
    %v90 = vshrl.u32 %v89, 7
    %v91 = vsub.s32 2, %v90
    %v92 = vrot.slane %v79, %v91
    %v93 = vlaneseq
    %v94 = vshrl.u32 %v93, 7
    %v95 = vsub.s32 3, %v94
    %v96 = vrot.slane %v79, %v95
    %v109 = vunpack.c.l.b16 %v71
    %v110 = vunpack.c.h.b16 %v71
    %v111 = vunpack.c.l.b16 %v72
    %v112 = vunpack.c.h.b16 %v72
    %v113 = vunpack.c.l.b16 %v73
    %v114 = vunpack.c.h.b16 %v73
    %v115 = vunpack.c.l.b16 %v74
    %v116 = vunpack.c.h.b16 %v74
    %v117 = vunpack.c.l.b16 %v75
    %v118 = vunpack.c.h.b16 %v75
    %v119 = vunpack.c.l.b16 %v76
    %v120 = vunpack.c.h.b16 %v76
    %v121 = vunpack.c.l.b16 %v77
    %v122 = vunpack.c.h.b16 %v77
    %v123 = vunpack.c.l.b16 %v78
    %v124 = vunpack.c.h.b16 %v78
    %v125 = vpack.c.b16 %v113, %v109
    %v126 = vpack.c.b16 %v114, %v110
    %v127 = vpack.c.b16 %v115, %v111
    %v128 = vpack.c.b16 %v116, %v112
    %v129 = vpack.c.b16 %v121, %v117
    %v130 = vpack.c.b16 %v122, %v118
    %v131 = vpack.c.b16 %v123, %v119
    %v132 = vpack.c.b16 %v124, %v120
    %vm141 = vcmask 261120
    %v143 = vsel %vm141, %v70, 0
    %145 = vmatprep.subr.bf16.mxu0 %v126
    %146 = vmatpush1.bf16.msra.mxu0 %v125
    %147 = vmatprep.subr.bf16.mxu0 %v130
    %148 = vmatpush1.bf16.msra.mxu0 %v129
    %149 = vmatprep.subr.bf16.mxu0 0
    %150 = vmatpush1.bf16.msra.mxu0 0
    %151 = vmatprep.subr.bf16.mxu0 0
    %152 = vmatpush1.bf16.msra.mxu0 0
    %153 = vmatprep.subr.bf16.mxu0 0
    %154 = vmatpush1.bf16.msra.mxu0 0
    %155 = vmatprep.subr.bf16.mxu0 0
    %156 = vmatpush1.bf16.msra.mxu0 0
    %157 = vmatprep.subr.bf16.mxu0 0
    %158 = vmatpush1.bf16.msra.mxu0 0
    %159 = vmatprep.subr.bf16.mxu0 0
    %160 = vmatpush1.bf16.msra.mxu0 0
    %161 = vmatprep.subr.bf16.mxu0 0
    %162 = vmatpush1.bf16.msra.mxu0 0
    %163 = vmatprep.subr.bf16.mxu0 0
    %164 = vmatpush1.bf16.msra.mxu0 0
    %165 = vmatprep.subr.bf16.mxu0 0
    %166 = vmatpush1.bf16.msra.mxu0 0
    %167 = vmatprep.subr.bf16.mxu0 0
    %168 = vmatpush1.bf16.msra.mxu0 0
    %169 = vmatprep.subr.bf16.mxu0 0
    %170 = vmatpush1.bf16.msra.mxu0 0
    %171 = vmatprep.subr.bf16.mxu0 0
    %172 = vmatpush1.bf16.msra.mxu0 0
    %173 = vmatprep.subr.bf16.mxu0 0
    %174 = vmatpush1.bf16.msra.mxu0 0
    %175 = vmatprep.subr.bf16.mxu0 0
    %176 = vmatpush1.bf16.msra.mxu0 0
    %177 = vmatprep.mubr.bf16.mxu0 0
    %178 = vmatmul.mubr.bf16.gmra.mrb[0].mxu0 %v143
    %v179 = vpop.f32.mrb[0].mxu0
    %v180 = vadd.f32 %v84, %v179
    %v181 = vpop.f32.mrb[0].mxu0
    %v182 = vadd.f32 %v88, %v181
    %v183 = vpop.f32.mrb[0].mxu0
    %v184 = vpop.f32.mrb[0].mxu0
    %185 = vdwg.mxu0
    %186 = vmatprep.subr.bf16.mxu0 %v128
    %187 = vmatpush1.bf16.msra.mxu0 %v127
    %188 = vmatprep.subr.bf16.mxu0 %v132
    %189 = vmatpush1.bf16.msra.mxu0 %v131
    %190 = vmatprep.subr.bf16.mxu0 0
    %191 = vmatpush1.bf16.msra.mxu0 0
    %192 = vmatprep.subr.bf16.mxu0 0
    %193 = vmatpush1.bf16.msra.mxu0 0
    %194 = vmatprep.subr.bf16.mxu0 0
    %195 = vmatpush1.bf16.msra.mxu0 0
    %196 = vmatprep.subr.bf16.mxu0 0
    %197 = vmatpush1.bf16.msra.mxu0 0
    %198 = vmatprep.subr.bf16.mxu0 0
    %199 = vmatpush1.bf16.msra.mxu0 0
    %200 = vmatprep.subr.bf16.mxu0 0
    %201 = vmatpush1.bf16.msra.mxu0 0
    %202 = vmatprep.subr.bf16.mxu0 0
    %203 = vmatpush1.bf16.msra.mxu0 0
    %204 = vmatprep.subr.bf16.mxu0 0
    %205 = vmatpush1.bf16.msra.mxu0 0
    %206 = vmatprep.subr.bf16.mxu0 0
    %207 = vmatpush1.bf16.msra.mxu0 0
    %208 = vmatprep.subr.bf16.mxu0 0
    %209 = vmatpush1.bf16.msra.mxu0 0
    %210 = vmatprep.subr.bf16.mxu0 0
    %211 = vmatpush1.bf16.msra.mxu0 0
    %212 = vmatprep.subr.bf16.mxu0 0
    %213 = vmatpush1.bf16.msra.mxu0 0
    %214 = vmatprep.subr.bf16.mxu0 0
    %215 = vmatpush1.bf16.msra.mxu0 0
    %216 = vmatprep.subr.bf16.mxu0 0
    %217 = vmatpush1.bf16.msra.mxu0 0
    %218 = vmatprep.mubr.bf16.mxu0 0
    %219 = vmatmul.mubr.bf16.gmra.mrb[0].mxu0 %v143
    %v220 = vpop.f32.mrb[0].mxu0
    %v221 = vadd.f32 %v92, %v220
    %v222 = vpop.f32.mrb[0].mxu0
    %v223 = vadd.f32 %v96, %v222
    %v224 = vpop.f32.mrb[0].mxu0
    %v225 = vpop.f32.mrb[0].mxu0
    %226 = vdwg.mxu0
    %227 = vst [vmem:[#allocation2] sm:$0xff] %v180
    %228 = vst [vmem:[#allocation2 + $0x8] sm:$0xff] %v182
    %229 = vst [vmem:[#allocation2 + $0x10] sm:$0xff] %v221
    %230 = vst [vmem:[#allocation2 + $0x18] sm:$0xff] %v223
    %v231 = vld [vmem:[#allocation2] ss:$8 sm:$0xf]
    %v232 = vld [vmem:[#allocation9] sm:$0xff]
    %v233 = vld [vmem:[#allocation9 + $0x8] sm:$0xff]
    %v234 = vld [vmem:[#allocation9 + $0x10] sm:$0xff]
    %v235 = vld [vmem:[#allocation9 + $0x18] sm:$0xff]
    %v236 = vld [vmem:[#allocation9 + $0x20] sm:$0xff]
    %v237 = vld [vmem:[#allocation9 + $0x28] sm:$0xff]
    %v238 = vld [vmem:[#allocation9 + $0x30] sm:$0xff]
    %v239 = vld [vmem:[#allocation9 + $0x38] sm:$0xff]
    %v240 = vld [vmem:[#allocation9 + $0x40] sm:$0xff]
    %v241 = vld [vmem:[#allocation9 + $0x48] sm:$0xff]
    %v242 = vld [vmem:[#allocation9 + $0x50] sm:$0xff]
    %v243 = vld [vmem:[#allocation9 + $0x58] sm:$0xff]
    %v244 = vld [vmem:[#allocation9 + $0x60] sm:$0xff]
    %v245 = vld [vmem:[#allocation9 + $0x68] sm:$0xff]
    %v246 = vld [vmem:[#allocation9 + $0x70] sm:$0xff]
    %v247 = vld [vmem:[#allocation9 + $0x78] sm:$0xff]
    %v248 = vld [vmem:[#allocation9 + $0x80] sm:$0xff]
    %v249 = vld [vmem:[#allocation9 + $0x88] sm:$0xff]
    %v250 = vld [vmem:[#allocation9 + $0x90] sm:$0xff]
    %v251 = vld [vmem:[#allocation9 + $0x98] sm:$0xff]
    %v252 = vld [vmem:[#allocation9 + $0xa0] sm:$0xff]
    %v253 = vld [vmem:[#allocation9 + $0xa8] sm:$0xff]
    %v254 = vld [vmem:[#allocation9 + $0xb0] sm:$0xff]
    %v255 = vld [vmem:[#allocation9 + $0xb8] sm:$0xff]
    %v256 = vld [vmem:[#allocation9 + $0xc0] sm:$0xff]
    %v257 = vld [vmem:[#allocation9 + $0xc8] sm:$0xff]
    %v258 = vld [vmem:[#allocation9 + $0xd0] sm:$0xff]
    %v259 = vld [vmem:[#allocation9 + $0xd8] sm:$0xff]
    %v260 = vld [vmem:[#allocation9 + $0xe0] sm:$0xff]
    %v261 = vld [vmem:[#allocation9 + $0xe8] sm:$0xff]
    %v262 = vld [vmem:[#allocation9 + $0xf0] sm:$0xff]
    %v263 = vld [vmem:[#allocation9 + $0xf8] sm:$0xff]
    %v296 = vunpack.c.l.b16 %v232
    %v297 = vunpack.c.h.b16 %v232
    %v298 = vunpack.c.l.b16 %v233
    %v299 = vunpack.c.h.b16 %v233
    %v300 = vunpack.c.l.b16 %v234
    %v301 = vunpack.c.h.b16 %v234
    %v302 = vunpack.c.l.b16 %v235
    %v303 = vunpack.c.h.b16 %v235
    %v304 = vunpack.c.l.b16 %v236
    %v305 = vunpack.c.h.b16 %v236
    %v306 = vunpack.c.l.b16 %v237
    %v307 = vunpack.c.h.b16 %v237
    %v308 = vunpack.c.l.b16 %v238
    %v309 = vunpack.c.h.b16 %v238
    %v310 = vunpack.c.l.b16 %v239
    %v311 = vunpack.c.h.b16 %v239
    %v312 = vunpack.c.l.b16 %v240
    %v313 = vunpack.c.h.b16 %v240
    %v314 = vunpack.c.l.b16 %v241
    %v315 = vunpack.c.h.b16 %v241
    %v316 = vunpack.c.l.b16 %v242
    %v317 = vunpack.c.h.b16 %v242
    %v318 = vunpack.c.l.b16 %v243
    %v319 = vunpack.c.h.b16 %v243
    %v320 = vunpack.c.l.b16 %v244
    %v321 = vunpack.c.h.b16 %v244
    %v322 = vunpack.c.l.b16 %v245
    %v323 = vunpack.c.h.b16 %v245
    %v324 = vunpack.c.l.b16 %v246
    %v325 = vunpack.c.h.b16 %v246
    %v326 = vunpack.c.l.b16 %v247
    %v327 = vunpack.c.h.b16 %v247
    %v328 = vunpack.c.l.b16 %v248
    %v329 = vunpack.c.h.b16 %v248
    %v330 = vunpack.c.l.b16 %v249
    %v331 = vunpack.c.h.b16 %v249
    %v332 = vunpack.c.l.b16 %v250
    %v333 = vunpack.c.h.b16 %v250
    %v334 = vunpack.c.l.b16 %v251
    %v335 = vunpack.c.h.b16 %v251
    %v336 = vunpack.c.l.b16 %v252
    %v337 = vunpack.c.h.b16 %v252
    %v338 = vunpack.c.l.b16 %v253
    %v339 = vunpack.c.h.b16 %v253
    %v340 = vunpack.c.l.b16 %v254
    %v341 = vunpack.c.h.b16 %v254
    %v342 = vunpack.c.l.b16 %v255
    %v343 = vunpack.c.h.b16 %v255
    %v344 = vunpack.c.l.b16 %v256
    %v345 = vunpack.c.h.b16 %v256
    %v346 = vunpack.c.l.b16 %v257
    %v347 = vunpack.c.h.b16 %v257
    %v348 = vunpack.c.l.b16 %v258
    %v349 = vunpack.c.h.b16 %v258
    %v350 = vunpack.c.l.b16 %v259
    %v351 = vunpack.c.h.b16 %v259
    %v352 = vunpack.c.l.b16 %v260
    %v353 = vunpack.c.h.b16 %v260
    %v354 = vunpack.c.l.b16 %v261
    %v355 = vunpack.c.h.b16 %v261
    %v356 = vunpack.c.l.b16 %v262
    %v357 = vunpack.c.h.b16 %v262
    %v358 = vunpack.c.l.b16 %v263
    %v359 = vunpack.c.h.b16 %v263
    %v360 = vpack.c.b16 %v300, %v296
    %v361 = vpack.c.b16 %v301, %v297
    %v362 = vpack.c.b16 %v302, %v298
    %v363 = vpack.c.b16 %v303, %v299
    %v364 = vpack.c.b16 %v308, %v304
    %v365 = vpack.c.b16 %v309, %v305
    %v366 = vpack.c.b16 %v310, %v306
    %v367 = vpack.c.b16 %v311, %v307
    %v368 = vpack.c.b16 %v316, %v312
    %v369 = vpack.c.b16 %v317, %v313
    %v370 = vpack.c.b16 %v318, %v314
    %v371 = vpack.c.b16 %v319, %v315
    %v372 = vpack.c.b16 %v324, %v320
    %v373 = vpack.c.b16 %v325, %v321
    %v374 = vpack.c.b16 %v326, %v322
    %v375 = vpack.c.b16 %v327, %v323
    %v376 = vpack.c.b16 %v332, %v328
    %v377 = vpack.c.b16 %v333, %v329
    %v378 = vpack.c.b16 %v334, %v330
    %v379 = vpack.c.b16 %v335, %v331
    %v380 = vpack.c.b16 %v340, %v336
    %v381 = vpack.c.b16 %v341, %v337
    %v382 = vpack.c.b16 %v342, %v338
    %v383 = vpack.c.b16 %v343, %v339
    %v384 = vpack.c.b16 %v348, %v344
    %v385 = vpack.c.b16 %v349, %v345
    %v386 = vpack.c.b16 %v350, %v346
    %v387 = vpack.c.b16 %v351, %v347
    %v388 = vpack.c.b16 %v356, %v352
    %v389 = vpack.c.b16 %v357, %v353
    %v390 = vpack.c.b16 %v358, %v354
    %v391 = vpack.c.b16 %v359, %v355
    %424 = vmatprep.subr.bf16.mxu0 %v361
    %425 = vmatpush1.bf16.msra.mxu0 %v360
    %426 = vmatprep.subr.bf16.mxu0 %v365
    %427 = vmatpush1.bf16.msra.mxu0 %v364
    %428 = vmatprep.subr.bf16.mxu0 %v369
    %429 = vmatpush1.bf16.msra.mxu0 %v368
    %430 = vmatprep.subr.bf16.mxu0 %v373
    %431 = vmatpush1.bf16.msra.mxu0 %v372
    %432 = vmatprep.subr.bf16.mxu0 %v377
    %433 = vmatpush1.bf16.msra.mxu0 %v376
    %434 = vmatprep.subr.bf16.mxu0 %v381
    %435 = vmatpush1.bf16.msra.mxu0 %v380
    %436 = vmatprep.subr.bf16.mxu0 %v385
    %437 = vmatpush1.bf16.msra.mxu0 %v384
    %438 = vmatprep.subr.bf16.mxu0 %v389
    %439 = vmatpush1.bf16.msra.mxu0 %v388
    %440 = vmatprep.subr.bf16.mxu0 0
    %441 = vmatpush1.bf16.msra.mxu0 0
    %442 = vmatprep.subr.bf16.mxu0 0
    %443 = vmatpush1.bf16.msra.mxu0 0
    %444 = vmatprep.subr.bf16.mxu0 0
    %445 = vmatpush1.bf16.msra.mxu0 0
    %446 = vmatprep.subr.bf16.mxu0 0
    %447 = vmatpush1.bf16.msra.mxu0 0
    %448 = vmatprep.subr.bf16.mxu0 0
    %449 = vmatpush1.bf16.msra.mxu0 0
    %450 = vmatprep.subr.bf16.mxu0 0
    %451 = vmatpush1.bf16.msra.mxu0 0
    %452 = vmatprep.subr.bf16.mxu0 0
    %453 = vmatpush1.bf16.msra.mxu0 0
    %454 = vmatprep.subr.bf16.mxu0 0
    %455 = vmatpush1.bf16.msra.mxu0 0
    %456 = vmatprep.mubr.bf16.mxu0 0
    %457 = vmatmul.mubr.bf16.gmra.mrb[0].mxu0 0
    %v458 = vpop.f32.mrb[0].mxu0
    %v459 = vadd.f32 0.0, %v458
    %v460 = vpop.f32.mrb[0].mxu0
    %v461 = vadd.f32 0.0, %v460
    %v462 = vpop.f32.mrb[0].mxu0
    %v463 = vpop.f32.mrb[0].mxu0
    %464 = vdwg.mxu0
    %465 = vmatprep.subr.bf16.mxu0 %v363
    %466 = vmatpush1.bf16.msra.mxu0 %v362
    %467 = vmatprep.subr.bf16.mxu0 %v367
    %468 = vmatpush1.bf16.msra.mxu0 %v366
    %469 = vmatprep.subr.bf16.mxu0 %v371
    %470 = vmatpush1.bf16.msra.mxu0 %v370
    %471 = vmatprep.subr.bf16.mxu0 %v375
    %472 = vmatpush1.bf16.msra.mxu0 %v374
    %473 = vmatprep.subr.bf16.mxu0 %v379
    %474 = vmatpush1.bf16.msra.mxu0 %v378
    %475 = vmatprep.subr.bf16.mxu0 %v383
    %476 = vmatpush1.bf16.msra.mxu0 %v382
    %477 = vmatprep.subr.bf16.mxu0 %v387
    %478 = vmatpush1.bf16.msra.mxu0 %v386
    %479 = vmatprep.subr.bf16.mxu0 %v391
    %480 = vmatpush1.bf16.msra.mxu0 %v390
    %481 = vmatprep.subr.bf16.mxu0 0
    %482 = vmatpush1.bf16.msra.mxu0 0
    %483 = vmatprep.subr.bf16.mxu0 0
    %484 = vmatpush1.bf16.msra.mxu0 0
    %485 = vmatprep.subr.bf16.mxu0 0
    %486 = vmatpush1.bf16.msra.mxu0 0
    %487 = vmatprep.subr.bf16.mxu0 0
    %488 = vmatpush1.bf16.msra.mxu0 0
    %489 = vmatprep.subr.bf16.mxu0 0
    %490 = vmatpush1.bf16.msra.mxu0 0
    %491 = vmatprep.subr.bf16.mxu0 0
    %492 = vmatpush1.bf16.msra.mxu0 0
    %493 = vmatprep.subr.bf16.mxu0 0
    %494 = vmatpush1.bf16.msra.mxu0 0
    %495 = vmatprep.subr.bf16.mxu0 0
    %496 = vmatpush1.bf16.msra.mxu0 0
    %497 = vmatprep.mubr.bf16.mxu0 0
    %498 = vmatmul.mubr.bf16.gmra.mrb[0].mxu0 0
    %v499 = vpop.f32.mrb[0].mxu0
    %v500 = vadd.f32 0.0, %v499
    %v501 = vpop.f32.mrb[0].mxu0
    %v502 = vadd.f32 0.0, %v501
    %v503 = vpop.f32.mrb[0].mxu0
    %v504 = vpop.f32.mrb[0].mxu0
    %505 = vdwg.mxu0
    %v510 = vcombine.low %v459, %v461
    %v511 = vcombine.low %v500, %v502
    %v513 = vunpack.c.l.s4 1966171168
    %v514 = vunpack.c.0.s8 %v513
    %v515 = vlaneseq
    %v516 = vshrl.u32 %v515, 7
    %v517 = vsub.s32 %v514, %v516
    %v518 = vrot.slane %v510, %v517
    %v520 = vunpack.c.l.s4 1966171168
    %v521 = vunpack.c.0.s8 %v520
    %v522 = vlaneseq
    %v523 = vshrl.u32 %v522, 7
    %v524 = vsub.s32 %v521, %v523
    %v525 = vrot.slane %v511, %v524
    %v526 = vcombine.low %v518, %v525
    %v528 = vunpack.c.l.s4 1966171168
    %v529 = vunpack.c.0.s8 %v528
    %v530 = vlaneseq
    %v531 = vshrl.u32 %v530, 7
    %v532 = vsub.s32 %v529, %v531
    %v533 = vrot.slane %v526, %v532
    %v535 = vadd.f32 %v231, %v533
    %v536 = vxor.u32 %v535, 2147483648
    %v537 = vmul.f32 %v536, 1.442695
    %v538 = vpow.pop %v537
    %v539 = vadd.f32 %v538, 1.0
    %v540 = vrcp.pop %v539
    %v541 = vmul.f32 1.0, %v540
    %v543 = vrot.slane %v535, 1
    %v545 = vxor.u32 %v543, 2147483648
    %v546 = vmul.f32 %v545, 1.442695
    %v547 = vpow.pop %v546
    %v548 = vadd.f32 %v547, 1.0
    %v549 = vrcp.pop %v548
    %v550 = vmul.f32 1.0, %v549
    %v551 = vrot.slane %v535, 2
    %v553 = vtanh.pop %v551
    %v554 = vrot.slane %v535, 3
    %v556 = vxor.u32 %v554, 2147483648
    %v557 = vmul.f32 %v556, 1.442695
    %v558 = vpow.pop %v557
    %v559 = vadd.f32 %v558, 1.0
    %v560 = vrcp.pop %v559
    %v561 = vmul.f32 1.0, %v560
    %v562 = vmul.f32 %v550, 0.0
    %v563 = vmul.f32 %v541, %v553
    %v564 = vadd.f32 %v562, %v563
    %v565 = vtanh.pop %v564
    %v566 = vmul.f32 %v561, %v565
    %567 = vst [vmem:[#allocation3] sm:$0x1] %v566
    %s568 = scalar_lea.vmem [#allocation2], 1
    %v569 = vld [vmem:[%s568] ss:$8 sm:$0xf]
    %v570 = vpack.c.bf16 %v566, %v566
    %v571 = vld [vmem:[#allocation9] sm:$0xff]
    %v572 = vld [vmem:[#allocation9 + $0x8] sm:$0xff]
    %v573 = vld [vmem:[#allocation9 + $0x10] sm:$0xff]
    %v574 = vld [vmem:[#allocation9 + $0x18] sm:$0xff]
    %v575 = vld [vmem:[#allocation9 + $0x20] sm:$0xff]
    %v576 = vld [vmem:[#allocation9 + $0x28] sm:$0xff]
    %v577 = vld [vmem:[#allocation9 + $0x30] sm:$0xff]
    %v578 = vld [vmem:[#allocation9 + $0x38] sm:$0xff]
    %v579 = vld [vmem:[#allocation9 + $0x40] sm:$0xff]
    %v580 = vld [vmem:[#allocation9 + $0x48] sm:$0xff]
    %v581 = vld [vmem:[#allocation9 + $0x50] sm:$0xff]
    %v582 = vld [vmem:[#allocation9 + $0x58] sm:$0xff]
    %v583 = vld [vmem:[#allocation9 + $0x60] sm:$0xff]
    %v584 = vld [vmem:[#allocation9 + $0x68] sm:$0xff]
    %v585 = vld [vmem:[#allocation9 + $0x70] sm:$0xff]
    %v586 = vld [vmem:[#allocation9 + $0x78] sm:$0xff]
    %v587 = vld [vmem:[#allocation9 + $0x80] sm:$0xff]
    %v588 = vld [vmem:[#allocation9 + $0x88] sm:$0xff]
    %v589 = vld [vmem:[#allocation9 + $0x90] sm:$0xff]
    %v590 = vld [vmem:[#allocation9 + $0x98] sm:$0xff]
    %v591 = vld [vmem:[#allocation9 + $0xa0] sm:$0xff]
    %v592 = vld [vmem:[#allocation9 + $0xa8] sm:$0xff]
    %v593 = vld [vmem:[#allocation9 + $0xb0] sm:$0xff]
    %v594 = vld [vmem:[#allocation9 + $0xb8] sm:$0xff]
    %v595 = vld [vmem:[#allocation9 + $0xc0] sm:$0xff]
    %v596 = vld [vmem:[#allocation9 + $0xc8] sm:$0xff]
    %v597 = vld [vmem:[#allocation9 + $0xd0] sm:$0xff]
    %v598 = vld [vmem:[#allocation9 + $0xd8] sm:$0xff]
    %v599 = vld [vmem:[#allocation9 + $0xe0] sm:$0xff]
    %v600 = vld [vmem:[#allocation9 + $0xe8] sm:$0xff]
    %v601 = vld [vmem:[#allocation9 + $0xf0] sm:$0xff]
    %v602 = vld [vmem:[#allocation9 + $0xf8] sm:$0xff]
    %v635 = vunpack.c.l.b16 %v571
    %v636 = vunpack.c.h.b16 %v571
    %v637 = vunpack.c.l.b16 %v572
    %v638 = vunpack.c.h.b16 %v572
    %v639 = vunpack.c.l.b16 %v573
    %v640 = vunpack.c.h.b16 %v573
    %v641 = vunpack.c.l.b16 %v574
    %v642 = vunpack.c.h.b16 %v574
    %v643 = vunpack.c.l.b16 %v575
    %v644 = vunpack.c.h.b16 %v575
    %v645 = vunpack.c.l.b16 %v576
    %v646 = vunpack.c.h.b16 %v576
    %v647 = vunpack.c.l.b16 %v577
    %v648 = vunpack.c.h.b16 %v577
    %v649 = vunpack.c.l.b16 %v578
    %v650 = vunpack.c.h.b16 %v578
    %v651 = vunpack.c.l.b16 %v579
    %v652 = vunpack.c.h.b16 %v579
    %v653 = vunpack.c.l.b16 %v580
    %v654 = vunpack.c.h.b16 %v580
    %v655 = vunpack.c.l.b16 %v581
    %v656 = vunpack.c.h.b16 %v581
    %v657 = vunpack.c.l.b16 %v582
    %v658 = vunpack.c.h.b16 %v582
    %v659 = vunpack.c.l.b16 %v583
    %v660 = vunpack.c.h.b16 %v583
    %v661 = vunpack.c.l.b16 %v584
    %v662 = vunpack.c.h.b16 %v584
    %v663 = vunpack.c.l.b16 %v585
    %v664 = vunpack.c.h.b16 %v585
    %v665 = vunpack.c.l.b16 %v586
    %v666 = vunpack.c.h.b16 %v586
    %v667 = vunpack.c.l.b16 %v587
    %v668 = vunpack.c.h.b16 %v587
    %v669 = vunpack.c.l.b16 %v588
    %v670 = vunpack.c.h.b16 %v588
    %v671 = vunpack.c.l.b16 %v589
    %v672 = vunpack.c.h.b16 %v589
    %v673 = vunpack.c.l.b16 %v590
    %v674 = vunpack.c.h.b16 %v590
    %v675 = vunpack.c.l.b16 %v591
    %v676 = vunpack.c.h.b16 %v591
    %v677 = vunpack.c.l.b16 %v592
    %v678 = vunpack.c.h.b16 %v592
    %v679 = vunpack.c.l.b16 %v593
    %v680 = vunpack.c.h.b16 %v593
    %v681 = vunpack.c.l.b16 %v594
    %v682 = vunpack.c.h.b16 %v594
    %v683 = vunpack.c.l.b16 %v595
    %v684 = vunpack.c.h.b16 %v595
    %v685 = vunpack.c.l.b16 %v596
    %v686 = vunpack.c.h.b16 %v596
    %v687 = vunpack.c.l.b16 %v597
    %v688 = vunpack.c.h.b16 %v597
    %v689 = vunpack.c.l.b16 %v598
    %v690 = vunpack.c.h.b16 %v598
    %v691 = vunpack.c.l.b16 %v599
    %v692 = vunpack.c.h.b16 %v599
    %v693 = vunpack.c.l.b16 %v600
    %v694 = vunpack.c.h.b16 %v600
    %v695 = vunpack.c.l.b16 %v601
    %v696 = vunpack.c.h.b16 %v601
    %v697 = vunpack.c.l.b16 %v602
    %v698 = vunpack.c.h.b16 %v602
    %v699 = vpack.c.b16 %v639, %v635
    %v700 = vpack.c.b16 %v640, %v636
    %v701 = vpack.c.b16 %v641, %v637
    %v702 = vpack.c.b16 %v642, %v638
    %v703 = vpack.c.b16 %v647, %v643
    %v704 = vpack.c.b16 %v648, %v644
    %v705 = vpack.c.b16 %v649, %v645
    %v706 = vpack.c.b16 %v650, %v646
    %v707 = vpack.c.b16 %v655, %v651
    %v708 = vpack.c.b16 %v656, %v652
    %v709 = vpack.c.b16 %v657, %v653
    %v710 = vpack.c.b16 %v658, %v654
    %v711 = vpack.c.b16 %v663, %v659
    %v712 = vpack.c.b16 %v664, %v660
    %v713 = vpack.c.b16 %v665, %v661
    %v714 = vpack.c.b16 %v666, %v662
    %v715 = vpack.c.b16 %v671, %v667
    %v716 = vpack.c.b16 %v672, %v668
    %v717 = vpack.c.b16 %v673, %v669
    %v718 = vpack.c.b16 %v674, %v670
    %v719 = vpack.c.b16 %v679, %v675
    %v720 = vpack.c.b16 %v680, %v676
    %v721 = vpack.c.b16 %v681, %v677
    %v722 = vpack.c.b16 %v682, %v678
    %v723 = vpack.c.b16 %v687, %v683
    %v724 = vpack.c.b16 %v688, %v684
    %v725 = vpack.c.b16 %v689, %v685
    %v726 = vpack.c.b16 %v690, %v686
    %v727 = vpack.c.b16 %v695, %v691
    %v728 = vpack.c.b16 %v696, %v692
    %v729 = vpack.c.b16 %v697, %v693
    %v730 = vpack.c.b16 %v698, %v694
    %763 = vmatprep.subr.bf16.mxu0 %v700
    %764 = vmatpush1.bf16.msra.mxu0 %v699
    %765 = vmatprep.subr.bf16.mxu0 %v704
    %766 = vmatpush1.bf16.msra.mxu0 %v703
    %767 = vmatprep.subr.bf16.mxu0 %v708
    %768 = vmatpush1.bf16.msra.mxu0 %v707
    %769 = vmatprep.subr.bf16.mxu0 %v712
    %770 = vmatpush1.bf16.msra.mxu0 %v711
    %771 = vmatprep.subr.bf16.mxu0 %v716
    %772 = vmatpush1.bf16.msra.mxu0 %v715
    %773 = vmatprep.subr.bf16.mxu0 %v720
    %774 = vmatpush1.bf16.msra.mxu0 %v719
    %775 = vmatprep.subr.bf16.mxu0 %v724
    %776 = vmatpush1.bf16.msra.mxu0 %v723
    %777 = vmatprep.subr.bf16.mxu0 %v728
    %778 = vmatpush1.bf16.msra.mxu0 %v727
    %779 = vmatprep.subr.bf16.mxu0 0
    %780 = vmatpush1.bf16.msra.mxu0 0
    %781 = vmatprep.subr.bf16.mxu0 0
    %782 = vmatpush1.bf16.msra.mxu0 0
    %783 = vmatprep.subr.bf16.mxu0 0
    %784 = vmatpush1.bf16.msra.mxu0 0
    %785 = vmatprep.subr.bf16.mxu0 0
    %786 = vmatpush1.bf16.msra.mxu0 0
    %787 = vmatprep.subr.bf16.mxu0 0
    %788 = vmatpush1.bf16.msra.mxu0 0
    %789 = vmatprep.subr.bf16.mxu0 0
    %790 = vmatpush1.bf16.msra.mxu0 0
    %791 = vmatprep.subr.bf16.mxu0 0
    %792 = vmatpush1.bf16.msra.mxu0 0
    %793 = vmatprep.subr.bf16.mxu0 0
    %794 = vmatpush1.bf16.msra.mxu0 0
    %795 = vmatprep.mubr.bf16.mxu0 0
    %796 = vmatmul.mubr.bf16.gmra.mrb[0].mxu0 %v570
    %v797 = vpop.f32.mrb[0].mxu0
    %v798 = vadd.f32 0.0, %v797
    %v799 = vpop.f32.mrb[0].mxu0
    %v800 = vadd.f32 0.0, %v799
    %v801 = vpop.f32.mrb[0].mxu0
    %v802 = vpop.f32.mrb[0].mxu0
    %803 = vdwg.mxu0
    %804 = vmatprep.subr.bf16.mxu0 %v702
    %805 = vmatpush1.bf16.msra.mxu0 %v701
    %806 = vmatprep.subr.bf16.mxu0 %v706
    %807 = vmatpush1.bf16.msra.mxu0 %v705
    %808 = vmatprep.subr.bf16.mxu0 %v710
    %809 = vmatpush1.bf16.msra.mxu0 %v709
    %810 = vmatprep.subr.bf16.mxu0 %v714
    %811 = vmatpush1.bf16.msra.mxu0 %v713
    %812 = vmatprep.subr.bf16.mxu0 %v718
    %813 = vmatpush1.bf16.msra.mxu0 %v717
    %814 = vmatprep.subr.bf16.mxu0 %v722
    %815 = vmatpush1.bf16.msra.mxu0 %v721
    %816 = vmatprep.subr.bf16.mxu0 %v726
    %817 = vmatpush1.bf16.msra.mxu0 %v725
    %818 = vmatprep.subr.bf16.mxu0 %v730
    %819 = vmatpush1.bf16.msra.mxu0 %v729
    %820 = vmatprep.subr.bf16.mxu0 0
    %821 = vmatpush1.bf16.msra.mxu0 0
    %822 = vmatprep.subr.bf16.mxu0 0
    %823 = vmatpush1.bf16.msra.mxu0 0
    %824 = vmatprep.subr.bf16.mxu0 0
    %825 = vmatpush1.bf16.msra.mxu0 0
    %826 = vmatprep.subr.bf16.mxu0 0
    %827 = vmatpush1.bf16.msra.mxu0 0
    %828 = vmatprep.subr.bf16.mxu0 0
    %829 = vmatpush1.bf16.msra.mxu0 0
    %830 = vmatprep.subr.bf16.mxu0 0
    %831 = vmatpush1.bf16.msra.mxu0 0
    %832 = vmatprep.subr.bf16.mxu0 0
    %833 = vmatpush1.bf16.msra.mxu0 0
    %834 = vmatprep.subr.bf16.mxu0 0
    %835 = vmatpush1.bf16.msra.mxu0 0
    %836 = vmatprep.mubr.bf16.mxu0 0
    %837 = vmatmul.mubr.bf16.gmra.mrb[0].mxu0 %v570
    %v838 = vpop.f32.mrb[0].mxu0
    %v839 = vadd.f32 0.0, %v838
    %v840 = vpop.f32.mrb[0].mxu0
    %v841 = vadd.f32 0.0, %v840
    %v842 = vpop.f32.mrb[0].mxu0
    %v843 = vpop.f32.mrb[0].mxu0
    %844 = vdwg.mxu0
    %v849 = vcombine.low %v798, %v800
    %v850 = vcombine.low %v839, %v841
    %v852 = vunpack.c.l.s4 1966171168
    %v853 = vunpack.c.0.s8 %v852
    %v854 = vlaneseq
    %v855 = vshrl.u32 %v854, 7
    %v856 = vsub.s32 %v853, %v855
    %v857 = vrot.slane %v849, %v856
    %v859 = vunpack.c.l.s4 1966171168
    %v860 = vunpack.c.0.s8 %v859
    %v861 = vlaneseq
    %v862 = vshrl.u32 %v861, 7
    %v863 = vsub.s32 %v860, %v862
    %v864 = vrot.slane %v850, %v863
    %v865 = vcombine.low %v857, %v864
    %v867 = vunpack.c.l.s4 1966171168
    %v868 = vunpack.c.0.s8 %v867
    %v869 = vlaneseq
    %v870 = vshrl.u32 %v869, 7
    %v871 = vsub.s32 %v868, %v870
    %v872 = vrot.slane %v865, %v871
    %v874 = vadd.f32 %v569, %v872
    %v875 = vxor.u32 %v874, 2147483648
    %v876 = vmul.f32 %v875, 1.442695
    %v877 = vpow.pop %v876
    %v878 = vadd.f32 %v877, 1.0
    %v879 = vrcp.pop %v878
    %v880 = vmul.f32 1.0, %v879
    %v882 = vrot.slane %v874, 1
    %v884 = vxor.u32 %v882, 2147483648
    %v885 = vmul.f32 %v884, 1.442695
    %v886 = vpow.pop %v885
    %v887 = vadd.f32 %v886, 1.0
    %v888 = vrcp.pop %v887
    %v889 = vmul.f32 1.0, %v888
    %v890 = vrot.slane %v874, 2
    %v892 = vtanh.pop %v890
    %v893 = vrot.slane %v874, 3
    %v895 = vxor.u32 %v893, 2147483648
    %v896 = vmul.f32 %v895, 1.442695
    %v897 = vpow.pop %v896
    %v898 = vadd.f32 %v897, 1.0
    %v899 = vrcp.pop %v898
    %v900 = vmul.f32 1.0, %v899
    %v901 = vmul.f32 %v889, %v564
    %v902 = vmul.f32 %v880, %v892
    %v903 = vadd.f32 %v901, %v902
    %v904 = vtanh.pop %v903
    %v905 = vmul.f32 %v900, %v904
    %906 = vst [vmem:[#allocation3 + $0x1] sm:$0x1] %v905
    %s907 = scalar_lea.vmem [#allocation2], 2
    %v908 = vld [vmem:[%s907] ss:$8 sm:$0xf]
    %v909 = vpack.c.bf16 %v905, %v905
    %v910 = vld [vmem:[#allocation9] sm:$0xff]
    %v911 = vld [vmem:[#allocation9 + $0x8] sm:$0xff]
    %v912 = vld [vmem:[#allocation9 + $0x10] sm:$0xff]
    %v913 = vld [vmem:[#allocation9 + $0x18] sm:$0xff]
    %v914 = vld [vmem:[#allocation9 + $0x20] sm:$0xff]
    %v915 = vld [vmem:[#allocation9 + $0x28] sm:$0xff]
    %v916 = vld [vmem:[#allocation9 + $0x30] sm:$0xff]
    %v917 = vld [vmem:[#allocation9 + $0x38] sm:$0xff]
    %v918 = vld [vmem:[#allocation9 + $0x40] sm:$0xff]
    %v919 = vld [vmem:[#allocation9 + $0x48] sm:$0xff]
    %v920 = vld [vmem:[#allocation9 + $0x50] sm:$0xff]
    %v921 = vld [vmem:[#allocation9 + $0x58] sm:$0xff]
    %v922 = vld [vmem:[#allocation9 + $0x60] sm:$0xff]
    %v923 = vld [vmem:[#allocation9 + $0x68] sm:$0xff]
    %v924 = vld [vmem:[#allocation9 + $0x70] sm:$0xff]
    %v925 = vld [vmem:[#allocation9 + $0x78] sm:$0xff]
    %v926 = vld [vmem:[#allocation9 + $0x80] sm:$0xff]
    %v927 = vld [vmem:[#allocation9 + $0x88] sm:$0xff]
    %v928 = vld [vmem:[#allocation9 + $0x90] sm:$0xff]
    %v929 = vld [vmem:[#allocation9 + $0x98] sm:$0xff]
    %v930 = vld [vmem:[#allocation9 + $0xa0] sm:$0xff]
    %v931 = vld [vmem:[#allocation9 + $0xa8] sm:$0xff]
    %v932 = vld [vmem:[#allocation9 + $0xb0] sm:$0xff]
    %v933 = vld [vmem:[#allocation9 + $0xb8] sm:$0xff]
    %v934 = vld [vmem:[#allocation9 + $0xc0] sm:$0xff]
    %v935 = vld [vmem:[#allocation9 + $0xc8] sm:$0xff]
    %v936 = vld [vmem:[#allocation9 + $0xd0] sm:$0xff]
    %v937 = vld [vmem:[#allocation9 + $0xd8] sm:$0xff]
    %v938 = vld [vmem:[#allocation9 + $0xe0] sm:$0xff]
    %v939 = vld [vmem:[#allocation9 + $0xe8] sm:$0xff]
    %v940 = vld [vmem:[#allocation9 + $0xf0] sm:$0xff]
    %v941 = vld [vmem:[#allocation9 + $0xf8] sm:$0xff]
    %v974 = vunpack.c.l.b16 %v910
    %v975 = vunpack.c.h.b16 %v910
    %v976 = vunpack.c.l.b16 %v911
    %v977 = vunpack.c.h.b16 %v911
    %v978 = vunpack.c.l.b16 %v912
    %v979 = vunpack.c.h.b16 %v912
    %v980 = vunpack.c.l.b16 %v913
    %v981 = vunpack.c.h.b16 %v913
    %v982 = vunpack.c.l.b16 %v914
    %v983 = vunpack.c.h.b16 %v914
    %v984 = vunpack.c.l.b16 %v915
    %v985 = vunpack.c.h.b16 %v915
    %v986 = vunpack.c.l.b16 %v916
    %v987 = vunpack.c.h.b16 %v916
    %v988 = vunpack.c.l.b16 %v917
    %v989 = vunpack.c.h.b16 %v917
    %v990 = vunpack.c.l.b16 %v918
    %v991 = vunpack.c.h.b16 %v918
    %v992 = vunpack.c.l.b16 %v919
    %v993 = vunpack.c.h.b16 %v919
    %v994 = vunpack.c.l.b16 %v920
    %v995 = vunpack.c.h.b16 %v920
    %v996 = vunpack.c.l.b16 %v921
    %v997 = vunpack.c.h.b16 %v921
    %v998 = vunpack.c.l.b16 %v922
    %v999 = vunpack.c.h.b16 %v922
    %v1000 = vunpack.c.l.b16 %v923
    %v1001 = vunpack.c.h.b16 %v923
    %v1002 = vunpack.c.l.b16 %v924
    %v1003 = vunpack.c.h.b16 %v924
    %v1004 = vunpack.c.l.b16 %v925
    %v1005 = vunpack.c.h.b16 %v925
    %v1006 = vunpack.c.l.b16 %v926
    %v1007 = vunpack.c.h.b16 %v926
    %v1008 = vunpack.c.l.b16 %v927
    %v1009 = vunpack.c.h.b16 %v927
    %v1010 = vunpack.c.l.b16 %v928
    %v1011 = vunpack.c.h.b16 %v928
    %v1012 = vunpack.c.l.b16 %v929
    %v1013 = vunpack.c.h.b16 %v929
    %v1014 = vunpack.c.l.b16 %v930
    %v1015 = vunpack.c.h.b16 %v930
    %v1016 = vunpack.c.l.b16 %v931
    %v1017 = vunpack.c.h.b16 %v931
    %v1018 = vunpack.c.l.b16 %v932
    %v1019 = vunpack.c.h.b16 %v932
    %v1020 = vunpack.c.l.b16 %v933
    %v1021 = vunpack.c.h.b16 %v933
    %v1022 = vunpack.c.l.b16 %v934
    %v1023 = vunpack.c.h.b16 %v934
    %v1024 = vunpack.c.l.b16 %v935
    %v1025 = vunpack.c.h.b16 %v935
    %v1026 = vunpack.c.l.b16 %v936
    %v1027 = vunpack.c.h.b16 %v936
    %v1028 = vunpack.c.l.b16 %v937
    %v1029 = vunpack.c.h.b16 %v937
    %v1030 = vunpack.c.l.b16 %v938
    %v1031 = vunpack.c.h.b16 %v938
    %v1032 = vunpack.c.l.b16 %v939
    %v1033 = vunpack.c.h.b16 %v939
    %v1034 = vunpack.c.l.b16 %v940
    %v1035 = vunpack.c.h.b16 %v940
    %v1036 = vunpack.c.l.b16 %v941
    %v1037 = vunpack.c.h.b16 %v941
    %v1038 = vpack.c.b16 %v978, %v974
    %v1039 = vpack.c.b16 %v979, %v975
    %v1040 = vpack.c.b16 %v980, %v976
    %v1041 = vpack.c.b16 %v981, %v977
    %v1042 = vpack.c.b16 %v986, %v982
    %v1043 = vpack.c.b16 %v987, %v983
    %v1044 = vpack.c.b16 %v988, %v984
    %v1045 = vpack.c.b16 %v989, %v985
    %v1046 = vpack.c.b16 %v994, %v990
    %v1047 = vpack.c.b16 %v995, %v991
    %v1048 = vpack.c.b16 %v996, %v992
    %v1049 = vpack.c.b16 %v997, %v993
    %v1050 = vpack.c.b16 %v1002, %v998
    %v1051 = vpack.c.b16 %v1003, %v999
    %v1052 = vpack.c.b16 %v1004, %v1000
    %v1053 = vpack.c.b16 %v1005, %v1001
    %v1054 = vpack.c.b16 %v1010, %v1006
    %v1055 = vpack.c.b16 %v1011, %v1007
    %v1056 = vpack.c.b16 %v1012, %v1008
    %v1057 = vpack.c.b16 %v1013, %v1009
    %v1058 = vpack.c.b16 %v1018, %v1014
    %v1059 = vpack.c.b16 %v1019, %v1015
    %v1060 = vpack.c.b16 %v1020, %v1016
    %v1061 = vpack.c.b16 %v1021, %v1017
    %v1062 = vpack.c.b16 %v1026, %v1022
    %v1063 = vpack.c.b16 %v1027, %v1023
    %v1064 = vpack.c.b16 %v1028, %v1024
    %v1065 = vpack.c.b16 %v1029, %v1025
    %v1066 = vpack.c.b16 %v1034, %v1030
    %v1067 = vpack.c.b16 %v1035, %v1031
    %v1068 = vpack.c.b16 %v1036, %v1032
    %v1069 = vpack.c.b16 %v1037, %v1033
    %1102 = vmatprep.subr.bf16.mxu0 %v1039
    %1103 = vmatpush1.bf16.msra.mxu0 %v1038
    %1104 = vmatprep.subr.bf16.mxu0 %v1043
    %1105 = vmatpush1.bf16.msra.mxu0 %v1042
    %1106 = vmatprep.subr.bf16.mxu0 %v1047
    %1107 = vmatpush1.bf16.msra.mxu0 %v1046
    %1108 = vmatprep.subr.bf16.mxu0 %v1051
    %1109 = vmatpush1.bf16.msra.mxu0 %v1050
    %1110 = vmatprep.subr.bf16.mxu0 %v1055
    %1111 = vmatpush1.bf16.msra.mxu0 %v1054
    %1112 = vmatprep.subr.bf16.mxu0 %v1059
    %1113 = vmatpush1.bf16.msra.mxu0 %v1058
    %1114 = vmatprep.subr.bf16.mxu0 %v1063
    %1115 = vmatpush1.bf16.msra.mxu0 %v1062
    %1116 = vmatprep.subr.bf16.mxu0 %v1067
    %1117 = vmatpush1.bf16.msra.mxu0 %v1066
    %1118 = vmatprep.subr.bf16.mxu0 0
    %1119 = vmatpush1.bf16.msra.mxu0 0
    %1120 = vmatprep.subr.bf16.mxu0 0
    %1121 = vmatpush1.bf16.msra.mxu0 0
    %1122 = vmatprep.subr.bf16.mxu0 0
    %1123 = vmatpush1.bf16.msra.mxu0 0
    %1124 = vmatprep.subr.bf16.mxu0 0
    %1125 = vmatpush1.bf16.msra.mxu0 0
    %1126 = vmatprep.subr.bf16.mxu0 0
    %1127 = vmatpush1.bf16.msra.mxu0 0
    %1128 = vmatprep.subr.bf16.mxu0 0
    %1129 = vmatpush1.bf16.msra.mxu0 0
    %1130 = vmatprep.subr.bf16.mxu0 0
    %1131 = vmatpush1.bf16.msra.mxu0 0
    %1132 = vmatprep.subr.bf16.mxu0 0
    %1133 = vmatpush1.bf16.msra.mxu0 0
    %1134 = vmatprep.mubr.bf16.mxu0 0
    %1135 = vmatmul.mubr.bf16.gmra.mrb[0].mxu0 %v909
    %v1136 = vpop.f32.mrb[0].mxu0
    %v1137 = vadd.f32 0.0, %v1136
    %v1138 = vpop.f32.mrb[0].mxu0
    %v1139 = vadd.f32 0.0, %v1138
    %v1140 = vpop.f32.mrb[0].mxu0
    %v1141 = vpop.f32.mrb[0].mxu0
    %1142 = vdwg.mxu0
    %1143 = vmatprep.subr.bf16.mxu0 %v1041
    %1144 = vmatpush1.bf16.msra.mxu0 %v1040
    %1145 = vmatprep.subr.bf16.mxu0 %v1045
    %1146 = vmatpush1.bf16.msra.mxu0 %v1044
    %1147 = vmatprep.subr.bf16.mxu0 %v1049
    %1148 = vmatpush1.bf16.msra.mxu0 %v1048
    %1149 = vmatprep.subr.bf16.mxu0 %v1053
    %1150 = vmatpush1.bf16.msra.mxu0 %v1052
    %1151 = vmatprep.subr.bf16.mxu0 %v1057
    %1152 = vmatpush1.bf16.msra.mxu0 %v1056
    %1153 = vmatprep.subr.bf16.mxu0 %v1061
    %1154 = vmatpush1.bf16.msra.mxu0 %v1060
    %1155 = vmatprep.subr.bf16.mxu0 %v1065
    %1156 = vmatpush1.bf16.msra.mxu0 %v1064
    %1157 = vmatprep.subr.bf16.mxu0 %v1069
    %1158 = vmatpush1.bf16.msra.mxu0 %v1068
    %1159 = vmatprep.subr.bf16.mxu0 0
    %1160 = vmatpush1.bf16.msra.mxu0 0
    %1161 = vmatprep.subr.bf16.mxu0 0
    %1162 = vmatpush1.bf16.msra.mxu0 0
    %1163 = vmatprep.subr.bf16.mxu0 0
    %1164 = vmatpush1.bf16.msra.mxu0 0
    %1165 = vmatprep.subr.bf16.mxu0 0
    %1166 = vmatpush1.bf16.msra.mxu0 0
    %1167 = vmatprep.subr.bf16.mxu0 0
    %1168 = vmatpush1.bf16.msra.mxu0 0
    %1169 = vmatprep.subr.bf16.mxu0 0
    %1170 = vmatpush1.bf16.msra.mxu0 0
    %1171 = vmatprep.subr.bf16.mxu0 0
    %1172 = vmatpush1.bf16.msra.mxu0 0
    %1173 = vmatprep.subr.bf16.mxu0 0
    %1174 = vmatpush1.bf16.msra.mxu0 0
    %1175 = vmatprep.mubr.bf16.mxu0 0
    %1176 = vmatmul.mubr.bf16.gmra.mrb[0].mxu0 %v909
    %v1177 = vpop.f32.mrb[0].mxu0
    %v1178 = vadd.f32 0.0, %v1177
    %v1179 = vpop.f32.mrb[0].mxu0
    %v1180 = vadd.f32 0.0, %v1179
    %v1181 = vpop.f32.mrb[0].mxu0
    %v1182 = vpop.f32.mrb[0].mxu0
    %1183 = vdwg.mxu0
    %v1188 = vcombine.low %v1137, %v1139
    %v1189 = vcombine.low %v1178, %v1180
    %v1191 = vunpack.c.l.s4 1966171168
    %v1192 = vunpack.c.0.s8 %v1191
    %v1193 = vlaneseq
    %v1194 = vshrl.u32 %v1193, 7
    %v1195 = vsub.s32 %v1192, %v1194
    %v1196 = vrot.slane %v1188, %v1195
    %v1198 = vunpack.c.l.s4 1966171168
    %v1199 = vunpack.c.0.s8 %v1198
    %v1200 = vlaneseq
    %v1201 = vshrl.u32 %v1200, 7
    %v1202 = vsub.s32 %v1199, %v1201
    %v1203 = vrot.slane %v1189, %v1202
    %v1204 = vcombine.low %v1196, %v1203
    %v1206 = vunpack.c.l.s4 1966171168
    %v1207 = vunpack.c.0.s8 %v1206
    %v1208 = vlaneseq
    %v1209 = vshrl.u32 %v1208, 7
    %v1210 = vsub.s32 %v1207, %v1209
    %v1211 = vrot.slane %v1204, %v1210
    %v1213 = vadd.f32 %v908, %v1211
    %v1214 = vxor.u32 %v1213, 2147483648
    %v1215 = vmul.f32 %v1214, 1.442695
    %v1216 = vpow.pop %v1215
    %v1217 = vadd.f32 %v1216, 1.0
    %v1218 = vrcp.pop %v1217
    %v1219 = vmul.f32 1.0, %v1218
    %v1221 = vrot.slane %v1213, 1
    %v1223 = vxor.u32 %v1221, 2147483648
    %v1224 = vmul.f32 %v1223, 1.442695
    %v1225 = vpow.pop %v1224
    %v1226 = vadd.f32 %v1225, 1.0
    %v1227 = vrcp.pop %v1226
    %v1228 = vmul.f32 1.0, %v1227
    %v1229 = vrot.slane %v1213, 2
    %v1231 = vtanh.pop %v1229
    %v1232 = vrot.slane %v1213, 3
    %v1234 = vxor.u32 %v1232, 2147483648
    %v1235 = vmul.f32 %v1234, 1.442695
    %v1236 = vpow.pop %v1235
    %v1237 = vadd.f32 %v1236, 1.0
    %v1238 = vrcp.pop %v1237
    %v1239 = vmul.f32 1.0, %v1238
    %v1240 = vmul.f32 %v1228, %v903
    %v1241 = vmul.f32 %v1219, %v1231
    %v1242 = vadd.f32 %v1240, %v1241
    %v1243 = vtanh.pop %v1242
    %v1244 = vmul.f32 %v1239, %v1243
    %1245 = vst [vmem:[#allocation3 + $0x2] sm:$0x1] %v1244
    %s1246 = scalar_lea.vmem [#allocation2], 3
    %v1247 = vld [vmem:[%s1246] ss:$8 sm:$0xf]
    %v1248 = vpack.c.bf16 %v1244, %v1244
    %v1249 = vld [vmem:[#allocation9] sm:$0xff]
    %v1250 = vld [vmem:[#allocation9 + $0x8] sm:$0xff]
    %v1251 = vld [vmem:[#allocation9 + $0x10] sm:$0xff]
    %v1252 = vld [vmem:[#allocation9 + $0x18] sm:$0xff]
    %v1253 = vld [vmem:[#allocation9 + $0x20] sm:$0xff]
    %v1254 = vld [vmem:[#allocation9 + $0x28] sm:$0xff]
    %v1255 = vld [vmem:[#allocation9 + $0x30] sm:$0xff]
    %v1256 = vld [vmem:[#allocation9 + $0x38] sm:$0xff]
    %v1257 = vld [vmem:[#allocation9 + $0x40] sm:$0xff]
    %v1258 = vld [vmem:[#allocation9 + $0x48] sm:$0xff]
    %v1259 = vld [vmem:[#allocation9 + $0x50] sm:$0xff]
    %v1260 = vld [vmem:[#allocation9 + $0x58] sm:$0xff]
    %v1261 = vld [vmem:[#allocation9 + $0x60] sm:$0xff]
    %v1262 = vld [vmem:[#allocation9 + $0x68] sm:$0xff]
    %v1263 = vld [vmem:[#allocation9 + $0x70] sm:$0xff]
    %v1264 = vld [vmem:[#allocation9 + $0x78] sm:$0xff]
    %v1265 = vld [vmem:[#allocation9 + $0x80] sm:$0xff]
    %v1266 = vld [vmem:[#allocation9 + $0x88] sm:$0xff]
    %v1267 = vld [vmem:[#allocation9 + $0x90] sm:$0xff]
    %v1268 = vld [vmem:[#allocation9 + $0x98] sm:$0xff]
    %v1269 = vld [vmem:[#allocation9 + $0xa0] sm:$0xff]
    %v1270 = vld [vmem:[#allocation9 + $0xa8] sm:$0xff]
    %v1271 = vld [vmem:[#allocation9 + $0xb0] sm:$0xff]
    %v1272 = vld [vmem:[#allocation9 + $0xb8] sm:$0xff]
    %v1273 = vld [vmem:[#allocation9 + $0xc0] sm:$0xff]
    %v1274 = vld [vmem:[#allocation9 + $0xc8] sm:$0xff]
    %v1275 = vld [vmem:[#allocation9 + $0xd0] sm:$0xff]
    %v1276 = vld [vmem:[#allocation9 + $0xd8] sm:$0xff]
    %v1277 = vld [vmem:[#allocation9 + $0xe0] sm:$0xff]
    %v1278 = vld [vmem:[#allocation9 + $0xe8] sm:$0xff]
    %v1279 = vld [vmem:[#allocation9 + $0xf0] sm:$0xff]
    %v1280 = vld [vmem:[#allocation9 + $0xf8] sm:$0xff]
    %v1313 = vunpack.c.l.b16 %v1249
    %v1314 = vunpack.c.h.b16 %v1249
    %v1315 = vunpack.c.l.b16 %v1250
    %v1316 = vunpack.c.h.b16 %v1250
    %v1317 = vunpack.c.l.b16 %v1251
    %v1318 = vunpack.c.h.b16 %v1251
    %v1319 = vunpack.c.l.b16 %v1252
    %v1320 = vunpack.c.h.b16 %v1252
    %v1321 = vunpack.c.l.b16 %v1253
    %v1322 = vunpack.c.h.b16 %v1253
    %v1323 = vunpack.c.l.b16 %v1254
    %v1324 = vunpack.c.h.b16 %v1254
    %v1325 = vunpack.c.l.b16 %v1255
    %v1326 = vunpack.c.h.b16 %v1255
    %v1327 = vunpack.c.l.b16 %v1256
    %v1328 = vunpack.c.h.b16 %v1256
    %v1329 = vunpack.c.l.b16 %v1257
    %v1330 = vunpack.c.h.b16 %v1257
    %v1331 = vunpack.c.l.b16 %v1258
    %v1332 = vunpack.c.h.b16 %v1258
    %v1333 = vunpack.c.l.b16 %v1259
    %v1334 = vunpack.c.h.b16 %v1259
    %v1335 = vunpack.c.l.b16 %v1260
    %v1336 = vunpack.c.h.b16 %v1260
    %v1337 = vunpack.c.l.b16 %v1261
    %v1338 = vunpack.c.h.b16 %v1261
    %v1339 = vunpack.c.l.b16 %v1262
    %v1340 = vunpack.c.h.b16 %v1262
    %v1341 = vunpack.c.l.b16 %v1263
    %v1342 = vunpack.c.h.b16 %v1263
    %v1343 = vunpack.c.l.b16 %v1264
    %v1344 = vunpack.c.h.b16 %v1264
    %v1345 = vunpack.c.l.b16 %v1265
    %v1346 = vunpack.c.h.b16 %v1265
    %v1347 = vunpack.c.l.b16 %v1266
    %v1348 = vunpack.c.h.b16 %v1266
    %v1349 = vunpack.c.l.b16 %v1267
    %v1350 = vunpack.c.h.b16 %v1267
    %v1351 = vunpack.c.l.b16 %v1268
    %v1352 = vunpack.c.h.b16 %v1268
    %v1353 = vunpack.c.l.b16 %v1269
    %v1354 = vunpack.c.h.b16 %v1269
    %v1355 = vunpack.c.l.b16 %v1270
    %v1356 = vunpack.c.h.b16 %v1270
    %v1357 = vunpack.c.l.b16 %v1271
    %v1358 = vunpack.c.h.b16 %v1271
    %v1359 = vunpack.c.l.b16 %v1272
    %v1360 = vunpack.c.h.b16 %v1272
    %v1361 = vunpack.c.l.b16 %v1273
    %v1362 = vunpack.c.h.b16 %v1273
    %v1363 = vunpack.c.l.b16 %v1274
    %v1364 = vunpack.c.h.b16 %v1274
    %v1365 = vunpack.c.l.b16 %v1275
    %v1366 = vunpack.c.h.b16 %v1275
    %v1367 = vunpack.c.l.b16 %v1276
    %v1368 = vunpack.c.h.b16 %v1276
    %v1369 = vunpack.c.l.b16 %v1277
    %v1370 = vunpack.c.h.b16 %v1277
    %v1371 = vunpack.c.l.b16 %v1278
    %v1372 = vunpack.c.h.b16 %v1278
    %v1373 = vunpack.c.l.b16 %v1279
    %v1374 = vunpack.c.h.b16 %v1279
    %v1375 = vunpack.c.l.b16 %v1280
    %v1376 = vunpack.c.h.b16 %v1280
    %v1377 = vpack.c.b16 %v1317, %v1313
    %v1378 = vpack.c.b16 %v1318, %v1314
    %v1379 = vpack.c.b16 %v1319, %v1315
    %v1380 = vpack.c.b16 %v1320, %v1316
    %v1381 = vpack.c.b16 %v1325, %v1321
    %v1382 = vpack.c.b16 %v1326, %v1322
    %v1383 = vpack.c.b16 %v1327, %v1323
    %v1384 = vpack.c.b16 %v1328, %v1324
    %v1385 = vpack.c.b16 %v1333, %v1329
    %v1386 = vpack.c.b16 %v1334, %v1330
    %v1387 = vpack.c.b16 %v1335, %v1331
    %v1388 = vpack.c.b16 %v1336, %v1332
    %v1389 = vpack.c.b16 %v1341, %v1337
    %v1390 = vpack.c.b16 %v1342, %v1338
    %v1391 = vpack.c.b16 %v1343, %v1339
    %v1392 = vpack.c.b16 %v1344, %v1340
    %v1393 = vpack.c.b16 %v1349, %v1345
    %v1394 = vpack.c.b16 %v1350, %v1346
    %v1395 = vpack.c.b16 %v1351, %v1347
    %v1396 = vpack.c.b16 %v1352, %v1348
    %v1397 = vpack.c.b16 %v1357, %v1353
    %v1398 = vpack.c.b16 %v1358, %v1354
    %v1399 = vpack.c.b16 %v1359, %v1355
    %v1400 = vpack.c.b16 %v1360, %v1356
    %v1401 = vpack.c.b16 %v1365, %v1361
    %v1402 = vpack.c.b16 %v1366, %v1362
    %v1403 = vpack.c.b16 %v1367, %v1363
    %v1404 = vpack.c.b16 %v1368, %v1364
    %v1405 = vpack.c.b16 %v1373, %v1369
    %v1406 = vpack.c.b16 %v1374, %v1370
    %v1407 = vpack.c.b16 %v1375, %v1371
    %v1408 = vpack.c.b16 %v1376, %v1372
    %1441 = vmatprep.subr.bf16.mxu0 %v1378
    %1442 = vmatpush1.bf16.msra.mxu0 %v1377
    %1443 = vmatprep.subr.bf16.mxu0 %v1382
    %1444 = vmatpush1.bf16.msra.mxu0 %v1381
    %1445 = vmatprep.subr.bf16.mxu0 %v1386
    %1446 = vmatpush1.bf16.msra.mxu0 %v1385
    %1447 = vmatprep.subr.bf16.mxu0 %v1390
    %1448 = vmatpush1.bf16.msra.mxu0 %v1389
    %1449 = vmatprep.subr.bf16.mxu0 %v1394
    %1450 = vmatpush1.bf16.msra.mxu0 %v1393
    %1451 = vmatprep.subr.bf16.mxu0 %v1398
    %1452 = vmatpush1.bf16.msra.mxu0 %v1397
    %1453 = vmatprep.subr.bf16.mxu0 %v1402
    %1454 = vmatpush1.bf16.msra.mxu0 %v1401
    %1455 = vmatprep.subr.bf16.mxu0 %v1406
    %1456 = vmatpush1.bf16.msra.mxu0 %v1405
    %1457 = vmatprep.subr.bf16.mxu0 0
    %1458 = vmatpush1.bf16.msra.mxu0 0
    %1459 = vmatprep.subr.bf16.mxu0 0
    %1460 = vmatpush1.bf16.msra.mxu0 0
    %1461 = vmatprep.subr.bf16.mxu0 0
    %1462 = vmatpush1.bf16.msra.mxu0 0
    %1463 = vmatprep.subr.bf16.mxu0 0
    %1464 = vmatpush1.bf16.msra.mxu0 0
    %1465 = vmatprep.subr.bf16.mxu0 0
    %1466 = vmatpush1.bf16.msra.mxu0 0
    %1467 = vmatprep.subr.bf16.mxu0 0
    %1468 = vmatpush1.bf16.msra.mxu0 0
    %1469 = vmatprep.subr.bf16.mxu0 0
    %1470 = vmatpush1.bf16.msra.mxu0 0
    %1471 = vmatprep.subr.bf16.mxu0 0
    %1472 = vmatpush1.bf16.msra.mxu0 0
    %1473 = vmatprep.mubr.bf16.mxu0 0
    %1474 = vmatmul.mubr.bf16.gmra.mrb[0].mxu0 %v1248
    %v1475 = vpop.f32.mrb[0].mxu0
    %v1476 = vadd.f32 0.0, %v1475
    %v1477 = vpop.f32.mrb[0].mxu0
    %v1478 = vadd.f32 0.0, %v1477
    %v1479 = vpop.f32.mrb[0].mxu0
    %v1480 = vpop.f32.mrb[0].mxu0
    %1481 = vdwg.mxu0
    %1482 = vmatprep.subr.bf16.mxu0 %v1380
    %1483 = vmatpush1.bf16.msra.mxu0 %v1379
    %1484 = vmatprep.subr.bf16.mxu0 %v1384
    %1485 = vmatpush1.bf16.msra.mxu0 %v1383
    %1486 = vmatprep.subr.bf16.mxu0 %v1388
    %1487 = vmatpush1.bf16.msra.mxu0 %v1387
    %1488 = vmatprep.subr.bf16.mxu0 %v1392
    %1489 = vmatpush1.bf16.msra.mxu0 %v1391
    %1490 = vmatprep.subr.bf16.mxu0 %v1396
    %1491 = vmatpush1.bf16.msra.mxu0 %v1395
    %1492 = vmatprep.subr.bf16.mxu0 %v1400
    %1493 = vmatpush1.bf16.msra.mxu0 %v1399
    %1494 = vmatprep.subr.bf16.mxu0 %v1404
    %1495 = vmatpush1.bf16.msra.mxu0 %v1403
    %1496 = vmatprep.subr.bf16.mxu0 %v1408
    %1497 = vmatpush1.bf16.msra.mxu0 %v1407
    %1498 = vmatprep.subr.bf16.mxu0 0
    %1499 = vmatpush1.bf16.msra.mxu0 0
    %1500 = vmatprep.subr.bf16.mxu0 0
    %1501 = vmatpush1.bf16.msra.mxu0 0
    %1502 = vmatprep.subr.bf16.mxu0 0
    %1503 = vmatpush1.bf16.msra.mxu0 0
    %1504 = vmatprep.subr.bf16.mxu0 0
    %1505 = vmatpush1.bf16.msra.mxu0 0
    %1506 = vmatprep.subr.bf16.mxu0 0
    %1507 = vmatpush1.bf16.msra.mxu0 0
    %1508 = vmatprep.subr.bf16.mxu0 0
    %1509 = vmatpush1.bf16.msra.mxu0 0
    %1510 = vmatprep.subr.bf16.mxu0 0
    %1511 = vmatpush1.bf16.msra.mxu0 0
    %1512 = vmatprep.subr.bf16.mxu0 0
    %1513 = vmatpush1.bf16.msra.mxu0 0
    %1514 = vmatprep.mubr.bf16.mxu0 0
    %1515 = vmatmul.mubr.bf16.gmra.mrb[0].mxu0 %v1248
    %v1516 = vpop.f32.mrb[0].mxu0
    %v1517 = vadd.f32 0.0, %v1516
    %v1518 = vpop.f32.mrb[0].mxu0
    %v1519 = vadd.f32 0.0, %v1518
    %v1520 = vpop.f32.mrb[0].mxu0
    %v1521 = vpop.f32.mrb[0].mxu0
    %1522 = vdwg.mxu0
    %v1527 = vcombine.low %v1476, %v1478
    %v1528 = vcombine.low %v1517, %v1519
    %v1530 = vunpack.c.l.s4 1966171168
    %v1531 = vunpack.c.0.s8 %v1530
    %v1532 = vlaneseq
    %v1533 = vshrl.u32 %v1532, 7
    %v1534 = vsub.s32 %v1531, %v1533
    %v1535 = vrot.slane %v1527, %v1534
    %v1537 = vunpack.c.l.s4 1966171168
    %v1538 = vunpack.c.0.s8 %v1537
    %v1539 = vlaneseq
    %v1540 = vshrl.u32 %v1539, 7
    %v1541 = vsub.s32 %v1538, %v1540
    %v1542 = vrot.slane %v1528, %v1541
    %v1543 = vcombine.low %v1535, %v1542
    %v1545 = vunpack.c.l.s4 1966171168
    %v1546 = vunpack.c.0.s8 %v1545
    %v1547 = vlaneseq
    %v1548 = vshrl.u32 %v1547, 7
    %v1549 = vsub.s32 %v1546, %v1548
    %v1550 = vrot.slane %v1543, %v1549
    %v1552 = vadd.f32 %v1247, %v1550
    %v1553 = vxor.u32 %v1552, 2147483648
    %v1554 = vmul.f32 %v1553, 1.442695
    %v1555 = vpow.pop %v1554
    %v1556 = vadd.f32 %v1555, 1.0
    %v1557 = vrcp.pop %v1556
    %v1558 = vmul.f32 1.0, %v1557
    %v1560 = vrot.slane %v1552, 1
    %v1562 = vxor.u32 %v1560, 2147483648
    %v1563 = vmul.f32 %v1562, 1.442695
    %v1564 = vpow.pop %v1563
    %v1565 = vadd.f32 %v1564, 1.0
    %v1566 = vrcp.pop %v1565
    %v1567 = vmul.f32 1.0, %v1566
    %v1568 = vrot.slane %v1552, 2
    %v1570 = vtanh.pop %v1568
    %v1571 = vrot.slane %v1552, 3
    %v1573 = vxor.u32 %v1571, 2147483648
    %v1574 = vmul.f32 %v1573, 1.442695
    %v1575 = vpow.pop %v1574
    %v1576 = vadd.f32 %v1575, 1.0
    %v1577 = vrcp.pop %v1576
    %v1578 = vmul.f32 1.0, %v1577
    %v1579 = vmul.f32 %v1567, %v1242
    %v1580 = vmul.f32 %v1558, %v1570
    %v1581 = vadd.f32 %v1579, %v1580
    %v1582 = vtanh.pop %v1581
    %v1583 = vmul.f32 %v1578, %v1582
    %1584 = vst [vmem:[#allocation3 + $0x3] sm:$0x1] %v1583
    %s1585 = scalar_lea.vmem [#allocation2], 4
    %v1586 = vld [vmem:[%s1585] ss:$8 sm:$0xf]
    %v1587 = vpack.c.bf16 %v1583, %v1583
    %v1588 = vld [vmem:[#allocation9] sm:$0xff]
    %v1589 = vld [vmem:[#allocation9 + $0x8] sm:$0xff]
    %v1590 = vld [vmem:[#allocation9 + $0x10] sm:$0xff]
    %v1591 = vld [vmem:[#allocation9 + $0x18] sm:$0xff]
    %v1592 = vld [vmem:[#allocation9 + $0x20] sm:$0xff]
    %v1593 = vld [vmem:[#allocation9 + $0x28] sm:$0xff]
    %v1594 = vld [vmem:[#allocation9 + $0x30] sm:$0xff]
    %v1595 = vld [vmem:[#allocation9 + $0x38] sm:$0xff]
    %v1596 = vld [vmem:[#allocation9 + $0x40] sm:$0xff]
    %v1597 = vld [vmem:[#allocation9 + $0x48] sm:$0xff]
    %v1598 = vld [vmem:[#allocation9 + $0x50] sm:$0xff]
    %v1599 = vld [vmem:[#allocation9 + $0x58] sm:$0xff]
    %v1600 = vld [vmem:[#allocation9 + $0x60] sm:$0xff]
    %v1601 = vld [vmem:[#allocation9 + $0x68] sm:$0xff]
    %v1602 = vld [vmem:[#allocation9 + $0x70] sm:$0xff]
    %v1603 = vld [vmem:[#allocation9 + $0x78] sm:$0xff]
    %v1604 = vld [vmem:[#allocation9 + $0x80] sm:$0xff]
    %v1605 = vld [vmem:[#allocation9 + $0x88] sm:$0xff]
    %v1606 = vld [vmem:[#allocation9 + $0x90] sm:$0xff]
    %v1607 = vld [vmem:[#allocation9 + $0x98] sm:$0xff]
    %v1608 = vld [vmem:[#allocation9 + $0xa0] sm:$0xff]
    %v1609 = vld [vmem:[#allocation9 + $0xa8] sm:$0xff]
    %v1610 = vld [vmem:[#allocation9 + $0xb0] sm:$0xff]
    %v1611 = vld [vmem:[#allocation9 + $0xb8] sm:$0xff]
    %v1612 = vld [vmem:[#allocation9 + $0xc0] sm:$0xff]
    %v1613 = vld [vmem:[#allocation9 + $0xc8] sm:$0xff]
    %v1614 = vld [vmem:[#allocation9 + $0xd0] sm:$0xff]
    %v1615 = vld [vmem:[#allocation9 + $0xd8] sm:$0xff]
    %v1616 = vld [vmem:[#allocation9 + $0xe0] sm:$0xff]
    %v1617 = vld [vmem:[#allocation9 + $0xe8] sm:$0xff]
    %v1618 = vld [vmem:[#allocation9 + $0xf0] sm:$0xff]
    %v1619 = vld [vmem:[#allocation9 + $0xf8] sm:$0xff]
    %v1652 = vunpack.c.l.b16 %v1588
    %v1653 = vunpack.c.h.b16 %v1588
    %v1654 = vunpack.c.l.b16 %v1589
    %v1655 = vunpack.c.h.b16 %v1589
    %v1656 = vunpack.c.l.b16 %v1590
    %v1657 = vunpack.c.h.b16 %v1590
    %v1658 = vunpack.c.l.b16 %v1591
    %v1659 = vunpack.c.h.b16 %v1591
    %v1660 = vunpack.c.l.b16 %v1592
    %v1661 = vunpack.c.h.b16 %v1592
    %v1662 = vunpack.c.l.b16 %v1593
    %v1663 = vunpack.c.h.b16 %v1593
    %v1664 = vunpack.c.l.b16 %v1594
    %v1665 = vunpack.c.h.b16 %v1594
    %v1666 = vunpack.c.l.b16 %v1595
    %v1667 = vunpack.c.h.b16 %v1595
    %v1668 = vunpack.c.l.b16 %v1596
    %v1669 = vunpack.c.h.b16 %v1596
    %v1670 = vunpack.c.l.b16 %v1597
    %v1671 = vunpack.c.h.b16 %v1597
    %v1672 = vunpack.c.l.b16 %v1598
    %v1673 = vunpack.c.h.b16 %v1598
    %v1674 = vunpack.c.l.b16 %v1599
    %v1675 = vunpack.c.h.b16 %v1599
    %v1676 = vunpack.c.l.b16 %v1600
    %v1677 = vunpack.c.h.b16 %v1600
    %v1678 = vunpack.c.l.b16 %v1601
    %v1679 = vunpack.c.h.b16 %v1601
    %v1680 = vunpack.c.l.b16 %v1602
    %v1681 = vunpack.c.h.b16 %v1602
    %v1682 = vunpack.c.l.b16 %v1603
    %v1683 = vunpack.c.h.b16 %v1603
    %v1684 = vunpack.c.l.b16 %v1604
    %v1685 = vunpack.c.h.b16 %v1604
    %v1686 = vunpack.c.l.b16 %v1605
    %v1687 = vunpack.c.h.b16 %v1605
    %v1688 = vunpack.c.l.b16 %v1606
    %v1689 = vunpack.c.h.b16 %v1606
    %v1690 = vunpack.c.l.b16 %v1607
    %v1691 = vunpack.c.h.b16 %v1607
    %v1692 = vunpack.c.l.b16 %v1608
    %v1693 = vunpack.c.h.b16 %v1608
    %v1694 = vunpack.c.l.b16 %v1609
    %v1695 = vunpack.c.h.b16 %v1609
    %v1696 = vunpack.c.l.b16 %v1610
    %v1697 = vunpack.c.h.b16 %v1610
    %v1698 = vunpack.c.l.b16 %v1611
    %v1699 = vunpack.c.h.b16 %v1611
    %v1700 = vunpack.c.l.b16 %v1612
    %v1701 = vunpack.c.h.b16 %v1612
    %v1702 = vunpack.c.l.b16 %v1613
    %v1703 = vunpack.c.h.b16 %v1613
    %v1704 = vunpack.c.l.b16 %v1614
    %v1705 = vunpack.c.h.b16 %v1614
    %v1706 = vunpack.c.l.b16 %v1615
    %v1707 = vunpack.c.h.b16 %v1615
    %v1708 = vunpack.c.l.b16 %v1616
    %v1709 = vunpack.c.h.b16 %v1616
    %v1710 = vunpack.c.l.b16 %v1617
    %v1711 = vunpack.c.h.b16 %v1617
    %v1712 = vunpack.c.l.b16 %v1618
    %v1713 = vunpack.c.h.b16 %v1618
    %v1714 = vunpack.c.l.b16 %v1619
    %v1715 = vunpack.c.h.b16 %v1619
    %v1716 = vpack.c.b16 %v1656, %v1652
    %v1717 = vpack.c.b16 %v1657, %v1653
    %v1718 = vpack.c.b16 %v1658, %v1654
    %v1719 = vpack.c.b16 %v1659, %v1655
    %v1720 = vpack.c.b16 %v1664, %v1660
    %v1721 = vpack.c.b16 %v1665, %v1661
    %v1722 = vpack.c.b16 %v1666, %v1662
    %v1723 = vpack.c.b16 %v1667, %v1663
    %v1724 = vpack.c.b16 %v1672, %v1668
    %v1725 = vpack.c.b16 %v1673, %v1669
    %v1726 = vpack.c.b16 %v1674, %v1670
    %v1727 = vpack.c.b16 %v1675, %v1671
    %v1728 = vpack.c.b16 %v1680, %v1676
    %v1729 = vpack.c.b16 %v1681, %v1677
    %v1730 = vpack.c.b16 %v1682, %v1678
    %v1731 = vpack.c.b16 %v1683, %v1679
    %v1732 = vpack.c.b16 %v1688, %v1684
    %v1733 = vpack.c.b16 %v1689, %v1685
    %v1734 = vpack.c.b16 %v1690, %v1686
    %v1735 = vpack.c.b16 %v1691, %v1687
    %v1736 = vpack.c.b16 %v1696, %v1692
    %v1737 = vpack.c.b16 %v1697, %v1693
    %v1738 = vpack.c.b16 %v1698, %v1694
    %v1739 = vpack.c.b16 %v1699, %v1695
    %v1740 = vpack.c.b16 %v1704, %v1700
    %v1741 = vpack.c.b16 %v1705, %v1701
    %v1742 = vpack.c.b16 %v1706, %v1702
    %v1743 = vpack.c.b16 %v1707, %v1703
    %v1744 = vpack.c.b16 %v1712, %v1708
    %v1745 = vpack.c.b16 %v1713, %v1709
    %v1746 = vpack.c.b16 %v1714, %v1710
    %v1747 = vpack.c.b16 %v1715, %v1711
    %1780 = vmatprep.subr.bf16.mxu0 %v1717
    %1781 = vmatpush1.bf16.msra.mxu0 %v1716
    %1782 = vmatprep.subr.bf16.mxu0 %v1721
    %1783 = vmatpush1.bf16.msra.mxu0 %v1720
    %1784 = vmatprep.subr.bf16.mxu0 %v1725
    %1785 = vmatpush1.bf16.msra.mxu0 %v1724
    %1786 = vmatprep.subr.bf16.mxu0 %v1729
    %1787 = vmatpush1.bf16.msra.mxu0 %v1728
    %1788 = vmatprep.subr.bf16.mxu0 %v1733
    %1789 = vmatpush1.bf16.msra.mxu0 %v1732
    %1790 = vmatprep.subr.bf16.mxu0 %v1737
    %1791 = vmatpush1.bf16.msra.mxu0 %v1736
    %1792 = vmatprep.subr.bf16.mxu0 %v1741
    %1793 = vmatpush1.bf16.msra.mxu0 %v1740
    %1794 = vmatprep.subr.bf16.mxu0 %v1745
    %1795 = vmatpush1.bf16.msra.mxu0 %v1744
    %1796 = vmatprep.subr.bf16.mxu0 0
    %1797 = vmatpush1.bf16.msra.mxu0 0
    %1798 = vmatprep.subr.bf16.mxu0 0
    %1799 = vmatpush1.bf16.msra.mxu0 0
    %1800 = vmatprep.subr.bf16.mxu0 0
    %1801 = vmatpush1.bf16.msra.mxu0 0
    %1802 = vmatprep.subr.bf16.mxu0 0
    %1803 = vmatpush1.bf16.msra.mxu0 0
    %1804 = vmatprep.subr.bf16.mxu0 0
    %1805 = vmatpush1.bf16.msra.mxu0 0
    %1806 = vmatprep.subr.bf16.mxu0 0
    %1807 = vmatpush1.bf16.msra.mxu0 0
    %1808 = vmatprep.subr.bf16.mxu0 0
    %1809 = vmatpush1.bf16.msra.mxu0 0
    %1810 = vmatprep.subr.bf16.mxu0 0
    %1811 = vmatpush1.bf16.msra.mxu0 0
    %1812 = vmatprep.mubr.bf16.mxu0 0
    %1813 = vmatmul.mubr.bf16.gmra.mrb[0].mxu0 %v1587
    %v1814 = vpop.f32.mrb[0].mxu0
    %v1815 = vadd.f32 0.0, %v1814
    %v1816 = vpop.f32.mrb[0].mxu0
    %v1817 = vadd.f32 0.0, %v1816
    %v1818 = vpop.f32.mrb[0].mxu0
    %v1819 = vpop.f32.mrb[0].mxu0
    %1820 = vdwg.mxu0
    %1821 = vmatprep.subr.bf16.mxu0 %v1719
    %1822 = vmatpush1.bf16.msra.mxu0 %v1718
    %1823 = vmatprep.subr.bf16.mxu0 %v1723
    %1824 = vmatpush1.bf16.msra.mxu0 %v1722
    %1825 = vmatprep.subr.bf16.mxu0 %v1727
    %1826 = vmatpush1.bf16.msra.mxu0 %v1726
    %1827 = vmatprep.subr.bf16.mxu0 %v1731
    %1828 = vmatpush1.bf16.msra.mxu0 %v1730
    %1829 = vmatprep.subr.bf16.mxu0 %v1735
    %1830 = vmatpush1.bf16.msra.mxu0 %v1734
    %1831 = vmatprep.subr.bf16.mxu0 %v1739
    %1832 = vmatpush1.bf16.msra.mxu0 %v1738
    %1833 = vmatprep.subr.bf16.mxu0 %v1743
    %1834 = vmatpush1.bf16.msra.mxu0 %v1742
    %1835 = vmatprep.subr.bf16.mxu0 %v1747
    %1836 = vmatpush1.bf16.msra.mxu0 %v1746
    %1837 = vmatprep.subr.bf16.mxu0 0
    %1838 = vmatpush1.bf16.msra.mxu0 0
    %1839 = vmatprep.subr.bf16.mxu0 0
    %1840 = vmatpush1.bf16.msra.mxu0 0
    %1841 = vmatprep.subr.bf16.mxu0 0
    %1842 = vmatpush1.bf16.msra.mxu0 0
    %1843 = vmatprep.subr.bf16.mxu0 0
    %1844 = vmatpush1.bf16.msra.mxu0 0
    %1845 = vmatprep.subr.bf16.mxu0 0
    %1846 = vmatpush1.bf16.msra.mxu0 0
    %1847 = vmatprep.subr.bf16.mxu0 0
    %1848 = vmatpush1.bf16.msra.mxu0 0
    %1849 = vmatprep.subr.bf16.mxu0 0
    %1850 = vmatpush1.bf16.msra.mxu0 0
    %1851 = vmatprep.subr.bf16.mxu0 0
    %1852 = vmatpush1.bf16.msra.mxu0 0
    %1853 = vmatprep.mubr.bf16.mxu0 0
    %1854 = vmatmul.mubr.bf16.gmra.mrb[0].mxu0 %v1587
    %v1855 = vpop.f32.mrb[0].mxu0
    %v1856 = vadd.f32 0.0, %v1855
    %v1857 = vpop.f32.mrb[0].mxu0
    %v1858 = vadd.f32 0.0, %v1857
    %v1859 = vpop.f32.mrb[0].mxu0
    %v1860 = vpop.f32.mrb[0].mxu0
    %1861 = vdwg.mxu0
    %v1866 = vcombine.low %v1815, %v1817
    %v1867 = vcombine.low %v1856, %v1858
    %v1869 = vunpack.c.l.s4 1966171168
    %v1870 = vunpack.c.0.s8 %v1869
    %v1871 = vlaneseq
    %v1872 = vshrl.u32 %v1871, 7
    %v1873 = vsub.s32 %v1870, %v1872
    %v1874 = vrot.slane %v1866, %v1873
    %v1876 = vunpack.c.l.s4 1966171168
    %v1877 = vunpack.c.0.s8 %v1876
    %v1878 = vlaneseq
    %v1879 = vshrl.u32 %v1878, 7
    %v1880 = vsub.s32 %v1877, %v1879
    %v1881 = vrot.slane %v1867, %v1880
    %v1882 = vcombine.low %v1874, %v1881
    %v1884 = vunpack.c.l.s4 1966171168
    %v1885 = vunpack.c.0.s8 %v1884
    %v1886 = vlaneseq
    %v1887 = vshrl.u32 %v1886, 7
    %v1888 = vsub.s32 %v1885, %v1887
    %v1889 = vrot.slane %v1882, %v1888
    %v1891 = vadd.f32 %v1586, %v1889
    %v1892 = vxor.u32 %v1891, 2147483648
    %v1893 = vmul.f32 %v1892, 1.442695
    %v1894 = vpow.pop %v1893
    %v1895 = vadd.f32 %v1894, 1.0
    %v1896 = vrcp.pop %v1895
    %v1897 = vmul.f32 1.0, %v1896
    %v1899 = vrot.slane %v1891, 1
    %v1901 = vxor.u32 %v1899, 2147483648
    %v1902 = vmul.f32 %v1901, 1.442695
    %v1903 = vpow.pop %v1902
    %v1904 = vadd.f32 %v1903, 1.0
    %v1905 = vrcp.pop %v1904
    %v1906 = vmul.f32 1.0, %v1905
    %v1907 = vrot.slane %v1891, 2
    %v1909 = vtanh.pop %v1907
    %v1910 = vrot.slane %v1891, 3
    %v1912 = vxor.u32 %v1910, 2147483648
    %v1913 = vmul.f32 %v1912, 1.442695
    %v1914 = vpow.pop %v1913
    %v1915 = vadd.f32 %v1914, 1.0
    %v1916 = vrcp.pop %v1915
    %v1917 = vmul.f32 1.0, %v1916
    %v1918 = vmul.f32 %v1906, %v1581
    %v1919 = vmul.f32 %v1897, %v1909
    %v1920 = vadd.f32 %v1918, %v1919
    %v1921 = vtanh.pop %v1920
    %v1922 = vmul.f32 %v1917, %v1921
    %1923 = vst [vmem:[#allocation3 + $0x4] sm:$0x1] %v1922
    %s1924 = scalar_lea.vmem [#allocation2], 5
    %v1925 = vld [vmem:[%s1924] ss:$8 sm:$0xf]
    %v1926 = vpack.c.bf16 %v1922, %v1922
    %v1927 = vld [vmem:[#allocation9] sm:$0xff]
    %v1928 = vld [vmem:[#allocation9 + $0x8] sm:$0xff]
    %v1929 = vld [vmem:[#allocation9 + $0x10] sm:$0xff]
    %v1930 = vld [vmem:[#allocation9 + $0x18] sm:$0xff]
    %v1931 = vld [vmem:[#allocation9 + $0x20] sm:$0xff]
    %v1932 = vld [vmem:[#allocation9 + $0x28] sm:$0xff]
    %v1933 = vld [vmem:[#allocation9 + $0x30] sm:$0xff]
    %v1934 = vld [vmem:[#allocation9 + $0x38] sm:$0xff]
    %v1935 = vld [vmem:[#allocation9 + $0x40] sm:$0xff]
    %v1936 = vld [vmem:[#allocation9 + $0x48] sm:$0xff]
    %v1937 = vld [vmem:[#allocation9 + $0x50] sm:$0xff]
    %v1938 = vld [vmem:[#allocation9 + $0x58] sm:$0xff]
    %v1939 = vld [vmem:[#allocation9 + $0x60] sm:$0xff]
    %v1940 = vld [vmem:[#allocation9 + $0x68] sm:$0xff]
    %v1941 = vld [vmem:[#allocation9 + $0x70] sm:$0xff]
    %v1942 = vld [vmem:[#allocation9 + $0x78] sm:$0xff]
    %v1943 = vld [vmem:[#allocation9 + $0x80] sm:$0xff]
    %v1944 = vld [vmem:[#allocation9 + $0x88] sm:$0xff]
    %v1945 = vld [vmem:[#allocation9 + $0x90] sm:$0xff]
    %v1946 = vld [vmem:[#allocation9 + $0x98] sm:$0xff]
    %v1947 = vld [vmem:[#allocation9 + $0xa0] sm:$0xff]
    %v1948 = vld [vmem:[#allocation9 + $0xa8] sm:$0xff]
    %v1949 = vld [vmem:[#allocation9 + $0xb0] sm:$0xff]
    %v1950 = vld [vmem:[#allocation9 + $0xb8] sm:$0xff]
    %v1951 = vld [vmem:[#allocation9 + $0xc0] sm:$0xff]
    %v1952 = vld [vmem:[#allocation9 + $0xc8] sm:$0xff]
    %v1953 = vld [vmem:[#allocation9 + $0xd0] sm:$0xff]
    %v1954 = vld [vmem:[#allocation9 + $0xd8] sm:$0xff]
    %v1955 = vld [vmem:[#allocation9 + $0xe0] sm:$0xff]
    %v1956 = vld [vmem:[#allocation9 + $0xe8] sm:$0xff]
    %v1957 = vld [vmem:[#allocation9 + $0xf0] sm:$0xff]
    %v1958 = vld [vmem:[#allocation9 + $0xf8] sm:$0xff]
    %v1991 = vunpack.c.l.b16 %v1927
    %v1992 = vunpack.c.h.b16 %v1927
    %v1993 = vunpack.c.l.b16 %v1928
    %v1994 = vunpack.c.h.b16 %v1928
    %v1995 = vunpack.c.l.b16 %v1929
    %v1996 = vunpack.c.h.b16 %v1929
    %v1997 = vunpack.c.l.b16 %v1930
    %v1998 = vunpack.c.h.b16 %v1930
    %v1999 = vunpack.c.l.b16 %v1931
    %v2000 = vunpack.c.h.b16 %v1931
    %v2001 = vunpack.c.l.b16 %v1932
    %v2002 = vunpack.c.h.b16 %v1932
    %v2003 = vunpack.c.l.b16 %v1933
    %v2004 = vunpack.c.h.b16 %v1933
    %v2005 = vunpack.c.l.b16 %v1934
    %v2006 = vunpack.c.h.b16 %v1934
    %v2007 = vunpack.c.l.b16 %v1935
    %v2008 = vunpack.c.h.b16 %v1935
    %v2009 = vunpack.c.l.b16 %v1936
    %v2010 = vunpack.c.h.b16 %v1936
    %v2011 = vunpack.c.l.b16 %v1937
    %v2012 = vunpack.c.h.b16 %v1937
    %v2013 = vunpack.c.l.b16 %v1938
    %v2014 = vunpack.c.h.b16 %v1938
    %v2015 = vunpack.c.l.b16 %v1939
    %v2016 = vunpack.c.h.b16 %v1939
    %v2017 = vunpack.c.l.b16 %v1940
    %v2018 = vunpack.c.h.b16 %v1940
    %v2019 = vunpack.c.l.b16 %v1941
    %v2020 = vunpack.c.h.b16 %v1941
    %v2021 = vunpack.c.l.b16 %v1942
    %v2022 = vunpack.c.h.b16 %v1942
    %v2023 = vunpack.c.l.b16 %v1943
    %v2024 = vunpack.c.h.b16 %v1943
    %v2025 = vunpack.c.l.b16 %v1944
    %v2026 = vunpack.c.h.b16 %v1944
    %v2027 = vunpack.c.l.b16 %v1945
    %v2028 = vunpack.c.h.b16 %v1945
    %v2029 = vunpack.c.l.b16 %v1946
    %v2030 = vunpack.c.h.b16 %v1946
    %v2031 = vunpack.c.l.b16 %v1947
    %v2032 = vunpack.c.h.b16 %v1947
    %v2033 = vunpack.c.l.b16 %v1948
    %v2034 = vunpack.c.h.b16 %v1948
    %v2035 = vunpack.c.l.b16 %v1949
    %v2036 = vunpack.c.h.b16 %v1949
    %v2037 = vunpack.c.l.b16 %v1950
    %v2038 = vunpack.c.h.b16 %v1950
    %v2039 = vunpack.c.l.b16 %v1951
    %v2040 = vunpack.c.h.b16 %v1951
    %v2041 = vunpack.c.l.b16 %v1952
    %v2042 = vunpack.c.h.b16 %v1952
    %v2043 = vunpack.c.l.b16 %v1953
    %v2044 = vunpack.c.h.b16 %v1953
    %v2045 = vunpack.c.l.b16 %v1954
    %v2046 = vunpack.c.h.b16 %v1954
    %v2047 = vunpack.c.l.b16 %v1955
    %v2048 = vunpack.c.h.b16 %v1955
    %v2049 = vunpack.c.l.b16 %v1956
    %v2050 = vunpack.c.h.b16 %v1956
    %v2051 = vunpack.c.l.b16 %v1957
    %v2052 = vunpack.c.h.b16 %v1957
    %v2053 = vunpack.c.l.b16 %v1958
    %v2054 = vunpack.c.h.b16 %v1958
    %v2055 = vpack.c.b16 %v1995, %v1991
    %v2056 = vpack.c.b16 %v1996, %v1992
    %v2057 = vpack.c.b16 %v1997, %v1993
    %v2058 = vpack.c.b16 %v1998, %v1994
    %v2059 = vpack.c.b16 %v2003, %v1999
    %v2060 = vpack.c.b16 %v2004, %v2000
    %v2061 = vpack.c.b16 %v2005, %v2001
    %v2062 = vpack.c.b16 %v2006, %v2002
    %v2063 = vpack.c.b16 %v2011, %v2007
    %v2064 = vpack.c.b16 %v2012, %v2008
    %v2065 = vpack.c.b16 %v2013, %v2009
    %v2066 = vpack.c.b16 %v2014, %v2010
    %v2067 = vpack.c.b16 %v2019, %v2015
    %v2068 = vpack.c.b16 %v2020, %v2016
    %v2069 = vpack.c.b16 %v2021, %v2017
    %v2070 = vpack.c.b16 %v2022, %v2018
    %v2071 = vpack.c.b16 %v2027, %v2023
    %v2072 = vpack.c.b16 %v2028, %v2024
    %v2073 = vpack.c.b16 %v2029, %v2025
    %v2074 = vpack.c.b16 %v2030, %v2026
    %v2075 = vpack.c.b16 %v2035, %v2031
    %v2076 = vpack.c.b16 %v2036, %v2032
    %v2077 = vpack.c.b16 %v2037, %v2033
    %v2078 = vpack.c.b16 %v2038, %v2034
    %v2079 = vpack.c.b16 %v2043, %v2039
    %v2080 = vpack.c.b16 %v2044, %v2040
    %v2081 = vpack.c.b16 %v2045, %v2041
    %v2082 = vpack.c.b16 %v2046, %v2042
    %v2083 = vpack.c.b16 %v2051, %v2047
    %v2084 = vpack.c.b16 %v2052, %v2048
    %v2085 = vpack.c.b16 %v2053, %v2049
    %v2086 = vpack.c.b16 %v2054, %v2050
    %2119 = vmatprep.subr.bf16.mxu0 %v2056
    %2120 = vmatpush1.bf16.msra.mxu0 %v2055
    %2121 = vmatprep.subr.bf16.mxu0 %v2060
    %2122 = vmatpush1.bf16.msra.mxu0 %v2059
    %2123 = vmatprep.subr.bf16.mxu0 %v2064
    %2124 = vmatpush1.bf16.msra.mxu0 %v2063
    %2125 = vmatprep.subr.bf16.mxu0 %v2068
    %2126 = vmatpush1.bf16.msra.mxu0 %v2067
    %2127 = vmatprep.subr.bf16.mxu0 %v2072
    %2128 = vmatpush1.bf16.msra.mxu0 %v2071
    %2129 = vmatprep.subr.bf16.mxu0 %v2076
    %2130 = vmatpush1.bf16.msra.mxu0 %v2075
    %2131 = vmatprep.subr.bf16.mxu0 %v2080
    %2132 = vmatpush1.bf16.msra.mxu0 %v2079
    %2133 = vmatprep.subr.bf16.mxu0 %v2084
    %2134 = vmatpush1.bf16.msra.mxu0 %v2083
    %2135 = vmatprep.subr.bf16.mxu0 0
    %2136 = vmatpush1.bf16.msra.mxu0 0
    %2137 = vmatprep.subr.bf16.mxu0 0
    %2138 = vmatpush1.bf16.msra.mxu0 0
    %2139 = vmatprep.subr.bf16.mxu0 0
    %2140 = vmatpush1.bf16.msra.mxu0 0
    %2141 = vmatprep.subr.bf16.mxu0 0
    %2142 = vmatpush1.bf16.msra.mxu0 0
    %2143 = vmatprep.subr.bf16.mxu0 0
    %2144 = vmatpush1.bf16.msra.mxu0 0
    %2145 = vmatprep.subr.bf16.mxu0 0
    %2146 = vmatpush1.bf16.msra.mxu0 0
    %2147 = vmatprep.subr.bf16.mxu0 0
    %2148 = vmatpush1.bf16.msra.mxu0 0
    %2149 = vmatprep.subr.bf16.mxu0 0
    %2150 = vmatpush1.bf16.msra.mxu0 0
    %2151 = vmatprep.mubr.bf16.mxu0 0
    %2152 = vmatmul.mubr.bf16.gmra.mrb[0].mxu0 %v1926
    %v2153 = vpop.f32.mrb[0].mxu0
    %v2154 = vadd.f32 0.0, %v2153
    %v2155 = vpop.f32.mrb[0].mxu0
    %v2156 = vadd.f32 0.0, %v2155
    %v2157 = vpop.f32.mrb[0].mxu0
    %v2158 = vpop.f32.mrb[0].mxu0
    %2159 = vdwg.mxu0
    %2160 = vmatprep.subr.bf16.mxu0 %v2058
    %2161 = vmatpush1.bf16.msra.mxu0 %v2057
    %2162 = vmatprep.subr.bf16.mxu0 %v2062
    %2163 = vmatpush1.bf16.msra.mxu0 %v2061
    %2164 = vmatprep.subr.bf16.mxu0 %v2066
    %2165 = vmatpush1.bf16.msra.mxu0 %v2065
    %2166 = vmatprep.subr.bf16.mxu0 %v2070
    %2167 = vmatpush1.bf16.msra.mxu0 %v2069
    %2168 = vmatprep.subr.bf16.mxu0 %v2074
    %2169 = vmatpush1.bf16.msra.mxu0 %v2073
    %2170 = vmatprep.subr.bf16.mxu0 %v2078
    %2171 = vmatpush1.bf16.msra.mxu0 %v2077
    %2172 = vmatprep.subr.bf16.mxu0 %v2082
    %2173 = vmatpush1.bf16.msra.mxu0 %v2081
    %2174 = vmatprep.subr.bf16.mxu0 %v2086
    %2175 = vmatpush1.bf16.msra.mxu0 %v2085
    %2176 = vmatprep.subr.bf16.mxu0 0
    %2177 = vmatpush1.bf16.msra.mxu0 0
    %2178 = vmatprep.subr.bf16.mxu0 0
    %2179 = vmatpush1.bf16.msra.mxu0 0
    %2180 = vmatprep.subr.bf16.mxu0 0
    %2181 = vmatpush1.bf16.msra.mxu0 0
    %2182 = vmatprep.subr.bf16.mxu0 0
    %2183 = vmatpush1.bf16.msra.mxu0 0
    %2184 = vmatprep.subr.bf16.mxu0 0
    %2185 = vmatpush1.bf16.msra.mxu0 0
    %2186 = vmatprep.subr.bf16.mxu0 0
    %2187 = vmatpush1.bf16.msra.mxu0 0
    %2188 = vmatprep.subr.bf16.mxu0 0
    %2189 = vmatpush1.bf16.msra.mxu0 0
    %2190 = vmatprep.subr.bf16.mxu0 0
    %2191 = vmatpush1.bf16.msra.mxu0 0
    %2192 = vmatprep.mubr.bf16.mxu0 0
    %2193 = vmatmul.mubr.bf16.gmra.mrb[0].mxu0 %v1926
    %v2194 = vpop.f32.mrb[0].mxu0
    %v2195 = vadd.f32 0.0, %v2194
    %v2196 = vpop.f32.mrb[0].mxu0
    %v2197 = vadd.f32 0.0, %v2196
    %v2198 = vpop.f32.mrb[0].mxu0
    %v2199 = vpop.f32.mrb[0].mxu0
    %2200 = vdwg.mxu0
    %v2205 = vcombine.low %v2154, %v2156
    %v2206 = vcombine.low %v2195, %v2197
    %v2208 = vunpack.c.l.s4 1966171168
    %v2209 = vunpack.c.0.s8 %v2208
    %v2210 = vlaneseq
    %v2211 = vshrl.u32 %v2210, 7
    %v2212 = vsub.s32 %v2209, %v2211
    %v2213 = vrot.slane %v2205, %v2212
    %v2215 = vunpack.c.l.s4 1966171168
    %v2216 = vunpack.c.0.s8 %v2215
    %v2217 = vlaneseq
    %v2218 = vshrl.u32 %v2217, 7
    %v2219 = vsub.s32 %v2216, %v2218
    %v2220 = vrot.slane %v2206, %v2219
    %v2221 = vcombine.low %v2213, %v2220
    %v2223 = vunpack.c.l.s4 1966171168
    %v2224 = vunpack.c.0.s8 %v2223
    %v2225 = vlaneseq
    %v2226 = vshrl.u32 %v2225, 7
    %v2227 = vsub.s32 %v2224, %v2226
    %v2228 = vrot.slane %v2221, %v2227
    %v2230 = vadd.f32 %v1925, %v2228
    %v2231 = vxor.u32 %v2230, 2147483648
    %v2232 = vmul.f32 %v2231, 1.442695
    %v2233 = vpow.pop %v2232
    %v2234 = vadd.f32 %v2233, 1.0
    %v2235 = vrcp.pop %v2234
    %v2236 = vmul.f32 1.0, %v2235
    %v2238 = vrot.slane %v2230, 1
    %v2240 = vxor.u32 %v2238, 2147483648
    %v2241 = vmul.f32 %v2240, 1.442695
    %v2242 = vpow.pop %v2241
    %v2243 = vadd.f32 %v2242, 1.0
    %v2244 = vrcp.pop %v2243
    %v2245 = vmul.f32 1.0, %v2244
    %v2246 = vrot.slane %v2230, 2
    %v2248 = vtanh.pop %v2246
    %v2249 = vrot.slane %v2230, 3
    %v2251 = vxor.u32 %v2249, 2147483648
    %v2252 = vmul.f32 %v2251, 1.442695
    %v2253 = vpow.pop %v2252
    %v2254 = vadd.f32 %v2253, 1.0
    %v2255 = vrcp.pop %v2254
    %v2256 = vmul.f32 1.0, %v2255
    %v2257 = vmul.f32 %v2245, %v1920
    %v2258 = vmul.f32 %v2236, %v2248
    %v2259 = vadd.f32 %v2257, %v2258
    %v2260 = vtanh.pop %v2259
    %v2261 = vmul.f32 %v2256, %v2260
    %2262 = vst [vmem:[#allocation3 + $0x5] sm:$0x1] %v2261
    %s2263 = scalar_lea.vmem [#allocation2], 6
    %v2264 = vld [vmem:[%s2263] ss:$8 sm:$0xf]
    %v2265 = vpack.c.bf16 %v2261, %v2261
    %v2266 = vld [vmem:[#allocation9] sm:$0xff]
    %v2267 = vld [vmem:[#allocation9 + $0x8] sm:$0xff]
    %v2268 = vld [vmem:[#allocation9 + $0x10] sm:$0xff]
    %v2269 = vld [vmem:[#allocation9 + $0x18] sm:$0xff]
    %v2270 = vld [vmem:[#allocation9 + $0x20] sm:$0xff]
    %v2271 = vld [vmem:[#allocation9 + $0x28] sm:$0xff]
    %v2272 = vld [vmem:[#allocation9 + $0x30] sm:$0xff]
    %v2273 = vld [vmem:[#allocation9 + $0x38] sm:$0xff]
    %v2274 = vld [vmem:[#allocation9 + $0x40] sm:$0xff]
    %v2275 = vld [vmem:[#allocation9 + $0x48] sm:$0xff]
    %v2276 = vld [vmem:[#allocation9 + $0x50] sm:$0xff]
    %v2277 = vld [vmem:[#allocation9 + $0x58] sm:$0xff]
    %v2278 = vld [vmem:[#allocation9 + $0x60] sm:$0xff]
    %v2279 = vld [vmem:[#allocation9 + $0x68] sm:$0xff]
    %v2280 = vld [vmem:[#allocation9 + $0x70] sm:$0xff]
    %v2281 = vld [vmem:[#allocation9 + $0x78] sm:$0xff]
    %v2282 = vld [vmem:[#allocation9 + $0x80] sm:$0xff]
    %v2283 = vld [vmem:[#allocation9 + $0x88] sm:$0xff]
    %v2284 = vld [vmem:[#allocation9 + $0x90] sm:$0xff]
    %v2285 = vld [vmem:[#allocation9 + $0x98] sm:$0xff]
    %v2286 = vld [vmem:[#allocation9 + $0xa0] sm:$0xff]
    %v2287 = vld [vmem:[#allocation9 + $0xa8] sm:$0xff]
    %v2288 = vld [vmem:[#allocation9 + $0xb0] sm:$0xff]
    %v2289 = vld [vmem:[#allocation9 + $0xb8] sm:$0xff]
    %v2290 = vld [vmem:[#allocation9 + $0xc0] sm:$0xff]
    %v2291 = vld [vmem:[#allocation9 + $0xc8] sm:$0xff]
    %v2292 = vld [vmem:[#allocation9 + $0xd0] sm:$0xff]
    %v2293 = vld [vmem:[#allocation9 + $0xd8] sm:$0xff]
    %v2294 = vld [vmem:[#allocation9 + $0xe0] sm:$0xff]
    %v2295 = vld [vmem:[#allocation9 + $0xe8] sm:$0xff]
    %v2296 = vld [vmem:[#allocation9 + $0xf0] sm:$0xff]
    %v2297 = vld [vmem:[#allocation9 + $0xf8] sm:$0xff]
    %v2330 = vunpack.c.l.b16 %v2266
    %v2331 = vunpack.c.h.b16 %v2266
    %v2332 = vunpack.c.l.b16 %v2267
    %v2333 = vunpack.c.h.b16 %v2267
    %v2334 = vunpack.c.l.b16 %v2268
    %v2335 = vunpack.c.h.b16 %v2268
    %v2336 = vunpack.c.l.b16 %v2269
    %v2337 = vunpack.c.h.b16 %v2269
    %v2338 = vunpack.c.l.b16 %v2270
    %v2339 = vunpack.c.h.b16 %v2270
    %v2340 = vunpack.c.l.b16 %v2271
    %v2341 = vunpack.c.h.b16 %v2271
    %v2342 = vunpack.c.l.b16 %v2272
    %v2343 = vunpack.c.h.b16 %v2272
    %v2344 = vunpack.c.l.b16 %v2273
    %v2345 = vunpack.c.h.b16 %v2273
    %v2346 = vunpack.c.l.b16 %v2274
    %v2347 = vunpack.c.h.b16 %v2274
    %v2348 = vunpack.c.l.b16 %v2275
    %v2349 = vunpack.c.h.b16 %v2275
    %v2350 = vunpack.c.l.b16 %v2276
    %v2351 = vunpack.c.h.b16 %v2276
    %v2352 = vunpack.c.l.b16 %v2277
    %v2353 = vunpack.c.h.b16 %v2277
    %v2354 = vunpack.c.l.b16 %v2278
    %v2355 = vunpack.c.h.b16 %v2278
    %v2356 = vunpack.c.l.b16 %v2279
    %v2357 = vunpack.c.h.b16 %v2279
    %v2358 = vunpack.c.l.b16 %v2280
    %v2359 = vunpack.c.h.b16 %v2280
    %v2360 = vunpack.c.l.b16 %v2281
    %v2361 = vunpack.c.h.b16 %v2281
    %v2362 = vunpack.c.l.b16 %v2282
    %v2363 = vunpack.c.h.b16 %v2282
    %v2364 = vunpack.c.l.b16 %v2283
    %v2365 = vunpack.c.h.b16 %v2283
    %v2366 = vunpack.c.l.b16 %v2284
    %v2367 = vunpack.c.h.b16 %v2284
    %v2368 = vunpack.c.l.b16 %v2285
    %v2369 = vunpack.c.h.b16 %v2285
    %v2370 = vunpack.c.l.b16 %v2286
    %v2371 = vunpack.c.h.b16 %v2286
    %v2372 = vunpack.c.l.b16 %v2287
    %v2373 = vunpack.c.h.b16 %v2287
    %v2374 = vunpack.c.l.b16 %v2288
    %v2375 = vunpack.c.h.b16 %v2288
    %v2376 = vunpack.c.l.b16 %v2289
    %v2377 = vunpack.c.h.b16 %v2289
    %v2378 = vunpack.c.l.b16 %v2290
    %v2379 = vunpack.c.h.b16 %v2290
    %v2380 = vunpack.c.l.b16 %v2291
    %v2381 = vunpack.c.h.b16 %v2291
    %v2382 = vunpack.c.l.b16 %v2292
    %v2383 = vunpack.c.h.b16 %v2292
    %v2384 = vunpack.c.l.b16 %v2293
    %v2385 = vunpack.c.h.b16 %v2293
    %v2386 = vunpack.c.l.b16 %v2294
    %v2387 = vunpack.c.h.b16 %v2294
    %v2388 = vunpack.c.l.b16 %v2295
    %v2389 = vunpack.c.h.b16 %v2295
    %v2390 = vunpack.c.l.b16 %v2296
    %v2391 = vunpack.c.h.b16 %v2296
    %v2392 = vunpack.c.l.b16 %v2297
    %v2393 = vunpack.c.h.b16 %v2297
    %v2394 = vpack.c.b16 %v2334, %v2330
    %v2395 = vpack.c.b16 %v2335, %v2331
    %v2396 = vpack.c.b16 %v2336, %v2332
    %v2397 = vpack.c.b16 %v2337, %v2333
    %v2398 = vpack.c.b16 %v2342, %v2338
    %v2399 = vpack.c.b16 %v2343, %v2339
    %v2400 = vpack.c.b16 %v2344, %v2340
    %v2401 = vpack.c.b16 %v2345, %v2341
    %v2402 = vpack.c.b16 %v2350, %v2346
    %v2403 = vpack.c.b16 %v2351, %v2347
    %v2404 = vpack.c.b16 %v2352, %v2348
    %v2405 = vpack.c.b16 %v2353, %v2349
    %v2406 = vpack.c.b16 %v2358, %v2354
    %v2407 = vpack.c.b16 %v2359, %v2355
    %v2408 = vpack.c.b16 %v2360, %v2356
    %v2409 = vpack.c.b16 %v2361, %v2357
    %v2410 = vpack.c.b16 %v2366, %v2362
    %v2411 = vpack.c.b16 %v2367, %v2363
    %v2412 = vpack.c.b16 %v2368, %v2364
    %v2413 = vpack.c.b16 %v2369, %v2365
    %v2414 = vpack.c.b16 %v2374, %v2370
    %v2415 = vpack.c.b16 %v2375, %v2371
    %v2416 = vpack.c.b16 %v2376, %v2372
    %v2417 = vpack.c.b16 %v2377, %v2373
    %v2418 = vpack.c.b16 %v2382, %v2378
    %v2419 = vpack.c.b16 %v2383, %v2379
    %v2420 = vpack.c.b16 %v2384, %v2380
    %v2421 = vpack.c.b16 %v2385, %v2381
    %v2422 = vpack.c.b16 %v2390, %v2386
    %v2423 = vpack.c.b16 %v2391, %v2387
    %v2424 = vpack.c.b16 %v2392, %v2388
    %v2425 = vpack.c.b16 %v2393, %v2389
    %2458 = vmatprep.subr.bf16.mxu0 %v2395
    %2459 = vmatpush1.bf16.msra.mxu0 %v2394
    %2460 = vmatprep.subr.bf16.mxu0 %v2399
    %2461 = vmatpush1.bf16.msra.mxu0 %v2398
    %2462 = vmatprep.subr.bf16.mxu0 %v2403
    %2463 = vmatpush1.bf16.msra.mxu0 %v2402
    %2464 = vmatprep.subr.bf16.mxu0 %v2407
    %2465 = vmatpush1.bf16.msra.mxu0 %v2406
    %2466 = vmatprep.subr.bf16.mxu0 %v2411
    %2467 = vmatpush1.bf16.msra.mxu0 %v2410
    %2468 = vmatprep.subr.bf16.mxu0 %v2415
    %2469 = vmatpush1.bf16.msra.mxu0 %v2414
    %2470 = vmatprep.subr.bf16.mxu0 %v2419
    %2471 = vmatpush1.bf16.msra.mxu0 %v2418
    %2472 = vmatprep.subr.bf16.mxu0 %v2423
    %2473 = vmatpush1.bf16.msra.mxu0 %v2422
    %2474 = vmatprep.subr.bf16.mxu0 0
    %2475 = vmatpush1.bf16.msra.mxu0 0
    %2476 = vmatprep.subr.bf16.mxu0 0
    %2477 = vmatpush1.bf16.msra.mxu0 0
    %2478 = vmatprep.subr.bf16.mxu0 0
    %2479 = vmatpush1.bf16.msra.mxu0 0
    %2480 = vmatprep.subr.bf16.mxu0 0
    %2481 = vmatpush1.bf16.msra.mxu0 0
    %2482 = vmatprep.subr.bf16.mxu0 0
    %2483 = vmatpush1.bf16.msra.mxu0 0
    %2484 = vmatprep.subr.bf16.mxu0 0
    %2485 = vmatpush1.bf16.msra.mxu0 0
    %2486 = vmatprep.subr.bf16.mxu0 0
    %2487 = vmatpush1.bf16.msra.mxu0 0
    %2488 = vmatprep.subr.bf16.mxu0 0
    %2489 = vmatpush1.bf16.msra.mxu0 0
    %2490 = vmatprep.mubr.bf16.mxu0 0
    %2491 = vmatmul.mubr.bf16.gmra.mrb[0].mxu0 %v2265
    %v2492 = vpop.f32.mrb[0].mxu0
    %v2493 = vadd.f32 0.0, %v2492
    %v2494 = vpop.f32.mrb[0].mxu0
    %v2495 = vadd.f32 0.0, %v2494
    %v2496 = vpop.f32.mrb[0].mxu0
    %v2497 = vpop.f32.mrb[0].mxu0
    %2498 = vdwg.mxu0
    %2499 = vmatprep.subr.bf16.mxu0 %v2397
    %2500 = vmatpush1.bf16.msra.mxu0 %v2396
    %2501 = vmatprep.subr.bf16.mxu0 %v2401
    %2502 = vmatpush1.bf16.msra.mxu0 %v2400
    %2503 = vmatprep.subr.bf16.mxu0 %v2405
    %2504 = vmatpush1.bf16.msra.mxu0 %v2404
    %2505 = vmatprep.subr.bf16.mxu0 %v2409
    %2506 = vmatpush1.bf16.msra.mxu0 %v2408
    %2507 = vmatprep.subr.bf16.mxu0 %v2413
    %2508 = vmatpush1.bf16.msra.mxu0 %v2412
    %2509 = vmatprep.subr.bf16.mxu0 %v2417
    %2510 = vmatpush1.bf16.msra.mxu0 %v2416
    %2511 = vmatprep.subr.bf16.mxu0 %v2421
    %2512 = vmatpush1.bf16.msra.mxu0 %v2420
    %2513 = vmatprep.subr.bf16.mxu0 %v2425
    %2514 = vmatpush1.bf16.msra.mxu0 %v2424
    %2515 = vmatprep.subr.bf16.mxu0 0
    %2516 = vmatpush1.bf16.msra.mxu0 0
    %2517 = vmatprep.subr.bf16.mxu0 0
    %2518 = vmatpush1.bf16.msra.mxu0 0
    %2519 = vmatprep.subr.bf16.mxu0 0
    %2520 = vmatpush1.bf16.msra.mxu0 0
    %2521 = vmatprep.subr.bf16.mxu0 0
    %2522 = vmatpush1.bf16.msra.mxu0 0
    %2523 = vmatprep.subr.bf16.mxu0 0
    %2524 = vmatpush1.bf16.msra.mxu0 0
    %2525 = vmatprep.subr.bf16.mxu0 0
    %2526 = vmatpush1.bf16.msra.mxu0 0
    %2527 = vmatprep.subr.bf16.mxu0 0
    %2528 = vmatpush1.bf16.msra.mxu0 0
    %2529 = vmatprep.subr.bf16.mxu0 0
    %2530 = vmatpush1.bf16.msra.mxu0 0
    %2531 = vmatprep.mubr.bf16.mxu0 0
    %2532 = vmatmul.mubr.bf16.gmra.mrb[0].mxu0 %v2265
    %v2533 = vpop.f32.mrb[0].mxu0
    %v2534 = vadd.f32 0.0, %v2533
    %v2535 = vpop.f32.mrb[0].mxu0
    %v2536 = vadd.f32 0.0, %v2535
    %v2537 = vpop.f32.mrb[0].mxu0
    %v2538 = vpop.f32.mrb[0].mxu0
    %2539 = vdwg.mxu0
    %v2544 = vcombine.low %v2493, %v2495
    %v2545 = vcombine.low %v2534, %v2536
    %v2547 = vunpack.c.l.s4 1966171168
    %v2548 = vunpack.c.0.s8 %v2547
    %v2549 = vlaneseq
    %v2550 = vshrl.u32 %v2549, 7
    %v2551 = vsub.s32 %v2548, %v2550
    %v2552 = vrot.slane %v2544, %v2551
    %v2554 = vunpack.c.l.s4 1966171168
    %v2555 = vunpack.c.0.s8 %v2554
    %v2556 = vlaneseq
    %v2557 = vshrl.u32 %v2556, 7
    %v2558 = vsub.s32 %v2555, %v2557
    %v2559 = vrot.slane %v2545, %v2558
    %v2560 = vcombine.low %v2552, %v2559
    %v2562 = vunpack.c.l.s4 1966171168
    %v2563 = vunpack.c.0.s8 %v2562
    %v2564 = vlaneseq
    %v2565 = vshrl.u32 %v2564, 7
    %v2566 = vsub.s32 %v2563, %v2565
    %v2567 = vrot.slane %v2560, %v2566
    %v2569 = vadd.f32 %v2264, %v2567
    %v2570 = vxor.u32 %v2569, 2147483648
    %v2571 = vmul.f32 %v2570, 1.442695
    %v2572 = vpow.pop %v2571
    %v2573 = vadd.f32 %v2572, 1.0
    %v2574 = vrcp.pop %v2573
    %v2575 = vmul.f32 1.0, %v2574
    %v2577 = vrot.slane %v2569, 1
    %v2579 = vxor.u32 %v2577, 2147483648
    %v2580 = vmul.f32 %v2579, 1.442695
    %v2581 = vpow.pop %v2580
    %v2582 = vadd.f32 %v2581, 1.0
    %v2583 = vrcp.pop %v2582
    %v2584 = vmul.f32 1.0, %v2583
    %v2585 = vrot.slane %v2569, 2
    %v2587 = vtanh.pop %v2585
    %v2588 = vrot.slane %v2569, 3
    %v2590 = vxor.u32 %v2588, 2147483648
    %v2591 = vmul.f32 %v2590, 1.442695
    %v2592 = vpow.pop %v2591
    %v2593 = vadd.f32 %v2592, 1.0
    %v2594 = vrcp.pop %v2593
    %v2595 = vmul.f32 1.0, %v2594
    %v2596 = vmul.f32 %v2584, %v2259
    %v2597 = vmul.f32 %v2575, %v2587
    %v2598 = vadd.f32 %v2596, %v2597
    %v2599 = vtanh.pop %v2598
    %v2600 = vmul.f32 %v2595, %v2599
    %2601 = vst [vmem:[#allocation3 + $0x6] sm:$0x1] %v2600
    %s2602 = scalar_lea.vmem [#allocation2], 7
    %v2603 = vld [vmem:[%s2602] ss:$8 sm:$0xf]
    %v2604 = vpack.c.bf16 %v2600, %v2600
    %v2605 = vld [vmem:[#allocation9] sm:$0xff]
    %v2606 = vld [vmem:[#allocation9 + $0x8] sm:$0xff]
    %v2607 = vld [vmem:[#allocation9 + $0x10] sm:$0xff]
    %v2608 = vld [vmem:[#allocation9 + $0x18] sm:$0xff]
    %v2609 = vld [vmem:[#allocation9 + $0x20] sm:$0xff]
    %v2610 = vld [vmem:[#allocation9 + $0x28] sm:$0xff]
    %v2611 = vld [vmem:[#allocation9 + $0x30] sm:$0xff]
    %v2612 = vld [vmem:[#allocation9 + $0x38] sm:$0xff]
    %v2613 = vld [vmem:[#allocation9 + $0x40] sm:$0xff]
    %v2614 = vld [vmem:[#allocation9 + $0x48] sm:$0xff]
    %v2615 = vld [vmem:[#allocation9 + $0x50] sm:$0xff]
    %v2616 = vld [vmem:[#allocation9 + $0x58] sm:$0xff]
    %v2617 = vld [vmem:[#allocation9 + $0x60] sm:$0xff]
    %v2618 = vld [vmem:[#allocation9 + $0x68] sm:$0xff]
    %v2619 = vld [vmem:[#allocation9 + $0x70] sm:$0xff]
    %v2620 = vld [vmem:[#allocation9 + $0x78] sm:$0xff]
    %v2621 = vld [vmem:[#allocation9 + $0x80] sm:$0xff]
    %v2622 = vld [vmem:[#allocation9 + $0x88] sm:$0xff]
    %v2623 = vld [vmem:[#allocation9 + $0x90] sm:$0xff]
    %v2624 = vld [vmem:[#allocation9 + $0x98] sm:$0xff]
    %v2625 = vld [vmem:[#allocation9 + $0xa0] sm:$0xff]
    %v2626 = vld [vmem:[#allocation9 + $0xa8] sm:$0xff]
    %v2627 = vld [vmem:[#allocation9 + $0xb0] sm:$0xff]
    %v2628 = vld [vmem:[#allocation9 + $0xb8] sm:$0xff]
    %v2629 = vld [vmem:[#allocation9 + $0xc0] sm:$0xff]
    %v2630 = vld [vmem:[#allocation9 + $0xc8] sm:$0xff]
    %v2631 = vld [vmem:[#allocation9 + $0xd0] sm:$0xff]
    %v2632 = vld [vmem:[#allocation9 + $0xd8] sm:$0xff]
    %v2633 = vld [vmem:[#allocation9 + $0xe0] sm:$0xff]
    %v2634 = vld [vmem:[#allocation9 + $0xe8] sm:$0xff]
    %v2635 = vld [vmem:[#allocation9 + $0xf0] sm:$0xff]
    %v2636 = vld [vmem:[#allocation9 + $0xf8] sm:$0xff]
    %v2669 = vunpack.c.l.b16 %v2605
    %v2670 = vunpack.c.h.b16 %v2605
    %v2671 = vunpack.c.l.b16 %v2606
    %v2672 = vunpack.c.h.b16 %v2606
    %v2673 = vunpack.c.l.b16 %v2607
    %v2674 = vunpack.c.h.b16 %v2607
    %v2675 = vunpack.c.l.b16 %v2608
    %v2676 = vunpack.c.h.b16 %v2608
    %v2677 = vunpack.c.l.b16 %v2609
    %v2678 = vunpack.c.h.b16 %v2609
    %v2679 = vunpack.c.l.b16 %v2610
    %v2680 = vunpack.c.h.b16 %v2610
    %v2681 = vunpack.c.l.b16 %v2611
    %v2682 = vunpack.c.h.b16 %v2611
    %v2683 = vunpack.c.l.b16 %v2612
    %v2684 = vunpack.c.h.b16 %v2612
    %v2685 = vunpack.c.l.b16 %v2613
    %v2686 = vunpack.c.h.b16 %v2613
    %v2687 = vunpack.c.l.b16 %v2614
    %v2688 = vunpack.c.h.b16 %v2614
    %v2689 = vunpack.c.l.b16 %v2615
    %v2690 = vunpack.c.h.b16 %v2615
    %v2691 = vunpack.c.l.b16 %v2616
    %v2692 = vunpack.c.h.b16 %v2616
    %v2693 = vunpack.c.l.b16 %v2617
    %v2694 = vunpack.c.h.b16 %v2617
    %v2695 = vunpack.c.l.b16 %v2618
    %v2696 = vunpack.c.h.b16 %v2618
    %v2697 = vunpack.c.l.b16 %v2619
    %v2698 = vunpack.c.h.b16 %v2619
    %v2699 = vunpack.c.l.b16 %v2620
    %v2700 = vunpack.c.h.b16 %v2620
    %v2701 = vunpack.c.l.b16 %v2621
    %v2702 = vunpack.c.h.b16 %v2621
    %v2703 = vunpack.c.l.b16 %v2622
    %v2704 = vunpack.c.h.b16 %v2622
    %v2705 = vunpack.c.l.b16 %v2623
    %v2706 = vunpack.c.h.b16 %v2623
    %v2707 = vunpack.c.l.b16 %v2624
    %v2708 = vunpack.c.h.b16 %v2624
    %v2709 = vunpack.c.l.b16 %v2625
    %v2710 = vunpack.c.h.b16 %v2625
    %v2711 = vunpack.c.l.b16 %v2626
    %v2712 = vunpack.c.h.b16 %v2626
    %v2713 = vunpack.c.l.b16 %v2627
    %v2714 = vunpack.c.h.b16 %v2627
    %v2715 = vunpack.c.l.b16 %v2628
    %v2716 = vunpack.c.h.b16 %v2628
    %v2717 = vunpack.c.l.b16 %v2629
    %v2718 = vunpack.c.h.b16 %v2629
    %v2719 = vunpack.c.l.b16 %v2630
    %v2720 = vunpack.c.h.b16 %v2630
    %v2721 = vunpack.c.l.b16 %v2631
    %v2722 = vunpack.c.h.b16 %v2631
    %v2723 = vunpack.c.l.b16 %v2632
    %v2724 = vunpack.c.h.b16 %v2632
    %v2725 = vunpack.c.l.b16 %v2633
    %v2726 = vunpack.c.h.b16 %v2633
    %v2727 = vunpack.c.l.b16 %v2634
    %v2728 = vunpack.c.h.b16 %v2634
    %v2729 = vunpack.c.l.b16 %v2635
    %v2730 = vunpack.c.h.b16 %v2635
    %v2731 = vunpack.c.l.b16 %v2636
    %v2732 = vunpack.c.h.b16 %v2636
    %v2733 = vpack.c.b16 %v2673, %v2669
    %v2734 = vpack.c.b16 %v2674, %v2670
    %v2735 = vpack.c.b16 %v2675, %v2671
    %v2736 = vpack.c.b16 %v2676, %v2672
    %v2737 = vpack.c.b16 %v2681, %v2677
    %v2738 = vpack.c.b16 %v2682, %v2678
    %v2739 = vpack.c.b16 %v2683, %v2679
    %v2740 = vpack.c.b16 %v2684, %v2680
    %v2741 = vpack.c.b16 %v2689, %v2685
    %v2742 = vpack.c.b16 %v2690, %v2686
    %v2743 = vpack.c.b16 %v2691, %v2687
    %v2744 = vpack.c.b16 %v2692, %v2688
    %v2745 = vpack.c.b16 %v2697, %v2693
    %v2746 = vpack.c.b16 %v2698, %v2694
    %v2747 = vpack.c.b16 %v2699, %v2695
    %v2748 = vpack.c.b16 %v2700, %v2696
    %v2749 = vpack.c.b16 %v2705, %v2701
    %v2750 = vpack.c.b16 %v2706, %v2702
    %v2751 = vpack.c.b16 %v2707, %v2703
    %v2752 = vpack.c.b16 %v2708, %v2704
    %v2753 = vpack.c.b16 %v2713, %v2709
    %v2754 = vpack.c.b16 %v2714, %v2710
    %v2755 = vpack.c.b16 %v2715, %v2711
    %v2756 = vpack.c.b16 %v2716, %v2712
    %v2757 = vpack.c.b16 %v2721, %v2717
    %v2758 = vpack.c.b16 %v2722, %v2718
    %v2759 = vpack.c.b16 %v2723, %v2719
    %v2760 = vpack.c.b16 %v2724, %v2720
    %v2761 = vpack.c.b16 %v2729, %v2725
    %v2762 = vpack.c.b16 %v2730, %v2726
    %v2763 = vpack.c.b16 %v2731, %v2727
    %v2764 = vpack.c.b16 %v2732, %v2728
    %2797 = vmatprep.subr.bf16.mxu0 %v2734
    %2798 = vmatpush1.bf16.msra.mxu0 %v2733
    %2799 = vmatprep.subr.bf16.mxu0 %v2738
    %2800 = vmatpush1.bf16.msra.mxu0 %v2737
    %2801 = vmatprep.subr.bf16.mxu0 %v2742
    %2802 = vmatpush1.bf16.msra.mxu0 %v2741
    %2803 = vmatprep.subr.bf16.mxu0 %v2746
    %2804 = vmatpush1.bf16.msra.mxu0 %v2745
    %2805 = vmatprep.subr.bf16.mxu0 %v2750
    %2806 = vmatpush1.bf16.msra.mxu0 %v2749
    %2807 = vmatprep.subr.bf16.mxu0 %v2754
    %2808 = vmatpush1.bf16.msra.mxu0 %v2753
    %2809 = vmatprep.subr.bf16.mxu0 %v2758
    %2810 = vmatpush1.bf16.msra.mxu0 %v2757
    %2811 = vmatprep.subr.bf16.mxu0 %v2762
    %2812 = vmatpush1.bf16.msra.mxu0 %v2761
    %2813 = vmatprep.subr.bf16.mxu0 0
    %2814 = vmatpush1.bf16.msra.mxu0 0
    %2815 = vmatprep.subr.bf16.mxu0 0
    %2816 = vmatpush1.bf16.msra.mxu0 0
    %2817 = vmatprep.subr.bf16.mxu0 0
    %2818 = vmatpush1.bf16.msra.mxu0 0
    %2819 = vmatprep.subr.bf16.mxu0 0
    %2820 = vmatpush1.bf16.msra.mxu0 0
    %2821 = vmatprep.subr.bf16.mxu0 0
    %2822 = vmatpush1.bf16.msra.mxu0 0
    %2823 = vmatprep.subr.bf16.mxu0 0
    %2824 = vmatpush1.bf16.msra.mxu0 0
    %2825 = vmatprep.subr.bf16.mxu0 0
    %2826 = vmatpush1.bf16.msra.mxu0 0
    %2827 = vmatprep.subr.bf16.mxu0 0
    %2828 = vmatpush1.bf16.msra.mxu0 0
    %2829 = vmatprep.mubr.bf16.mxu0 0
    %2830 = vmatmul.mubr.bf16.gmra.mrb[0].mxu0 %v2604
    %v2831 = vpop.f32.mrb[0].mxu0
    %v2832 = vadd.f32 0.0, %v2831
    %v2833 = vpop.f32.mrb[0].mxu0
    %v2834 = vadd.f32 0.0, %v2833
    %v2835 = vpop.f32.mrb[0].mxu0
    %v2836 = vpop.f32.mrb[0].mxu0
    %2837 = vdwg.mxu0
    %2838 = vmatprep.subr.bf16.mxu0 %v2736
    %2839 = vmatpush1.bf16.msra.mxu0 %v2735
    %2840 = vmatprep.subr.bf16.mxu0 %v2740
    %2841 = vmatpush1.bf16.msra.mxu0 %v2739
    %2842 = vmatprep.subr.bf16.mxu0 %v2744
    %2843 = vmatpush1.bf16.msra.mxu0 %v2743
    %2844 = vmatprep.subr.bf16.mxu0 %v2748
    %2845 = vmatpush1.bf16.msra.mxu0 %v2747
    %2846 = vmatprep.subr.bf16.mxu0 %v2752
    %2847 = vmatpush1.bf16.msra.mxu0 %v2751
    %2848 = vmatprep.subr.bf16.mxu0 %v2756
    %2849 = vmatpush1.bf16.msra.mxu0 %v2755
    %2850 = vmatprep.subr.bf16.mxu0 %v2760
    %2851 = vmatpush1.bf16.msra.mxu0 %v2759
    %2852 = vmatprep.subr.bf16.mxu0 %v2764
    %2853 = vmatpush1.bf16.msra.mxu0 %v2763
    %2854 = vmatprep.subr.bf16.mxu0 0
    %2855 = vmatpush1.bf16.msra.mxu0 0
    %2856 = vmatprep.subr.bf16.mxu0 0
    %2857 = vmatpush1.bf16.msra.mxu0 0
    %2858 = vmatprep.subr.bf16.mxu0 0
    %2859 = vmatpush1.bf16.msra.mxu0 0
    %2860 = vmatprep.subr.bf16.mxu0 0
    %2861 = vmatpush1.bf16.msra.mxu0 0
    %2862 = vmatprep.subr.bf16.mxu0 0
    %2863 = vmatpush1.bf16.msra.mxu0 0
    %2864 = vmatprep.subr.bf16.mxu0 0
    %2865 = vmatpush1.bf16.msra.mxu0 0
    %2866 = vmatprep.subr.bf16.mxu0 0
    %2867 = vmatpush1.bf16.msra.mxu0 0
    %2868 = vmatprep.subr.bf16.mxu0 0
    %2869 = vmatpush1.bf16.msra.mxu0 0
    %2870 = vmatprep.mubr.bf16.mxu0 0
    %2871 = vmatmul.mubr.bf16.gmra.mrb[0].mxu0 %v2604
    %v2872 = vpop.f32.mrb[0].mxu0
    %v2873 = vadd.f32 0.0, %v2872
    %v2874 = vpop.f32.mrb[0].mxu0
    %v2875 = vadd.f32 0.0, %v2874
    %v2876 = vpop.f32.mrb[0].mxu0
    %v2877 = vpop.f32.mrb[0].mxu0
    %2878 = vdwg.mxu0
    %v2883 = vcombine.low %v2832, %v2834
    %v2884 = vcombine.low %v2873, %v2875
    %v2886 = vunpack.c.l.s4 1966171168
    %v2887 = vunpack.c.0.s8 %v2886
    %v2888 = vlaneseq
    %v2889 = vshrl.u32 %v2888, 7
    %v2890 = vsub.s32 %v2887, %v2889
    %v2891 = vrot.slane %v2883, %v2890
    %v2893 = vunpack.c.l.s4 1966171168
    %v2894 = vunpack.c.0.s8 %v2893
    %v2895 = vlaneseq
    %v2896 = vshrl.u32 %v2895, 7
    %v2897 = vsub.s32 %v2894, %v2896
    %v2898 = vrot.slane %v2884, %v2897
    %v2899 = vcombine.low %v2891, %v2898
    %v2901 = vunpack.c.l.s4 1966171168
    %v2902 = vunpack.c.0.s8 %v2901
    %v2903 = vlaneseq
    %v2904 = vshrl.u32 %v2903, 7
    %v2905 = vsub.s32 %v2902, %v2904
    %v2906 = vrot.slane %v2899, %v2905
    %v2908 = vadd.f32 %v2603, %v2906
    %v2909 = vxor.u32 %v2908, 2147483648
    %v2910 = vmul.f32 %v2909, 1.442695
    %v2911 = vpow.pop %v2910
    %v2912 = vadd.f32 %v2911, 1.0
    %v2913 = vrcp.pop %v2912
    %v2914 = vmul.f32 1.0, %v2913
    %v2916 = vrot.slane %v2908, 1
    %v2918 = vxor.u32 %v2916, 2147483648
    %v2919 = vmul.f32 %v2918, 1.442695
    %v2920 = vpow.pop %v2919
    %v2921 = vadd.f32 %v2920, 1.0
    %v2922 = vrcp.pop %v2921
    %v2923 = vmul.f32 1.0, %v2922
    %v2924 = vrot.slane %v2908, 2
    %v2926 = vtanh.pop %v2924
    %v2927 = vrot.slane %v2908, 3
    %v2929 = vxor.u32 %v2927, 2147483648
    %v2930 = vmul.f32 %v2929, 1.442695
    %v2931 = vpow.pop %v2930
    %v2932 = vadd.f32 %v2931, 1.0
    %v2933 = vrcp.pop %v2932
    %v2934 = vmul.f32 1.0, %v2933
    %v2935 = vmul.f32 %v2923, %v2598
    %v2936 = vmul.f32 %v2914, %v2926
    %v2937 = vadd.f32 %v2935, %v2936
    %v2938 = vtanh.pop %v2937
    %v2939 = vmul.f32 %v2934, %v2938
    %2940 = vst [vmem:[#allocation3 + $0x7] sm:$0x1] %v2939
    %v2941 = vld [vmem:[#allocation3] sm:$0xff]
    %2942 = vst [vmem:[#allocation12] sm:$0xff] %v2941
    // Predicated region
    $region34: #{lstm_reddit_forward.2} parent=1 // pred_check
      _
    $region35: #{lstm_reddit_forward.2} parent=1 // pred_check_branch
      %2944 = sbr.rel (0) target = $region37
    $region36: #{lstm_reddit_forward.2} parent=1 // pred_region
      %s2946 = ssub.s32 128, 128
      %2947 = vsyncadd [#allocation6], %s2946
      %s2949 = sshll.u32 [#allocation12], 4
      %s2950 = int_to_ptr.vmem [resolvable:$true] %s2949
      %2952 = dma.vmem_to_hbm [thread:$0]  %s2950, 128, %s4, [#allocation6]
    $region37: #{lstm_reddit_forward.2} parent=1 // pred_fallthru
      _
    // Predicated region
    $region38: #{lstm_reddit_forward.2} parent=1 // pred_check
      _
    $region39: #{lstm_reddit_forward.2} parent=1 // pred_check_branch
      %2954 = sbr.rel (0) target = $region41
    $region40: #{lstm_reddit_forward.2} parent=1 // pred_region
      %2955 = dma.done [#allocation6], 128
    $region41: #{lstm_reddit_forward.2} parent=1 // pred_fallthru
      _
    %2956 = vsyncpa [#allocation5], 1
    %2957 = vsyncpa [#allocation8], 1
    %2958 = vsyncpa [#allocation11], 1
    %2959 = vsyncpa [#allocation6], 1

</llo_original>
